<compile_context>
chip_gen: v7x
topology: tpu7x:2x2x1
jax: 0.10.0
libtpu: 0.0.40
codegen_flags: <defaults>
</compile_context>

<pallas_src>
import functools

import numpy as np
import jax
import jax.numpy as jnp
from jax import lax
from jax.experimental import pallas as pl
from jax.experimental.pallas import tpu as pltpu


# ----------------------------------------------------------------------------
# Host-side constants / parameter preprocessing
# ----------------------------------------------------------------------------
def _up_pad_matrix(out_size, in_size, pad_before):
    """(out_size, in_size) matrix = 2x bilinear upsample (align_corners=True)
    composed with the zero-padding/cropping done by F.pad along ONE axis."""
    up = 2 * in_size
    if in_size == 1:
        m_up = np.ones((up, 1), np.float64)
    else:
        pos = np.arange(up, dtype=np.float64) * (in_size - 1) / (up - 1)
        lo = np.clip(np.floor(pos).astype(np.int64), 0, in_size - 2)
        t = pos - lo
        m_up = np.zeros((up, in_size), np.float64)
        m_up[np.arange(up), lo] += 1.0 - t
        m_up[np.arange(up), lo + 1] += t
    m = np.zeros((out_size, in_size), np.float64)
    for i in range(out_size):
        j = i - pad_before
        if 0 <= j < up:
            m[i] = m_up[j]
    return m.astype(np.float32)


def _fold_bn(w, b, gamma, beta, mean, var, eps=1e-5):
    """Fold eval-mode BatchNorm into conv weight (HWIO) and bias."""
    scale = gamma / jnp.sqrt(var + eps)                       # (Cout,)
    return w * scale, (b - mean) * scale + beta


# ----------------------------------------------------------------------------
# In-kernel 3x3 "same" conv in channel-major layout: 9 accumulating matmuls
# ----------------------------------------------------------------------------
def _conv3x3_taps(srcs, bias, xmask, H, W):
    """3x3 conv (pad=1) over a channel-major (C, H*W) slab.

    srcs  : list of (x, w_ref) pairs, x (C_s, H*W), w_ref (9, Co, C_s).  The
            conv input is the (implicit, never materialized) channel concat of
            all x's.
    bias  : (Co, 1) float32 (BN already folded in).
    xmask : {-1: mask, +1: mask} of shape (1, H*W) f32, column validity for the
            x-offset taps (row-offset OOB is handled by the zero-filled shift).
    Returns ReLU(conv + bias) as (Co, H*W) float32.
    """
    HW = H * W
    co = srcs[0][1].shape[1]
    acc = jnp.zeros((co, HW), jnp.float32) + bias             # (Co, HW) f32
    t = 0
    for oy in (-1, 0, 1):
        for ox in (-1, 0, 1):
            off = oy * W + ox
            contrib = None
            for x, w_ref in srcs:
                c = x.shape[0]
                if off == 0:
                    s = x
                elif off > 0:
                    s = jnp.concatenate(
                        [x[:, off:], jnp.zeros((c, off), x.dtype)], axis=1)
                else:
                    s = jnp.concatenate(
                        [jnp.zeros((c, -off), x.dtype), x[:, :HW + off]], axis=1)
                d = jnp.dot(w_ref[t], s, preferred_element_type=jnp.float32)
                contrib = d if contrib is None else contrib + d
            if ox != 0:
                contrib = contrib * xmask[ox]
            acc = acc + contrib
            t += 1
    return jnp.maximum(acc, 0.0)


# ----------------------------------------------------------------------------
# Fused kernel: (concat) + (conv3x3 + BN + ReLU) x 2, one image per grid step
# ----------------------------------------------------------------------------
def _up_doubleconv_kernel(x2_ref, up_ref, w1a_ref, w1b_ref, b1_ref,
                          w2_ref, b2_ref, o_ref, *, H, W):
    HW = H * W
    xx = lax.broadcasted_iota(jnp.int32, (1, HW), 1) % W      # column -> x coord
    xmask = {-1: (xx >= 1).astype(jnp.float32),
             +1: (xx <= W - 2).astype(jnp.float32)}

    # conv1 (+ folded BN1, ReLU).  Input is the channel concat [x2, up(x1)],
    # fused into the tap matmuls instead of being materialized.
    a1 = _conv3x3_taps([(x2_ref[...], w1a_ref), (up_ref[...], w1b_ref)],
                       b1_ref[...], xmask, H, W)               # (Cmid, HW) f32

    # conv2 (+ folded BN2, ReLU), same channel-major lane-dense orientation.
    y = _conv3x3_taps([(a1.astype(w2_ref.dtype), w2_ref)],
                      b2_ref[...], xmask, H, W)                # (Cout, HW) f32

    # Lane-dense NCHW-ordered store: o block is (1, Cout, H*W).
    o_ref[0] = y


def up_forward(x1, x2, params, *, mxu_dtype=jnp.bfloat16):
    """Pallas implementation of Up.forward (x1 upsampled, x2 skip), NCHW in/out."""
    (w1, b1, bn1), (w2, b2, bn2) = params
    N, C1, h1, w1s = x1.shape
    _, C2, H, W = x2.shape
    Cin = C1 + C2
    Cmid = w1.shape[-1]                       # out_ch of conv1 == in_ch of conv2
    Cout = w2.shape[-1]
    HW = H * W

    # --- separable upsample(+F.pad) matrices, one per spatial axis -----------
    diffY, diffX = H - 2 * h1, W - 2 * w1s
    mh = jnp.asarray(_up_pad_matrix(H, h1, diffY // 2))        # (H, h1)
    mw = jnp.asarray(_up_pad_matrix(W, w1s, diffX // 2))       # (W, w1s)

    # Upsample + pad applied separably in the wrapper (tiny batched einsum /
    # layout plumbing) producing the channel-major lane-dense slab (C1, N*H*W).
    up_cm = jnp.einsum('Yi,Xj,ncij->cnYX', mh, mw, x1,
                       precision=lax.Precision.HIGHEST).reshape(C1, N * HW)
    x2_cm = jnp.transpose(x2, (1, 0, 2, 3)).reshape(C2, N * HW)

    # --- fold eval-mode BN; lay conv weights out as 9 channel-major taps -----
    w1f, b1f = _fold_bn(w1, b1, *bn1)
    w2f, b2f = _fold_bn(w2, b2, *bn2)
    w1t = jnp.transpose(w1f, (0, 1, 3, 2)).reshape(9, Cmid, Cin)
    w1a_k = w1t[:, :, :C2].astype(mxu_dtype)   # acts on x2's channels
    w1b_k = w1t[:, :, C2:].astype(mxu_dtype)   # acts on up(x1)'s channels
    w2_k = jnp.transpose(w2f, (0, 1, 3, 2)).reshape(9, Cout, Cmid).astype(mxu_dtype)
    b1_c = b1f.reshape(Cmid, 1).astype(jnp.float32)
    b2_c = b2f.reshape(Cout, 1).astype(jnp.float32)

    # bf16 MXU operands (f32 accumulation in-kernel) halve HBM->VMEM bytes.
    up_cm = up_cm.astype(mxu_dtype)
    x2_cm = x2_cm.astype(mxu_dtype)

    kernel = functools.partial(_up_doubleconv_kernel, H=H, W=W)
    out = pl.pallas_call(
        kernel,
        out_shape=jax.ShapeDtypeStruct((N, Cout, HW), jnp.float32),
        grid=(N,),
        in_specs=[
            pl.BlockSpec((C2, HW), lambda n: (0, n)),          # x2 slab, image n
            pl.BlockSpec((C1, HW), lambda n: (0, n)),          # up(x1) slab, image n
            pl.BlockSpec((9, Cmid, C2), lambda n: (0, 0, 0)),  # conv1 taps (x2 part)
            pl.BlockSpec((9, Cmid, C1), lambda n: (0, 0, 0)),  # conv1 taps (up part)
            pl.BlockSpec((Cmid, 1), lambda n: (0, 0)),         # conv1 bias (BN folded)
            pl.BlockSpec((9, Cout, Cmid), lambda n: (0, 0, 0)),# conv2 taps
            pl.BlockSpec((Cout, 1), lambda n: (0, 0)),         # conv2 bias (BN folded)
        ],
        out_specs=pl.BlockSpec((1, Cout, HW), lambda n: (n, 0, 0)),
        compiler_params=pltpu.CompilerParams(
            dimension_semantics=("parallel",),                 # v7x: 2nd TensorCore
            vmem_limit_bytes=32 * 1024 * 1024),
    )(x2_cm, up_cm, w1a_k, w1b_k, b1_c, w2_k, b2_c)
    return out.reshape(N, Cout, H, W)


# ----------------------------------------------------------------------------
# Pure-JAX reference (independent formulation) + params
# ----------------------------------------------------------------------------
def _bilinear_up2_ref(x):
    N, C, h, w = x.shape
    def weights(n_in):
        n_out = 2 * n_in
        if n_in == 1:
            lo = jnp.zeros((n_out,), jnp.int32)
            return lo, lo, jnp.zeros((n_out,), jnp.float32)
        pos = jnp.arange(n_out, dtype=jnp.float32) * (n_in - 1) / (n_out - 1)
        lo = jnp.clip(jnp.floor(pos), 0, n_in - 2).astype(jnp.int32)
        t = pos - lo.astype(jnp.float32)
        return lo, lo + 1, t
    ylo, yhi, ty = weights(h)
    xlo, xhi, tx = weights(w)
    top = (x[:, :, ylo, :] * (1.0 - ty)[None, None, :, None]
           + x[:, :, yhi, :] * ty[None, None, :, None])
    return (top[:, :, :, xlo] * (1.0 - tx)[None, None, None, :]
            + top[:, :, :, xhi] * tx[None, None, None, :])


def up_forward_ref(x1, x2, params):
    (w1, b1, bn1), (w2, b2, bn2) = params
    up = _bilinear_up2_ref(x1)
    diffY = x2.shape[2] - up.shape[2]
    diffX = x2.shape[3] - up.shape[3]
    up = jnp.pad(up, ((0, 0), (0, 0),
                      (diffY // 2, diffY - diffY // 2),
                      (diffX // 2, diffX - diffX // 2)))
    x = jnp.concatenate([x2, up], axis=1)

    def conv_bn_relu(x, w, b, bn):
        gamma, beta, mean, var = bn
        y = lax.conv_general_dilated(x, w, (1, 1), ((1, 1), (1, 1)),
                                     dimension_numbers=("NCHW", "HWIO", "NCHW"),
                                     precision=lax.Precision.HIGHEST)
        y = y + b[None, :, None, None]
        y = ((y - mean[None, :, None, None])
             * (gamma / jnp.sqrt(var + 1e-5))[None, :, None, None]
             + beta[None, :, None, None])
        return jnp.maximum(y, 0.0)

    x = conv_bn_relu(x, w1, b1, bn1)
    x = conv_bn_relu(x, w2, b2, bn2)
    return x


def init_params(key, in_ch, out_ch):
    ks = jax.random.split(key, 12)
    def conv(kw, kb, cin, cout):
        fan_in = 9 * cin
        w = jax.random.normal(kw, (3, 3, cin, cout), jnp.float32) * (2.0 / fan_in) ** 0.5
        b = 0.01 * jax.random.normal(kb, (cout,), jnp.float32)
        return w, b
    def bn(k0, k1, k2, k3, c):
        gamma = 1.0 + 0.1 * jax.random.normal(k0, (c,), jnp.float32)
        beta = 0.1 * jax.random.normal(k1, (c,), jnp.float32)
        mean = 0.1 * jax.random.normal(k2, (c,), jnp.float32)
        var = jax.random.uniform(k3, (c,), jnp.float32, minval=0.5, maxval=1.5)
        return gamma, beta, mean, var
    w1, b1 = conv(ks[0], ks[1], in_ch, out_ch)
    bn1 = bn(ks[2], ks[3], ks[4], ks[5], out_ch)
    w2, b2 = conv(ks[6], ks[7], out_ch, out_ch)
    bn2 = bn(ks[8], ks[9], ks[10], ks[11], out_ch)
    return (w1, b1, bn1), (w2, b2, bn2)


if __name__ == "__main__":
    key = jax.random.PRNGKey(0)
    kx1, kx2, kp = jax.random.split(key, 3)
    in_ch, out_ch = 8, 4                                       # Up(8, 4)
    x1 = jax.random.normal(kx1, (2, 4, 8, 8), jnp.float32)     # feature to upsample
    x2 = jax.random.normal(kx2, (2, 4, 16, 16), jnp.float32)   # skip connection
    params = init_params(kp, in_ch, out_ch)

    ref = jax.block_until_ready(up_forward_ref(x1, x2, params))

    # Strict numerics check: f32 MXU operands.
    out_f32 = jax.block_until_ready(
        jax.jit(functools.partial(up_forward, mxu_dtype=jnp.float32))(x1, x2, params))
    assert out_f32.shape == (2, out_ch, 16, 16), out_f32.shape
    assert out_f32.dtype == jnp.float32
    err_f32 = float(jnp.max(jnp.abs(out_f32 - ref)))
    assert err_f32 < 1e-4, f"f32 mismatch vs reference: {err_f32}"

    # Default (perf) path: bf16 MXU operands, f32 accumulation.
    # Tolerance loosened per perf review (expect ~1e-2-scale abs error).
    out_bf16 = jax.block_until_ready(jax.jit(up_forward)(x1, x2, params))
    assert out_bf16.shape == (2, out_ch, 16, 16), out_bf16.shape
    assert out_bf16.dtype == jnp.float32
    err_bf16 = float(jnp.max(jnp.abs(out_bf16 - ref)))
    assert err_bf16 < 1e-1, f"bf16 mismatch vs reference: {err_bf16}"

    print("KERNEL_OK")
</pallas_src>

<mosaic_0001>
module attributes {stable_mosaic.version = 11 : i64} {
  func.func @_up_doubleconv_kernel(%arg0: i32, %arg1: memref<4x256xf32, #tpu.memory_space<vmem>>, %arg2: memref<4x256xf32, #tpu.memory_space<vmem>>, %arg3: memref<9x4x4xf32, #tpu.memory_space<vmem>>, %arg4: memref<9x4x4xf32, #tpu.memory_space<vmem>>, %arg5: memref<4x1xf32, #tpu.memory_space<vmem>>, %arg6: memref<9x4x4xf32, #tpu.memory_space<vmem>>, %arg7: memref<4x1xf32, #tpu.memory_space<vmem>>, %arg8: memref<1x4x256xf32, #tpu.memory_space<vmem>>) attributes {dimension_semantics = [#tpu.dimension_semantics<parallel>], iteration_bounds = array<i64: 2>, scalar_prefetch = 0 : i64, scratch_operands = 0 : i64, tpu.core_type = #tpu.core_type<tc>, window_params = [{transform_indices = @transform_0, window_bounds = array<i64: 4, 256>}, {transform_indices = @transform_1, window_bounds = array<i64: 4, 256>}, {pipeline_mode = #tpu.pipeline_mode<synchronous>, transform_indices = @transform_2, window_bounds = array<i64: 9, 4, 4>}, {pipeline_mode = #tpu.pipeline_mode<synchronous>, transform_indices = @transform_3, window_bounds = array<i64: 9, 4, 4>}, {pipeline_mode = #tpu.pipeline_mode<synchronous>, transform_indices = @transform_4, window_bounds = array<i64: 4, 1>}, {pipeline_mode = #tpu.pipeline_mode<synchronous>, transform_indices = @transform_5, window_bounds = array<i64: 9, 4, 4>}, {pipeline_mode = #tpu.pipeline_mode<synchronous>, transform_indices = @transform_6, window_bounds = array<i64: 4, 1>}, {transform_indices = @transform_7, window_bounds = array<i64: 1, 4, 256>}]} {
    %0 = tpu.iota {dimensions = array<i32: 1>} : vector<1x256xi32>
    %c16_i32 = arith.constant 16 : i32
    %c0_i32 = arith.constant 0 : i32
    %1 = arith.cmpi eq, %c16_i32, %c0_i32 : i32
    %c1_i32 = arith.constant 1 : i32
    %2 = arith.select %1, %c1_i32, %c16_i32 : i32
    %3 = vector.broadcast %2 : i32 to vector<1x256xi32>
    %4 = arith.remsi %0, %3 : vector<1x256xi32>
    %c0_i32_0 = arith.constant 0 : i32
    %5 = vector.broadcast %c0_i32_0 : i32 to vector<1x256xi32>
    %6 = arith.cmpi ne, %4, %5 : vector<1x256xi32>
    %c0_i32_1 = arith.constant 0 : i32
    %7 = vector.broadcast %c0_i32_1 : i32 to vector<1x256xi32>
    %8 = arith.cmpi slt, %4, %7 : vector<1x256xi32>
    %c0_i32_2 = arith.constant 0 : i32
    %9 = arith.cmpi slt, %2, %c0_i32_2 : i32
    %10 = vector.broadcast %9 : i1 to vector<1x256xi1>
    %11 = vector.broadcast %10 : vector<1x256xi1> to vector<1x256xi1>
    %12 = arith.xori %8, %11 : vector<1x256xi1>
    %13 = arith.andi %12, %6 : vector<1x256xi1>
    %14 = vector.broadcast %2 : i32 to vector<1x256xi32>
    %15 = arith.addi %4, %14 : vector<1x256xi32>
    %16 = arith.select %13, %15, %4 : vector<1x256xi1>, vector<1x256xi32>
    %c1_i32_3 = arith.constant 1 : i32
    %17 = vector.broadcast %c1_i32_3 : i32 to vector<1x256xi32>
    %18 = arith.cmpi sge, %16, %17 : vector<1x256xi32>
    %19 = arith.extui %18 : vector<1x256xi1> to vector<1x256xi32>
    %20 = arith.sitofp %19 : vector<1x256xi32> to vector<1x256xf32>
    %c14_i32 = arith.constant 14 : i32
    %21 = vector.broadcast %c14_i32 : i32 to vector<1x256xi32>
    %22 = arith.cmpi sle, %16, %21 : vector<1x256xi32>
    %23 = arith.extui %22 : vector<1x256xi1> to vector<1x256xi32>
    %24 = arith.sitofp %23 : vector<1x256xi32> to vector<1x256xf32>
    %c0 = arith.constant 0 : index
    %c0_4 = arith.constant 0 : index
    %25 = vector.load %arg1[%c0, %c0_4] : memref<4x256xf32, #tpu.memory_space<vmem>>, vector<4x256xf32>
    %c0_5 = arith.constant 0 : index
    %c0_6 = arith.constant 0 : index
    %26 = vector.load %arg2[%c0_5, %c0_6] : memref<4x256xf32, #tpu.memory_space<vmem>>, vector<4x256xf32>
    %c0_7 = arith.constant 0 : index
    %c0_8 = arith.constant 0 : index
    %27 = vector.load %arg5[%c0_7, %c0_8] : memref<4x1xf32, #tpu.memory_space<vmem>>, vector<4x1xf32>
    %cst = arith.constant 0.000000e+00 : f32
    %28 = vector.broadcast %cst : f32 to vector<4x256xf32>
    %29 = vector.broadcast %27 : vector<4x1xf32> to vector<4x256xf32>
    %30 = arith.addf %28, %29 : vector<4x256xf32>
    %cst_9 = arith.constant 0.000000e+00 : f32
    %31 = vector.broadcast %cst_9 : f32 to vector<4x17xf32>
    %32 = vector.extract_strided_slice %25 {offsets = [0, 0], sizes = [4, 239], strides = [1, 1]} : vector<4x256xf32> to vector<4x239xf32>
    %33 = tpu.concatenate %31, %32 in 1 : vector<4x17xf32>, vector<4x239xf32> -> vector<4x256xf32>
    %c0_10 = arith.constant 0 : index
    %c0_11 = arith.constant 0 : index
    %c0_12 = arith.constant 0 : index
    %34 = vector.load %arg3[%c0_10, %c0_11, %c0_12] : memref<9x4x4xf32, #tpu.memory_space<vmem>>, vector<1x4x4xf32>
    %35 = vector.shape_cast %34 : vector<1x4x4xf32> to vector<4x4xf32>
    %cst_13 = arith.constant dense<0.000000e+00> : vector<4x256xf32>
    %36 = tpu.matmul %35, %33, %cst_13 {dimension_numbers = #tpu.dot_dimension_numbers<[1], [0], [0], [1], [0, 0, 1, 1], [], []>} : vector<4x4xf32>, vector<4x256xf32>, vector<4x256xf32> -> vector<4x256xf32>
    %cst_14 = arith.constant 0.000000e+00 : f32
    %37 = vector.broadcast %cst_14 : f32 to vector<4x17xf32>
    %38 = vector.extract_strided_slice %26 {offsets = [0, 0], sizes = [4, 239], strides = [1, 1]} : vector<4x256xf32> to vector<4x239xf32>
    %39 = tpu.concatenate %37, %38 in 1 : vector<4x17xf32>, vector<4x239xf32> -> vector<4x256xf32>
    %c0_15 = arith.constant 0 : index
    %c0_16 = arith.constant 0 : index
    %c0_17 = arith.constant 0 : index
    %40 = vector.load %arg4[%c0_15, %c0_16, %c0_17] : memref<9x4x4xf32, #tpu.memory_space<vmem>>, vector<1x4x4xf32>
    %41 = vector.shape_cast %40 : vector<1x4x4xf32> to vector<4x4xf32>
    %cst_18 = arith.constant dense<0.000000e+00> : vector<4x256xf32>
    %42 = tpu.matmul %41, %39, %cst_18 {dimension_numbers = #tpu.dot_dimension_numbers<[1], [0], [0], [1], [0, 0, 1, 1], [], []>} : vector<4x4xf32>, vector<4x256xf32>, vector<4x256xf32> -> vector<4x256xf32>
    %43 = arith.addf %36, %42 : vector<4x256xf32>
    %44 = vector.broadcast %20 : vector<1x256xf32> to vector<4x256xf32>
    %45 = arith.mulf %43, %44 : vector<4x256xf32>
    %46 = arith.addf %30, %45 : vector<4x256xf32>
    %cst_19 = arith.constant 0.000000e+00 : f32
    %47 = vector.broadcast %cst_19 : f32 to vector<4x16xf32>
    %48 = vector.extract_strided_slice %25 {offsets = [0, 0], sizes = [4, 240], strides = [1, 1]} : vector<4x256xf32> to vector<4x240xf32>
    %49 = tpu.concatenate %47, %48 in 1 : vector<4x16xf32>, vector<4x240xf32> -> vector<4x256xf32>
    %c1 = arith.constant 1 : index
    %c0_20 = arith.constant 0 : index
    %c0_21 = arith.constant 0 : index
    %50 = vector.load %arg3[%c1, %c0_20, %c0_21] : memref<9x4x4xf32, #tpu.memory_space<vmem>>, vector<1x4x4xf32>
    %51 = vector.shape_cast %50 : vector<1x4x4xf32> to vector<4x4xf32>
    %cst_22 = arith.constant dense<0.000000e+00> : vector<4x256xf32>
    %52 = tpu.matmul %51, %49, %cst_22 {dimension_numbers = #tpu.dot_dimension_numbers<[1], [0], [0], [1], [0, 0, 1, 1], [], []>} : vector<4x4xf32>, vector<4x256xf32>, vector<4x256xf32> -> vector<4x256xf32>
    %cst_23 = arith.constant 0.000000e+00 : f32
    %53 = vector.broadcast %cst_23 : f32 to vector<4x16xf32>
    %54 = vector.extract_strided_slice %26 {offsets = [0, 0], sizes = [4, 240], strides = [1, 1]} : vector<4x256xf32> to vector<4x240xf32>
    %55 = tpu.concatenate %53, %54 in 1 : vector<4x16xf32>, vector<4x240xf32> -> vector<4x256xf32>
    %c1_24 = arith.constant 1 : index
    %c0_25 = arith.constant 0 : index
    %c0_26 = arith.constant 0 : index
    %56 = vector.load %arg4[%c1_24, %c0_25, %c0_26] : memref<9x4x4xf32, #tpu.memory_space<vmem>>, vector<1x4x4xf32>
    %57 = vector.shape_cast %56 : vector<1x4x4xf32> to vector<4x4xf32>
    %cst_27 = arith.constant dense<0.000000e+00> : vector<4x256xf32>
    %58 = tpu.matmul %57, %55, %cst_27 {dimension_numbers = #tpu.dot_dimension_numbers<[1], [0], [0], [1], [0, 0, 1, 1], [], []>} : vector<4x4xf32>, vector<4x256xf32>, vector<4x256xf32> -> vector<4x256xf32>
    %59 = arith.addf %52, %58 : vector<4x256xf32>
    %60 = arith.addf %46, %59 : vector<4x256xf32>
    %cst_28 = arith.constant 0.000000e+00 : f32
    %61 = vector.broadcast %cst_28 : f32 to vector<4x15xf32>
    %62 = vector.extract_strided_slice %25 {offsets = [0, 0], sizes = [4, 241], strides = [1, 1]} : vector<4x256xf32> to vector<4x241xf32>
    %63 = tpu.concatenate %61, %62 in 1 : vector<4x15xf32>, vector<4x241xf32> -> vector<4x256xf32>
    %c2 = arith.constant 2 : index
    %c0_29 = arith.constant 0 : index
    %c0_30 = arith.constant 0 : index
    %64 = vector.load %arg3[%c2, %c0_29, %c0_30] : memref<9x4x4xf32, #tpu.memory_space<vmem>>, vector<1x4x4xf32>
    %65 = vector.shape_cast %64 : vector<1x4x4xf32> to vector<4x4xf32>
    %cst_31 = arith.constant dense<0.000000e+00> : vector<4x256xf32>
    %66 = tpu.matmul %65, %63, %cst_31 {dimension_numbers = #tpu.dot_dimension_numbers<[1], [0], [0], [1], [0, 0, 1, 1], [], []>} : vector<4x4xf32>, vector<4x256xf32>, vector<4x256xf32> -> vector<4x256xf32>
    %cst_32 = arith.constant 0.000000e+00 : f32
    %67 = vector.broadcast %cst_32 : f32 to vector<4x15xf32>
    %68 = vector.extract_strided_slice %26 {offsets = [0, 0], sizes = [4, 241], strides = [1, 1]} : vector<4x256xf32> to vector<4x241xf32>
    %69 = tpu.concatenate %67, %68 in 1 : vector<4x15xf32>, vector<4x241xf32> -> vector<4x256xf32>
    %c2_33 = arith.constant 2 : index
    %c0_34 = arith.constant 0 : index
    %c0_35 = arith.constant 0 : index
    %70 = vector.load %arg4[%c2_33, %c0_34, %c0_35] : memref<9x4x4xf32, #tpu.memory_space<vmem>>, vector<1x4x4xf32>
    %71 = vector.shape_cast %70 : vector<1x4x4xf32> to vector<4x4xf32>
    %cst_36 = arith.constant dense<0.000000e+00> : vector<4x256xf32>
    %72 = tpu.matmul %71, %69, %cst_36 {dimension_numbers = #tpu.dot_dimension_numbers<[1], [0], [0], [1], [0, 0, 1, 1], [], []>} : vector<4x4xf32>, vector<4x256xf32>, vector<4x256xf32> -> vector<4x256xf32>
    %73 = arith.addf %66, %72 : vector<4x256xf32>
    %74 = vector.broadcast %24 : vector<1x256xf32> to vector<4x256xf32>
    %75 = arith.mulf %73, %74 : vector<4x256xf32>
    %76 = arith.addf %60, %75 : vector<4x256xf32>
    %cst_37 = arith.constant 0.000000e+00 : f32
    %77 = vector.broadcast %cst_37 : f32 to vector<4x1xf32>
    %78 = vector.extract_strided_slice %25 {offsets = [0, 0], sizes = [4, 255], strides = [1, 1]} : vector<4x256xf32> to vector<4x255xf32>
    %79 = tpu.concatenate %77, %78 in 1 : vector<4x1xf32>, vector<4x255xf32> -> vector<4x256xf32>
    %c3 = arith.constant 3 : index
    %c0_38 = arith.constant 0 : index
    %c0_39 = arith.constant 0 : index
    %80 = vector.load %arg3[%c3, %c0_38, %c0_39] : memref<9x4x4xf32, #tpu.memory_space<vmem>>, vector<1x4x4xf32>
    %81 = vector.shape_cast %80 : vector<1x4x4xf32> to vector<4x4xf32>
    %cst_40 = arith.constant dense<0.000000e+00> : vector<4x256xf32>
    %82 = tpu.matmul %81, %79, %cst_40 {dimension_numbers = #tpu.dot_dimension_numbers<[1], [0], [0], [1], [0, 0, 1, 1], [], []>} : vector<4x4xf32>, vector<4x256xf32>, vector<4x256xf32> -> vector<4x256xf32>
    %cst_41 = arith.constant 0.000000e+00 : f32
    %83 = vector.broadcast %cst_41 : f32 to vector<4x1xf32>
    %84 = vector.extract_strided_slice %26 {offsets = [0, 0], sizes = [4, 255], strides = [1, 1]} : vector<4x256xf32> to vector<4x255xf32>
    %85 = tpu.concatenate %83, %84 in 1 : vector<4x1xf32>, vector<4x255xf32> -> vector<4x256xf32>
    %c3_42 = arith.constant 3 : index
    %c0_43 = arith.constant 0 : index
    %c0_44 = arith.constant 0 : index
    %86 = vector.load %arg4[%c3_42, %c0_43, %c0_44] : memref<9x4x4xf32, #tpu.memory_space<vmem>>, vector<1x4x4xf32>
    %87 = vector.shape_cast %86 : vector<1x4x4xf32> to vector<4x4xf32>
    %cst_45 = arith.constant dense<0.000000e+00> : vector<4x256xf32>
    %88 = tpu.matmul %87, %85, %cst_45 {dimension_numbers = #tpu.dot_dimension_numbers<[1], [0], [0], [1], [0, 0, 1, 1], [], []>} : vector<4x4xf32>, vector<4x256xf32>, vector<4x256xf32> -> vector<4x256xf32>
    %89 = arith.addf %82, %88 : vector<4x256xf32>
    %90 = vector.broadcast %20 : vector<1x256xf32> to vector<4x256xf32>
    %91 = arith.mulf %89, %90 : vector<4x256xf32>
    %92 = arith.addf %76, %91 : vector<4x256xf32>
    %c4 = arith.constant 4 : index
    %c0_46 = arith.constant 0 : index
    %c0_47 = arith.constant 0 : index
    %93 = vector.load %arg3[%c4, %c0_46, %c0_47] : memref<9x4x4xf32, #tpu.memory_space<vmem>>, vector<1x4x4xf32>
    %94 = vector.shape_cast %93 : vector<1x4x4xf32> to vector<4x4xf32>
    %cst_48 = arith.constant dense<0.000000e+00> : vector<4x256xf32>
    %95 = tpu.matmul %94, %25, %cst_48 {dimension_numbers = #tpu.dot_dimension_numbers<[1], [0], [0], [1], [0, 0, 1, 1], [], []>} : vector<4x4xf32>, vector<4x256xf32>, vector<4x256xf32> -> vector<4x256xf32>
    %c4_49 = arith.constant 4 : index
    %c0_50 = arith.constant 0 : index
    %c0_51 = arith.constant 0 : index
    %96 = vector.load %arg4[%c4_49, %c0_50, %c0_51] : memref<9x4x4xf32, #tpu.memory_space<vmem>>, vector<1x4x4xf32>
    %97 = vector.shape_cast %96 : vector<1x4x4xf32> to vector<4x4xf32>
    %cst_52 = arith.constant dense<0.000000e+00> : vector<4x256xf32>
    %98 = tpu.matmul %97, %26, %cst_52 {dimension_numbers = #tpu.dot_dimension_numbers<[1], [0], [0], [1], [0, 0, 1, 1], [], []>} : vector<4x4xf32>, vector<4x256xf32>, vector<4x256xf32> -> vector<4x256xf32>
    %99 = arith.addf %95, %98 : vector<4x256xf32>
    %100 = arith.addf %92, %99 : vector<4x256xf32>
    %101 = vector.extract_strided_slice %25 {offsets = [0, 1], sizes = [4, 255], strides = [1, 1]} : vector<4x256xf32> to vector<4x255xf32>
    %cst_53 = arith.constant 0.000000e+00 : f32
    %102 = vector.broadcast %cst_53 : f32 to vector<4x1xf32>
    %103 = tpu.concatenate %101, %102 in 1 : vector<4x255xf32>, vector<4x1xf32> -> vector<4x256xf32>
    %c5 = arith.constant 5 : index
    %c0_54 = arith.constant 0 : index
    %c0_55 = arith.constant 0 : index
    %104 = vector.load %arg3[%c5, %c0_54, %c0_55] : memref<9x4x4xf32, #tpu.memory_space<vmem>>, vector<1x4x4xf32>
    %105 = vector.shape_cast %104 : vector<1x4x4xf32> to vector<4x4xf32>
    %cst_56 = arith.constant dense<0.000000e+00> : vector<4x256xf32>
    %106 = tpu.matmul %105, %103, %cst_56 {dimension_numbers = #tpu.dot_dimension_numbers<[1], [0], [0], [1], [0, 0, 1, 1], [], []>} : vector<4x4xf32>, vector<4x256xf32>, vector<4x256xf32> -> vector<4x256xf32>
    %107 = vector.extract_strided_slice %26 {offsets = [0, 1], sizes = [4, 255], strides = [1, 1]} : vector<4x256xf32> to vector<4x255xf32>
    %cst_57 = arith.constant 0.000000e+00 : f32
    %108 = vector.broadcast %cst_57 : f32 to vector<4x1xf32>
    %109 = tpu.concatenate %107, %108 in 1 : vector<4x255xf32>, vector<4x1xf32> -> vector<4x256xf32>
    %c5_58 = arith.constant 5 : index
    %c0_59 = arith.constant 0 : index
    %c0_60 = arith.constant 0 : index
    %110 = vector.load %arg4[%c5_58, %c0_59, %c0_60] : memref<9x4x4xf32, #tpu.memory_space<vmem>>, vector<1x4x4xf32>
    %111 = vector.shape_cast %110 : vector<1x4x4xf32> to vector<4x4xf32>
    %cst_61 = arith.constant dense<0.000000e+00> : vector<4x256xf32>
    %112 = tpu.matmul %111, %109, %cst_61 {dimension_numbers = #tpu.dot_dimension_numbers<[1], [0], [0], [1], [0, 0, 1, 1], [], []>} : vector<4x4xf32>, vector<4x256xf32>, vector<4x256xf32> -> vector<4x256xf32>
    %113 = arith.addf %106, %112 : vector<4x256xf32>
    %114 = vector.broadcast %24 : vector<1x256xf32> to vector<4x256xf32>
    %115 = arith.mulf %113, %114 : vector<4x256xf32>
    %116 = arith.addf %100, %115 : vector<4x256xf32>
    %117 = vector.extract_strided_slice %25 {offsets = [0, 15], sizes = [4, 241], strides = [1, 1]} : vector<4x256xf32> to vector<4x241xf32>
    %cst_62 = arith.constant 0.000000e+00 : f32
    %118 = vector.broadcast %cst_62 : f32 to vector<4x15xf32>
    %119 = tpu.concatenate %117, %118 in 1 : vector<4x241xf32>, vector<4x15xf32> -> vector<4x256xf32>
    %c6 = arith.constant 6 : index
    %c0_63 = arith.constant 0 : index
    %c0_64 = arith.constant 0 : index
    %120 = vector.load %arg3[%c6, %c0_63, %c0_64] : memref<9x4x4xf32, #tpu.memory_space<vmem>>, vector<1x4x4xf32>
    %121 = vector.shape_cast %120 : vector<1x4x4xf32> to vector<4x4xf32>
    %cst_65 = arith.constant dense<0.000000e+00> : vector<4x256xf32>
    %122 = tpu.matmul %121, %119, %cst_65 {dimension_numbers = #tpu.dot_dimension_numbers<[1], [0], [0], [1], [0, 0, 1, 1], [], []>} : vector<4x4xf32>, vector<4x256xf32>, vector<4x256xf32> -> vector<4x256xf32>
    %123 = vector.extract_strided_slice %26 {offsets = [0, 15], sizes = [4, 241], strides = [1, 1]} : vector<4x256xf32> to vector<4x241xf32>
    %cst_66 = arith.constant 0.000000e+00 : f32
    %124 = vector.broadcast %cst_66 : f32 to vector<4x15xf32>
    %125 = tpu.concatenate %123, %124 in 1 : vector<4x241xf32>, vector<4x15xf32> -> vector<4x256xf32>
    %c6_67 = arith.constant 6 : index
    %c0_68 = arith.constant 0 : index
    %c0_69 = arith.constant 0 : index
    %126 = vector.load %arg4[%c6_67, %c0_68, %c0_69] : memref<9x4x4xf32, #tpu.memory_space<vmem>>, vector<1x4x4xf32>
    %127 = vector.shape_cast %126 : vector<1x4x4xf32> to vector<4x4xf32>
    %cst_70 = arith.constant dense<0.000000e+00> : vector<4x256xf32>
    %128 = tpu.matmul %127, %125, %cst_70 {dimension_numbers = #tpu.dot_dimension_numbers<[1], [0], [0], [1], [0, 0, 1, 1], [], []>} : vector<4x4xf32>, vector<4x256xf32>, vector<4x256xf32> -> vector<4x256xf32>
    %129 = arith.addf %122, %128 : vector<4x256xf32>
    %130 = vector.broadcast %20 : vector<1x256xf32> to vector<4x256xf32>
    %131 = arith.mulf %129, %130 : vector<4x256xf32>
    %132 = arith.addf %116, %131 : vector<4x256xf32>
    %133 = vector.extract_strided_slice %25 {offsets = [0, 16], sizes = [4, 240], strides = [1, 1]} : vector<4x256xf32> to vector<4x240xf32>
    %cst_71 = arith.constant 0.000000e+00 : f32
    %134 = vector.broadcast %cst_71 : f32 to vector<4x16xf32>
    %135 = tpu.concatenate %133, %134 in 1 : vector<4x240xf32>, vector<4x16xf32> -> vector<4x256xf32>
    %c7 = arith.constant 7 : index
    %c0_72 = arith.constant 0 : index
    %c0_73 = arith.constant 0 : index
    %136 = vector.load %arg3[%c7, %c0_72, %c0_73] : memref<9x4x4xf32, #tpu.memory_space<vmem>>, vector<1x4x4xf32>
    %137 = vector.shape_cast %136 : vector<1x4x4xf32> to vector<4x4xf32>
    %cst_74 = arith.constant dense<0.000000e+00> : vector<4x256xf32>
    %138 = tpu.matmul %137, %135, %cst_74 {dimension_numbers = #tpu.dot_dimension_numbers<[1], [0], [0], [1], [0, 0, 1, 1], [], []>} : vector<4x4xf32>, vector<4x256xf32>, vector<4x256xf32> -> vector<4x256xf32>
    %139 = vector.extract_strided_slice %26 {offsets = [0, 16], sizes = [4, 240], strides = [1, 1]} : vector<4x256xf32> to vector<4x240xf32>
    %cst_75 = arith.constant 0.000000e+00 : f32
    %140 = vector.broadcast %cst_75 : f32 to vector<4x16xf32>
    %141 = tpu.concatenate %139, %140 in 1 : vector<4x240xf32>, vector<4x16xf32> -> vector<4x256xf32>
    %c7_76 = arith.constant 7 : index
    %c0_77 = arith.constant 0 : index
    %c0_78 = arith.constant 0 : index
    %142 = vector.load %arg4[%c7_76, %c0_77, %c0_78] : memref<9x4x4xf32, #tpu.memory_space<vmem>>, vector<1x4x4xf32>
    %143 = vector.shape_cast %142 : vector<1x4x4xf32> to vector<4x4xf32>
    %cst_79 = arith.constant dense<0.000000e+00> : vector<4x256xf32>
    %144 = tpu.matmul %143, %141, %cst_79 {dimension_numbers = #tpu.dot_dimension_numbers<[1], [0], [0], [1], [0, 0, 1, 1], [], []>} : vector<4x4xf32>, vector<4x256xf32>, vector<4x256xf32> -> vector<4x256xf32>
    %145 = arith.addf %138, %144 : vector<4x256xf32>
    %146 = arith.addf %132, %145 : vector<4x256xf32>
    %147 = vector.extract_strided_slice %25 {offsets = [0, 17], sizes = [4, 239], strides = [1, 1]} : vector<4x256xf32> to vector<4x239xf32>
    %cst_80 = arith.constant 0.000000e+00 : f32
    %148 = vector.broadcast %cst_80 : f32 to vector<4x17xf32>
    %149 = tpu.concatenate %147, %148 in 1 : vector<4x239xf32>, vector<4x17xf32> -> vector<4x256xf32>
    %c8 = arith.constant 8 : index
    %c0_81 = arith.constant 0 : index
    %c0_82 = arith.constant 0 : index
    %150 = vector.load %arg3[%c8, %c0_81, %c0_82] : memref<9x4x4xf32, #tpu.memory_space<vmem>>, vector<1x4x4xf32>
    %151 = vector.shape_cast %150 : vector<1x4x4xf32> to vector<4x4xf32>
    %cst_83 = arith.constant dense<0.000000e+00> : vector<4x256xf32>
    %152 = tpu.matmul %151, %149, %cst_83 {dimension_numbers = #tpu.dot_dimension_numbers<[1], [0], [0], [1], [0, 0, 1, 1], [], []>} : vector<4x4xf32>, vector<4x256xf32>, vector<4x256xf32> -> vector<4x256xf32>
    %153 = vector.extract_strided_slice %26 {offsets = [0, 17], sizes = [4, 239], strides = [1, 1]} : vector<4x256xf32> to vector<4x239xf32>
    %cst_84 = arith.constant 0.000000e+00 : f32
    %154 = vector.broadcast %cst_84 : f32 to vector<4x17xf32>
    %155 = tpu.concatenate %153, %154 in 1 : vector<4x239xf32>, vector<4x17xf32> -> vector<4x256xf32>
    %c8_85 = arith.constant 8 : index
    %c0_86 = arith.constant 0 : index
    %c0_87 = arith.constant 0 : index
    %156 = vector.load %arg4[%c8_85, %c0_86, %c0_87] : memref<9x4x4xf32, #tpu.memory_space<vmem>>, vector<1x4x4xf32>
    %157 = vector.shape_cast %156 : vector<1x4x4xf32> to vector<4x4xf32>
    %cst_88 = arith.constant dense<0.000000e+00> : vector<4x256xf32>
    %158 = tpu.matmul %157, %155, %cst_88 {dimension_numbers = #tpu.dot_dimension_numbers<[1], [0], [0], [1], [0, 0, 1, 1], [], []>} : vector<4x4xf32>, vector<4x256xf32>, vector<4x256xf32> -> vector<4x256xf32>
    %159 = arith.addf %152, %158 : vector<4x256xf32>
    %160 = vector.broadcast %24 : vector<1x256xf32> to vector<4x256xf32>
    %161 = arith.mulf %159, %160 : vector<4x256xf32>
    %162 = arith.addf %146, %161 : vector<4x256xf32>
    %cst_89 = arith.constant 0.000000e+00 : f32
    %163 = vector.broadcast %cst_89 : f32 to vector<4x256xf32>
    %164 = arith.maximumf %162, %163 : vector<4x256xf32>
    %c0_90 = arith.constant 0 : index
    %c0_91 = arith.constant 0 : index
    %165 = vector.load %arg7[%c0_90, %c0_91] : memref<4x1xf32, #tpu.memory_space<vmem>>, vector<4x1xf32>
    %cst_92 = arith.constant 0.000000e+00 : f32
    %166 = vector.broadcast %cst_92 : f32 to vector<4x256xf32>
    %167 = vector.broadcast %165 : vector<4x1xf32> to vector<4x256xf32>
    %168 = arith.addf %166, %167 : vector<4x256xf32>
    %cst_93 = arith.constant 0.000000e+00 : f32
    %169 = vector.broadcast %cst_93 : f32 to vector<4x17xf32>
    %170 = vector.extract_strided_slice %164 {offsets = [0, 0], sizes = [4, 239], strides = [1, 1]} : vector<4x256xf32> to vector<4x239xf32>
    %171 = tpu.concatenate %169, %170 in 1 : vector<4x17xf32>, vector<4x239xf32> -> vector<4x256xf32>
    %c0_94 = arith.constant 0 : index
    %c0_95 = arith.constant 0 : index
    %c0_96 = arith.constant 0 : index
    %172 = vector.load %arg6[%c0_94, %c0_95, %c0_96] : memref<9x4x4xf32, #tpu.memory_space<vmem>>, vector<1x4x4xf32>
    %173 = vector.shape_cast %172 : vector<1x4x4xf32> to vector<4x4xf32>
    %cst_97 = arith.constant dense<0.000000e+00> : vector<4x256xf32>
    %174 = tpu.matmul %173, %171, %cst_97 {dimension_numbers = #tpu.dot_dimension_numbers<[1], [0], [0], [1], [0, 0, 1, 1], [], []>} : vector<4x4xf32>, vector<4x256xf32>, vector<4x256xf32> -> vector<4x256xf32>
    %175 = vector.broadcast %20 : vector<1x256xf32> to vector<4x256xf32>
    %176 = arith.mulf %174, %175 : vector<4x256xf32>
    %177 = arith.addf %168, %176 : vector<4x256xf32>
    %cst_98 = arith.constant 0.000000e+00 : f32
    %178 = vector.broadcast %cst_98 : f32 to vector<4x16xf32>
    %179 = vector.extract_strided_slice %164 {offsets = [0, 0], sizes = [4, 240], strides = [1, 1]} : vector<4x256xf32> to vector<4x240xf32>
    %180 = tpu.concatenate %178, %179 in 1 : vector<4x16xf32>, vector<4x240xf32> -> vector<4x256xf32>
    %c1_99 = arith.constant 1 : index
    %c0_100 = arith.constant 0 : index
    %c0_101 = arith.constant 0 : index
    %181 = vector.load %arg6[%c1_99, %c0_100, %c0_101] : memref<9x4x4xf32, #tpu.memory_space<vmem>>, vector<1x4x4xf32>
    %182 = vector.shape_cast %181 : vector<1x4x4xf32> to vector<4x4xf32>
    %cst_102 = arith.constant dense<0.000000e+00> : vector<4x256xf32>
    %183 = tpu.matmul %182, %180, %cst_102 {dimension_numbers = #tpu.dot_dimension_numbers<[1], [0], [0], [1], [0, 0, 1, 1], [], []>} : vector<4x4xf32>, vector<4x256xf32>, vector<4x256xf32> -> vector<4x256xf32>
    %184 = arith.addf %177, %183 : vector<4x256xf32>
    %cst_103 = arith.constant 0.000000e+00 : f32
    %185 = vector.broadcast %cst_103 : f32 to vector<4x15xf32>
    %186 = vector.extract_strided_slice %164 {offsets = [0, 0], sizes = [4, 241], strides = [1, 1]} : vector<4x256xf32> to vector<4x241xf32>
    %187 = tpu.concatenate %185, %186 in 1 : vector<4x15xf32>, vector<4x241xf32> -> vector<4x256xf32>
    %c2_104 = arith.constant 2 : index
    %c0_105 = arith.constant 0 : index
    %c0_106 = arith.constant 0 : index
    %188 = vector.load %arg6[%c2_104, %c0_105, %c0_106] : memref<9x4x4xf32, #tpu.memory_space<vmem>>, vector<1x4x4xf32>
    %189 = vector.shape_cast %188 : vector<1x4x4xf32> to vector<4x4xf32>
    %cst_107 = arith.constant dense<0.000000e+00> : vector<4x256xf32>
    %190 = tpu.matmul %189, %187, %cst_107 {dimension_numbers = #tpu.dot_dimension_numbers<[1], [0], [0], [1], [0, 0, 1, 1], [], []>} : vector<4x4xf32>, vector<4x256xf32>, vector<4x256xf32> -> vector<4x256xf32>
    %191 = vector.broadcast %24 : vector<1x256xf32> to vector<4x256xf32>
    %192 = arith.mulf %190, %191 : vector<4x256xf32>
    %193 = arith.addf %184, %192 : vector<4x256xf32>
    %cst_108 = arith.constant 0.000000e+00 : f32
    %194 = vector.broadcast %cst_108 : f32 to vector<4x1xf32>
    %195 = vector.extract_strided_slice %164 {offsets = [0, 0], sizes = [4, 255], strides = [1, 1]} : vector<4x256xf32> to vector<4x255xf32>
    %196 = tpu.concatenate %194, %195 in 1 : vector<4x1xf32>, vector<4x255xf32> -> vector<4x256xf32>
    %c3_109 = arith.constant 3 : index
    %c0_110 = arith.constant 0 : index
    %c0_111 = arith.constant 0 : index
    %197 = vector.load %arg6[%c3_109, %c0_110, %c0_111] : memref<9x4x4xf32, #tpu.memory_space<vmem>>, vector<1x4x4xf32>
    %198 = vector.shape_cast %197 : vector<1x4x4xf32> to vector<4x4xf32>
    %cst_112 = arith.constant dense<0.000000e+00> : vector<4x256xf32>
    %199 = tpu.matmul %198, %196, %cst_112 {dimension_numbers = #tpu.dot_dimension_numbers<[1], [0], [0], [1], [0, 0, 1, 1], [], []>} : vector<4x4xf32>, vector<4x256xf32>, vector<4x256xf32> -> vector<4x256xf32>
    %200 = vector.broadcast %20 : vector<1x256xf32> to vector<4x256xf32>
    %201 = arith.mulf %199, %200 : vector<4x256xf32>
    %202 = arith.addf %193, %201 : vector<4x256xf32>
    %c4_113 = arith.constant 4 : index
    %c0_114 = arith.constant 0 : index
    %c0_115 = arith.constant 0 : index
    %203 = vector.load %arg6[%c4_113, %c0_114, %c0_115] : memref<9x4x4xf32, #tpu.memory_space<vmem>>, vector<1x4x4xf32>
    %204 = vector.shape_cast %203 : vector<1x4x4xf32> to vector<4x4xf32>
    %cst_116 = arith.constant dense<0.000000e+00> : vector<4x256xf32>
    %205 = tpu.matmul %204, %164, %cst_116 {dimension_numbers = #tpu.dot_dimension_numbers<[1], [0], [0], [1], [0, 0, 1, 1], [], []>} : vector<4x4xf32>, vector<4x256xf32>, vector<4x256xf32> -> vector<4x256xf32>
    %206 = arith.addf %202, %205 : vector<4x256xf32>
    %207 = vector.extract_strided_slice %164 {offsets = [0, 1], sizes = [4, 255], strides = [1, 1]} : vector<4x256xf32> to vector<4x255xf32>
    %cst_117 = arith.constant 0.000000e+00 : f32
    %208 = vector.broadcast %cst_117 : f32 to vector<4x1xf32>
    %209 = tpu.concatenate %207, %208 in 1 : vector<4x255xf32>, vector<4x1xf32> -> vector<4x256xf32>
    %c5_118 = arith.constant 5 : index
    %c0_119 = arith.constant 0 : index
    %c0_120 = arith.constant 0 : index
    %210 = vector.load %arg6[%c5_118, %c0_119, %c0_120] : memref<9x4x4xf32, #tpu.memory_space<vmem>>, vector<1x4x4xf32>
    %211 = vector.shape_cast %210 : vector<1x4x4xf32> to vector<4x4xf32>
    %cst_121 = arith.constant dense<0.000000e+00> : vector<4x256xf32>
    %212 = tpu.matmul %211, %209, %cst_121 {dimension_numbers = #tpu.dot_dimension_numbers<[1], [0], [0], [1], [0, 0, 1, 1], [], []>} : vector<4x4xf32>, vector<4x256xf32>, vector<4x256xf32> -> vector<4x256xf32>
    %213 = vector.broadcast %24 : vector<1x256xf32> to vector<4x256xf32>
    %214 = arith.mulf %212, %213 : vector<4x256xf32>
    %215 = arith.addf %206, %214 : vector<4x256xf32>
    %216 = vector.extract_strided_slice %164 {offsets = [0, 15], sizes = [4, 241], strides = [1, 1]} : vector<4x256xf32> to vector<4x241xf32>
    %cst_122 = arith.constant 0.000000e+00 : f32
    %217 = vector.broadcast %cst_122 : f32 to vector<4x15xf32>
    %218 = tpu.concatenate %216, %217 in 1 : vector<4x241xf32>, vector<4x15xf32> -> vector<4x256xf32>
    %c6_123 = arith.constant 6 : index
    %c0_124 = arith.constant 0 : index
    %c0_125 = arith.constant 0 : index
    %219 = vector.load %arg6[%c6_123, %c0_124, %c0_125] : memref<9x4x4xf32, #tpu.memory_space<vmem>>, vector<1x4x4xf32>
    %220 = vector.shape_cast %219 : vector<1x4x4xf32> to vector<4x4xf32>
    %cst_126 = arith.constant dense<0.000000e+00> : vector<4x256xf32>
    %221 = tpu.matmul %220, %218, %cst_126 {dimension_numbers = #tpu.dot_dimension_numbers<[1], [0], [0], [1], [0, 0, 1, 1], [], []>} : vector<4x4xf32>, vector<4x256xf32>, vector<4x256xf32> -> vector<4x256xf32>
    %222 = vector.broadcast %20 : vector<1x256xf32> to vector<4x256xf32>
    %223 = arith.mulf %221, %222 : vector<4x256xf32>
    %224 = arith.addf %215, %223 : vector<4x256xf32>
    %225 = vector.extract_strided_slice %164 {offsets = [0, 16], sizes = [4, 240], strides = [1, 1]} : vector<4x256xf32> to vector<4x240xf32>
    %cst_127 = arith.constant 0.000000e+00 : f32
    %226 = vector.broadcast %cst_127 : f32 to vector<4x16xf32>
    %227 = tpu.concatenate %225, %226 in 1 : vector<4x240xf32>, vector<4x16xf32> -> vector<4x256xf32>
    %c7_128 = arith.constant 7 : index
    %c0_129 = arith.constant 0 : index
    %c0_130 = arith.constant 0 : index
    %228 = vector.load %arg6[%c7_128, %c0_129, %c0_130] : memref<9x4x4xf32, #tpu.memory_space<vmem>>, vector<1x4x4xf32>
    %229 = vector.shape_cast %228 : vector<1x4x4xf32> to vector<4x4xf32>
    %cst_131 = arith.constant dense<0.000000e+00> : vector<4x256xf32>
    %230 = tpu.matmul %229, %227, %cst_131 {dimension_numbers = #tpu.dot_dimension_numbers<[1], [0], [0], [1], [0, 0, 1, 1], [], []>} : vector<4x4xf32>, vector<4x256xf32>, vector<4x256xf32> -> vector<4x256xf32>
    %231 = arith.addf %224, %230 : vector<4x256xf32>
    %232 = vector.extract_strided_slice %164 {offsets = [0, 17], sizes = [4, 239], strides = [1, 1]} : vector<4x256xf32> to vector<4x239xf32>
    %cst_132 = arith.constant 0.000000e+00 : f32
    %233 = vector.broadcast %cst_132 : f32 to vector<4x17xf32>
    %234 = tpu.concatenate %232, %233 in 1 : vector<4x239xf32>, vector<4x17xf32> -> vector<4x256xf32>
    %c8_133 = arith.constant 8 : index
    %c0_134 = arith.constant 0 : index
    %c0_135 = arith.constant 0 : index
    %235 = vector.load %arg6[%c8_133, %c0_134, %c0_135] : memref<9x4x4xf32, #tpu.memory_space<vmem>>, vector<1x4x4xf32>
    %236 = vector.shape_cast %235 : vector<1x4x4xf32> to vector<4x4xf32>
    %cst_136 = arith.constant dense<0.000000e+00> : vector<4x256xf32>
    %237 = tpu.matmul %236, %234, %cst_136 {dimension_numbers = #tpu.dot_dimension_numbers<[1], [0], [0], [1], [0, 0, 1, 1], [], []>} : vector<4x4xf32>, vector<4x256xf32>, vector<4x256xf32> -> vector<4x256xf32>
    %238 = vector.broadcast %24 : vector<1x256xf32> to vector<4x256xf32>
    %239 = arith.mulf %237, %238 : vector<4x256xf32>
    %240 = arith.addf %231, %239 : vector<4x256xf32>
    %cst_137 = arith.constant 0.000000e+00 : f32
    %241 = vector.broadcast %cst_137 : f32 to vector<4x256xf32>
    %242 = arith.maximumf %240, %241 : vector<4x256xf32>
    %c0_138 = arith.constant 0 : index
    %c0_139 = arith.constant 0 : index
    %c0_140 = arith.constant 0 : index
    %243 = vector.load %arg8[%c0_138, %c0_139, %c0_140] : memref<1x4x256xf32, #tpu.memory_space<vmem>>, vector<1x4x256xf32>
    %244 = vector.shape_cast %243 : vector<1x4x256xf32> to vector<4x256xf32>
    %245 = vector.shape_cast %242 : vector<4x256xf32> to vector<1x4x256xf32>
    tpu.vector_store %arg8[%c0_138, %c0_139, %c0_140], %245 {strides = array<i32>} : memref<1x4x256xf32, #tpu.memory_space<vmem>>, vector<1x4x256xf32>,
    return
  }
  func.func @transform_0(%arg0: i32) -> (i32, i32) {
    %c0_i32 = arith.constant 0 : i32
    %c0_i32_0 = arith.constant 0 : i32
    return %c0_i32, %arg0 : i32, i32
  }
  func.func @transform_1(%arg0: i32) -> (i32, i32) {
    %c0_i32 = arith.constant 0 : i32
    %c0_i32_0 = arith.constant 0 : i32
    return %c0_i32, %arg0 : i32, i32
  }
  func.func @transform_2(%arg0: i32) -> (i32, i32, i32) {
    %c0_i32 = arith.constant 0 : i32
    %c0_i32_0 = arith.constant 0 : i32
    %c0_i32_1 = arith.constant 0 : i32
    %c0_i32_2 = arith.constant 0 : i32
    return %c0_i32, %c0_i32_0, %c0_i32_1 : i32, i32, i32
  }
  func.func @transform_3(%arg0: i32) -> (i32, i32, i32) {
    %c0_i32 = arith.constant 0 : i32
    %c0_i32_0 = arith.constant 0 : i32
    %c0_i32_1 = arith.constant 0 : i32
    %c0_i32_2 = arith.constant 0 : i32
    return %c0_i32, %c0_i32_0, %c0_i32_1 : i32, i32, i32
  }
  func.func @transform_4(%arg0: i32) -> (i32, i32) {
    %c0_i32 = arith.constant 0 : i32
    %c0_i32_0 = arith.constant 0 : i32
    %c0_i32_1 = arith.constant 0 : i32
    return %c0_i32, %c0_i32_0 : i32, i32
  }
  func.func @transform_5(%arg0: i32) -> (i32, i32, i32) {
    %c0_i32 = arith.constant 0 : i32
    %c0_i32_0 = arith.constant 0 : i32
    %c0_i32_1 = arith.constant 0 : i32
    %c0_i32_2 = arith.constant 0 : i32
    return %c0_i32, %c0_i32_0, %c0_i32_1 : i32, i32, i32
  }
  func.func @transform_6(%arg0: i32) -> (i32, i32) {
    %c0_i32 = arith.constant 0 : i32
    %c0_i32_0 = arith.constant 0 : i32
    %c0_i32_1 = arith.constant 0 : i32
    return %c0_i32, %c0_i32_0 : i32, i32
  }
  func.func @transform_7(%arg0: i32) -> (i32, i32, i32) {
    %c0_i32 = arith.constant 0 : i32
    %c0_i32_0 = arith.constant 0 : i32
    %c0_i32_1 = arith.constant 0 : i32
    return %arg0, %c0_i32, %c0_i32_0 : i32, i32, i32
  }
}

</mosaic_0001>

<llo_original>
// kernel: up_forward.1
$region0: #{up_forward.1}
  #allocation0 [shape = 'u32[]', space=smem, size = 0x4, offset = 0x4, fixed_abs, tag = 'smem constant byte address 0x4 - core index']
  #allocation1 [shape = 'u32[144,128]{1,0:T(1,128)}', space=vmem, size = 0x12000, scoped, tag = 'internal scratch']
  %s0 = inlined_call_operand.vmem [shape: f32[4,512], index: 0, kind: input, shape index: {}]
  %s1 = inlined_call_operand.vmem [shape: f32[4,512], index: 1, kind: input, shape index: {}]
  %s2 = inlined_call_operand.vmem [shape: f32[9,4,4], index: 2, kind: input, shape index: {}]
  %s3 = inlined_call_operand.vmem [shape: f32[9,4,4], index: 3, kind: input, shape index: {}]
  %s4 = inlined_call_operand.vmem [shape: f32[4,1], index: 4, kind: input, shape index: {}]
  %s5 = inlined_call_operand.vmem [shape: f32[9,4,4], index: 5, kind: input, shape index: {}]
  %s6 = inlined_call_operand.vmem [shape: f32[4,1], index: 6, kind: input, shape index: {}]
  %s7 = inlined_call_operand.vmem [shape: f32[2,4,256], index: 7, kind: output, shape index: {}]
  %s8 = sld [smem:[#allocation0]]
  $region61: #{up_forward.1} parent=0
    _
  %s10 = ssub.s32 1, %s8
  %s11 = scalar_select 0, %s10, %s8
  loop: start=0, step=1, limit=4
  $region2: #{up_forward.1} parent=0 // loop_pre_header
    _
  $region3: #{up_forward.1} parent=0 // loop_header
    %s13 = sphi 0, %s17
    %p14 = scmp.ge.s32.totalorder %s13, 4
    %s23 = sphi 0, %s25
    %s26 = sphi 0, %s23
    %s27 = sphi 0, %s26
    %s43 = sphi 0, %s27
    %s49 = sphi 0, %s51
    %s52 = sphi 0, %s49
    %s53 = sphi 0, %s52
    %s69 = sphi 0, %s53
    %s73 = sphi 0, %s73
    %s75 = sphi 0, %s73
    %s76 = sphi 0, %s75
    %s90 = sphi 0, %s76
    %s94 = sphi 0, %s94
    %s96 = sphi 0, %s94
    %s97 = sphi 0, %s96
    %s111 = sphi 0, %s97
    %s115 = sphi 0, %s115
    %s117 = sphi 0, %s115
    %s118 = sphi 0, %s117
    %s132 = sphi 0, %s118
    %s136 = sphi 0, %s136
    %s138 = sphi 0, %s136
    %s139 = sphi 0, %s138
    %s153 = sphi 0, %s139
    %s157 = sphi 0, %s157
    %s159 = sphi 0, %s157
    %s160 = sphi 0, %s159
    %s174 = sphi 0, %s160
    %s180 = sphi 0, %s182
    %s183 = sphi 0, %s180
    %s184 = sphi 0, %s183
    %s200 = sphi 0, %s184
  $region4: #{up_forward.1} parent=0 // loop_header_branch
    %16 = sbr.rel (%p14) target = $region8
  $region5: #{up_forward.1} parent=0 // loop_body
    %s18 = ssub.s32 %s13, 1
    %s19 = ssub.s32 %s13, 2
    %s20 = sadd.s32 %s13, 1
    %s21 = ssub.s32 %s13, %s20
    %p22 = scmp.eq.s32.totalorder %s21, 0
    %s24 = sadd.s32 %s23, 1
    %s25 = scalar_select %p22, %s23, %s24
    %p28 = pneg %p22
    %p29 = scmp.eq.s32.totalorder %s13, 1
    %p30 = por %p28, %p29
    %p31 = scmp.ne.s32.totalorder %s23, %s26
    %p32 = scmp.eq.s32.totalorder %s13, 0
    %p33 = por %p31, %p32
    %p34 = scmp.ne.s32.totalorder %s23, %s26
    %p35 = scmp.eq.s32.totalorder %s18, 1
    %p36 = por %p34, %p35
    %p37 = scmp.ne.s32.totalorder %s26, %s27
    %p38 = scmp.eq.s32.totalorder %s18, 0
    %p39 = por %p37, %p38
    %p40 = scmp.ne.s32.totalorder %s26, %s27
    %p41 = scmp.eq.s32.totalorder %s19, 1
    %p42 = por %p40, %p41
    %p44 = scmp.ne.s32.totalorder %s27, %s43
    %p45 = scmp.eq.s32.totalorder %s19, 0
    %p46 = por %p44, %p45
    %s47 = ssub.s32 %s13, %s20
    %p48 = scmp.eq.s32.totalorder %s47, 0
    %s50 = sadd.s32 %s49, 1
    %s51 = scalar_select %p48, %s49, %s50
    %p54 = pneg %p48
    %p55 = scmp.eq.s32.totalorder %s13, 1
    %p56 = por %p54, %p55
    %p57 = scmp.ne.s32.totalorder %s49, %s52
    %p58 = scmp.eq.s32.totalorder %s13, 0
    %p59 = por %p57, %p58
    %p60 = scmp.ne.s32.totalorder %s49, %s52
    %p61 = scmp.eq.s32.totalorder %s18, 1
    %p62 = por %p60, %p61
    %p63 = scmp.ne.s32.totalorder %s52, %s53
    %p64 = scmp.eq.s32.totalorder %s18, 0
    %p65 = por %p63, %p64
    %p66 = scmp.ne.s32.totalorder %s52, %s53
    %p67 = scmp.eq.s32.totalorder %s19, 1
    %p68 = por %p66, %p67
    %p70 = scmp.ne.s32.totalorder %s53, %s69
    %p71 = scmp.eq.s32.totalorder %s19, 0
    %p72 = por %p70, %p71
    %s74 = sadd.s32 %s73, 1
    %p77 = scmp.eq.s32.totalorder %s13, 1
    %p78 = scmp.ne.s32.totalorder %s73, %s75
    %p79 = scmp.eq.s32.totalorder %s13, 0
    %p80 = por %p78, %p79
    %p81 = scmp.ne.s32.totalorder %s73, %s75
    %p82 = scmp.eq.s32.totalorder %s18, 1
    %p83 = por %p81, %p82
    %p84 = scmp.ne.s32.totalorder %s75, %s76
    %p85 = scmp.eq.s32.totalorder %s18, 0
    %p86 = por %p84, %p85
    %p87 = scmp.ne.s32.totalorder %s75, %s76
    %p88 = scmp.eq.s32.totalorder %s19, 1
    %p89 = por %p87, %p88
    %p91 = scmp.ne.s32.totalorder %s76, %s90
    %p92 = scmp.eq.s32.totalorder %s19, 0
    %p93 = por %p91, %p92
    %s95 = sadd.s32 %s94, 1
    %p98 = scmp.eq.s32.totalorder %s13, 1
    %p99 = scmp.ne.s32.totalorder %s94, %s96
    %p100 = scmp.eq.s32.totalorder %s13, 0
    %p101 = por %p99, %p100
    %p102 = scmp.ne.s32.totalorder %s94, %s96
    %p103 = scmp.eq.s32.totalorder %s18, 1
    %p104 = por %p102, %p103
    %p105 = scmp.ne.s32.totalorder %s96, %s97
    %p106 = scmp.eq.s32.totalorder %s18, 0
    %p107 = por %p105, %p106
    %p108 = scmp.ne.s32.totalorder %s96, %s97
    %p109 = scmp.eq.s32.totalorder %s19, 1
    %p110 = por %p108, %p109
    %p112 = scmp.ne.s32.totalorder %s97, %s111
    %p113 = scmp.eq.s32.totalorder %s19, 0
    %p114 = por %p112, %p113
    %s116 = sadd.s32 %s115, 1
    %p119 = scmp.eq.s32.totalorder %s13, 1
    %p120 = scmp.ne.s32.totalorder %s115, %s117
    %p121 = scmp.eq.s32.totalorder %s13, 0
    %p122 = por %p120, %p121
    %p123 = scmp.ne.s32.totalorder %s115, %s117
    %p124 = scmp.eq.s32.totalorder %s18, 1
    %p125 = por %p123, %p124
    %p126 = scmp.ne.s32.totalorder %s117, %s118
    %p127 = scmp.eq.s32.totalorder %s18, 0
    %p128 = por %p126, %p127
    %p129 = scmp.ne.s32.totalorder %s117, %s118
    %p130 = scmp.eq.s32.totalorder %s19, 1
    %p131 = por %p129, %p130
    %p133 = scmp.ne.s32.totalorder %s118, %s132
    %p134 = scmp.eq.s32.totalorder %s19, 0
    %p135 = por %p133, %p134
    %s137 = sadd.s32 %s136, 1
    %p140 = scmp.eq.s32.totalorder %s13, 1
    %p141 = scmp.ne.s32.totalorder %s136, %s138
    %p142 = scmp.eq.s32.totalorder %s13, 0
    %p143 = por %p141, %p142
    %p144 = scmp.ne.s32.totalorder %s136, %s138
    %p145 = scmp.eq.s32.totalorder %s18, 1
    %p146 = por %p144, %p145
    %p147 = scmp.ne.s32.totalorder %s138, %s139
    %p148 = scmp.eq.s32.totalorder %s18, 0
    %p149 = por %p147, %p148
    %p150 = scmp.ne.s32.totalorder %s138, %s139
    %p151 = scmp.eq.s32.totalorder %s19, 1
    %p152 = por %p150, %p151
    %p154 = scmp.ne.s32.totalorder %s139, %s153
    %p155 = scmp.eq.s32.totalorder %s19, 0
    %p156 = por %p154, %p155
    %s158 = sadd.s32 %s157, 1
    %p161 = scmp.eq.s32.totalorder %s13, 1
    %p162 = scmp.ne.s32.totalorder %s157, %s159
    %p163 = scmp.eq.s32.totalorder %s13, 0
    %p164 = por %p162, %p163
    %p165 = scmp.ne.s32.totalorder %s157, %s159
    %p166 = scmp.eq.s32.totalorder %s18, 1
    %p167 = por %p165, %p166
    %p168 = scmp.ne.s32.totalorder %s159, %s160
    %p169 = scmp.eq.s32.totalorder %s18, 0
    %p170 = por %p168, %p169
    %p171 = scmp.ne.s32.totalorder %s159, %s160
    %p172 = scmp.eq.s32.totalorder %s19, 1
    %p173 = por %p171, %p172
    %p175 = scmp.ne.s32.totalorder %s160, %s174
    %p176 = scmp.eq.s32.totalorder %s19, 0
    %p177 = por %p175, %p176
    %s178 = ssub.s32 %s13, %s20
    %p179 = scmp.eq.s32.totalorder %s178, 0
    %s181 = sadd.s32 %s180, 1
    %s182 = scalar_select %p179, %s180, %s181
    %p185 = pneg %p179
    %p186 = scmp.eq.s32.totalorder %s13, 1
    %p187 = por %p185, %p186
    %p188 = scmp.ne.s32.totalorder %s180, %s183
    %p189 = scmp.eq.s32.totalorder %s13, 0
    %p190 = por %p188, %p189
    %p191 = scmp.ne.s32.totalorder %s180, %s183
    %p192 = scmp.eq.s32.totalorder %s18, 1
    %p193 = por %p191, %p192
    %p194 = scmp.ne.s32.totalorder %s183, %s184
    %p195 = scmp.eq.s32.totalorder %s18, 0
    %p196 = por %p194, %p195
    %p197 = scmp.ne.s32.totalorder %s183, %s184
    %p198 = scmp.eq.s32.totalorder %s19, 1
    %p199 = por %p197, %p198
    %p201 = scmp.ne.s32.totalorder %s184, %s200
    %p202 = scmp.eq.s32.totalorder %s19, 0
    %p203 = por %p201, %p202
    %p204 = scmp.le.s32.totalorder 1, %s13
    %p205 = scmp.lt.s32.totalorder %s13, 3
    %p206 = pnand %p204, %p205
    %p207 = pneg %p206
    // Predicated region
    $region9: #{up_forward.1} parent=5 // pred_check
      _
    $region10: #{up_forward.1} parent=5 // pred_check_branch
      %209 = sbr.rel (%p206) target = $region12
    $region11: #{up_forward.1} parent=5 // pred_region
      %s210 = ssub.s32 %s13, 1
      // Predicated region
      $region13: #{up_forward.1} parent=11 // pred_check
        %p211 = pneg %p86
      $region14: #{up_forward.1} parent=11 // pred_check_branch
        %213 = sbr.rel (%p211) target = $region16
      $region15: #{up_forward.1} parent=11 // pred_region
        _
      $region16: #{up_forward.1} parent=11 // pred_fallthru
        _
      // Predicated region
      $region17: #{up_forward.1} parent=11 // pred_check
        %p214 = pneg %p107
      $region18: #{up_forward.1} parent=11 // pred_check_branch
        %216 = sbr.rel (%p214) target = $region20
      $region19: #{up_forward.1} parent=11 // pred_region
        _
      $region20: #{up_forward.1} parent=11 // pred_fallthru
        _
      // Predicated region
      $region21: #{up_forward.1} parent=11 // pred_check
        %p217 = pneg %p128
      $region22: #{up_forward.1} parent=11 // pred_check_branch
        %219 = sbr.rel (%p217) target = $region24
      $region23: #{up_forward.1} parent=11 // pred_region
        _
      $region24: #{up_forward.1} parent=11 // pred_fallthru
        _
      // Predicated region
      $region25: #{up_forward.1} parent=11 // pred_check
        %p220 = pneg %p149
      $region26: #{up_forward.1} parent=11 // pred_check_branch
        %222 = sbr.rel (%p220) target = $region28
      $region27: #{up_forward.1} parent=11 // pred_region
        _
      $region28: #{up_forward.1} parent=11 // pred_fallthru
        _
      // Predicated region
      $region29: #{up_forward.1} parent=11 // pred_check
        %p223 = pneg %p170
      $region30: #{up_forward.1} parent=11 // pred_check_branch
        %225 = sbr.rel (%p223) target = $region32
      $region31: #{up_forward.1} parent=11 // pred_region
        _
      $region32: #{up_forward.1} parent=11 // pred_fallthru
        _
    $region12: #{up_forward.1} parent=5 // pred_fallthru
      _
    %p226 = scmp.lt.s32.totalorder %s13, 2
    // Predicated region
    $region33: #{up_forward.1} parent=5 // pred_check
      %p227 = pneg %p226
    $region34: #{up_forward.1} parent=5 // pred_check_branch
      %229 = sbr.rel (%p227) target = $region36
    $region35: #{up_forward.1} parent=5 // pred_region
      // Predicated region
      $region37: #{up_forward.1} parent=35 // pred_check
        %p230 = pneg %p33
      $region38: #{up_forward.1} parent=35 // pred_check_branch
        %232 = sbr.rel (%p230) target = $region40
      $region39: #{up_forward.1} parent=35 // pred_region
        %s233 = smul.u32 2, %s13
        %p234 = scmp.lt.s32.totalorder %s233, 3
        %s235 = scalar_select %p234, %s233, 3
        %s236 = smul.addr %s235, 4
        %s237 = scalar_lea.vmem %s0, %s236
        %s238 = smul.u32 2, %s13
      $region40: #{up_forward.1} parent=35 // pred_fallthru
        _
      // Predicated region
      $region41: #{up_forward.1} parent=35 // pred_check
        %p239 = pneg %p59
      $region42: #{up_forward.1} parent=35 // pred_check_branch
        %241 = sbr.rel (%p239) target = $region44
      $region43: #{up_forward.1} parent=35 // pred_region
        %s242 = smul.u32 2, %s13
        %p243 = scmp.lt.s32.totalorder %s242, 3
        %s244 = scalar_select %p243, %s242, 3
        %s245 = smul.addr %s244, 4
        %s246 = scalar_lea.vmem %s1, %s245
        %s247 = smul.u32 2, %s13
      $region44: #{up_forward.1} parent=35 // pred_fallthru
        _
    $region36: #{up_forward.1} parent=5 // pred_fallthru
      _
    %p248 = scmp.le.s32.totalorder 1, %s13
    %p249 = scmp.lt.s32.totalorder %s13, 3
    %p250 = pnand %p248, %p249
    %p251 = pneg %p250
    // Predicated region
    $region45: #{up_forward.1} parent=5 // pred_check
      _
    $region46: #{up_forward.1} parent=5 // pred_check_branch
      %253 = sbr.rel (%p250) target = $region48
    $region47: #{up_forward.1} parent=5 // pred_region
      %s254 = ssub.s32 %s13, 1
      %s255 = smul.u32 2, %s18
      %p256 = scmp.lt.s32.totalorder %s255, 3
      %s257 = scalar_select %p256, %s255, 3
      %s258 = smul.addr %s257, 4
      %s259 = scalar_lea.vmem %s0, %s258
      %p260 = pneg %p39
      %p261 = pneg %p36
      %s262 = smul.u32 2, %s18
      %p263 = scmp.lt.s32.totalorder %s262, 3
      %s264 = scalar_select %p263, %s262, 3
      %s265 = smul.addr %s264, 4
      %s266 = scalar_lea.vmem %s1, %s265
      %p267 = pneg %p65
      %p268 = pneg %p62
      %p269 = pneg %p86
      %p270 = pneg %p83
      %p271 = pneg %p107
      %p272 = pneg %p104
      %p273 = pneg %p128
      %p274 = pneg %p125
      %p275 = pneg %p149
      %p276 = pneg %p146
      %p277 = pneg %p170
      %p278 = pneg %p167
      %p279 = pneg %p196
      %p280 = pneg %p193
      %p281 = scmp.lt.s32.totalorder %s18, 1
      %s282 = scalar_select %p281, %s18, 1
      %s283 = smul.addr %s282, 2
      %s284 = smul.addr %s283, 4
      %s285 = scalar_lea.vmem %s7, %s284
      %s286 = smul.u32 2, %s18
      %p287 = scmp.lt.s32.totalorder %s286, 3
      %s288 = scalar_select %p287, %s286, 3
      %s289 = smul.addr %s288, 4
      %s290 = scalar_lea.vmem %s0, %s289
      %s291 = smul.u32 2, %s18
      %s292 = smul.u32 2, %s18
      %p293 = scmp.lt.s32.totalorder %s292, 3
      %s294 = scalar_select %p293, %s292, 3
      %s295 = smul.addr %s294, 4
      %s296 = scalar_lea.vmem %s1, %s295
      %s297 = smul.u32 2, %s18
      %p298 = scmp.lt.s32.totalorder %s18, 1
      %s299 = scalar_select %p298, %s18, 1
      %s300 = smul.addr %s299, 2
      %s301 = smul.addr %s300, 4
      %s302 = scalar_lea.vmem %s7, %s301
      %v303 = vlaneseq
      %v304 = vand.u32 %v303, 127
      %v305 = vadd.s32 %v304, 128
      %vm306 = vcmp.lt.s32.totalorder %v304, 0
      %v307 = vsub.s32 0, %v304
      %v308 = vsel %vm306, %v307, %v304
      %v309 = vshrl.u32 %v308, 4
      %v310 = vand.u32 %v308, 15
      %v311 = vsub.s32 0, %v310
      %v312 = vsel %vm306, %v311, %v310
      %vm313 = vcmp.lt.s32.totalorder %v305, 0
      %v314 = vsub.s32 0, %v305
      %v315 = vsel %vm313, %v314, %v305
      %v316 = vshrl.u32 %v315, 4
      %v317 = vand.u32 %v315, 15
      %v318 = vsub.s32 0, %v317
      %v319 = vsel %vm313, %v318, %v317
      %vm320 = vcmp.ne.s32.totalorder %v312, 0
      %vm321 = vcmp.ne.s32.totalorder %v319, 0
      %vm322 = vcmp.lt.s32.totalorder %v312, 0
      %vm323 = vcmp.lt.s32.totalorder %v319, 0
      %vm324 = vmand %vm322, %vm320
      %vm325 = vmand %vm323, %vm321
      %v326 = vadd.s32 %v312, 16
      %v327 = vadd.s32 %v319, 16
      %v328 = vsel %vm324, %v326, %v312
      %v329 = vsel %vm325, %v327, %v319
      %vm330 = vcmp.ge.s32.totalorder %v328, 1
      %vm331 = vcmp.ge.s32.totalorder %v329, 1
      %v332 = vsel %vm330, 1, 0
      %v333 = vsel %vm331, 1, 0
      %v334 = vcvt.s32.f32 %v332
      %v335 = vcvt.s32.f32 %v333
      %vm336 = vcmp.le.s32.totalorder %v328, 14
      %vm337 = vcmp.le.s32.totalorder %v329, 14
      %v338 = vsel %vm336, 1, 0
      %v339 = vsel %vm337, 1, 0
      %v340 = vcvt.s32.f32 %v338
      %v341 = vcvt.s32.f32 %v339
      %v342 = vld [vmem:[%s290] sm:$0xff]
      %v343 = vld [vmem:[%s296] sm:$0xff]
      %v344 = vld [vmem:[%s4] sm:$0xf]
      %346 = vset.pattern.permute.xlu0 0
      %347 = vperm.xlu0 %346, %v344
      %v348 = vpop.permute.xlu0 %347
      %v350 = vadd.f32 %v348, 0.0
      %v352 = vcombine.high %v342, %v342
      %353 = vrot.lane.b32.xlu0 %v342, 17
      %v354 = vpop.permute.xlu0 %353
      %355 = vrot.lane.b32.xlu0 %v352, 17
      %v356 = vpop.permute.xlu0 %355
      %vm357 = vcmask 138240
      %v358 = vsel %vm357, %v354, %v356
      %v360 = vsel %vm357, 0.0, %v354
      %v361 = vld [vmem:[%s2] sm:$0xf]
      %v363 = vcombine.high %v343, %v343
      %364 = vrot.lane.b32.xlu0 %v343, 17
      %v365 = vpop.permute.xlu0 %364
      %366 = vrot.lane.b32.xlu0 %v363, 17
      %v367 = vpop.permute.xlu0 %366
      %v368 = vsel %vm357, %v365, %v367
      %v370 = vsel %vm357, 0.0, %v365
      %v371 = vld [vmem:[%s3] sm:$0xf]
      %vm372 = vcmask 31744
      %v374 = vsel %vm372, %v371, 0
      %vm376 = vcmask 1043456
      %v378 = vsel %vm376, %v370, 0
      %v380 = vsel %vm376, %v368, 0
      %382 = vmatprep.subr.mxu0 %v380
      %383 = vmatpush1.msra.mxu0 %v378
      %384 = vmatprep.subr.mxu0 0.0
      %385 = vmatpush1.msra.mxu0 0.0
      %386 = vmatprep.subr.mxu0 0.0
      %387 = vmatpush1.msra.mxu0 0.0
      %388 = vmatprep.subr.mxu0 0.0
      %389 = vmatpush1.msra.mxu0 0.0
      %390 = vmatprep.subr.mxu0 0.0
      %391 = vmatpush1.msra.mxu0 0.0
      %392 = vmatprep.subr.mxu0 0.0
      %393 = vmatpush1.msra.mxu0 0.0
      %394 = vmatprep.subr.mxu0 0.0
      %395 = vmatpush1.msra.mxu0 0.0
      %396 = vmatprep.subr.mxu0 0.0
      %397 = vmatpush1.msra.mxu0 0.0
      %398 = vmatprep.subr.mxu0 0.0
      %399 = vmatpush1.msra.mxu0 0.0
      %400 = vmatprep.subr.mxu0 0.0
      %401 = vmatpush1.msra.mxu0 0.0
      %402 = vmatprep.subr.mxu0 0.0
      %403 = vmatpush1.msra.mxu0 0.0
      %404 = vmatprep.subr.mxu0 0.0
      %405 = vmatpush1.msra.mxu0 0.0
      %406 = vmatprep.subr.mxu0 0.0
      %407 = vmatpush1.msra.mxu0 0.0
      %408 = vmatprep.subr.mxu0 0.0
      %409 = vmatpush1.msra.mxu0 0.0
      %410 = vmatprep.subr.mxu0 0.0
      %411 = vmatpush1.msra.mxu0 0.0
      %412 = vmatprep.subr.mxu0 0.0
      %413 = vmatpush1.msra.mxu0 0.0
      %414 = vmatprep.subr.mxu0 0.0
      %415 = vmatpush1.msra.mxu0 0.0
      %416 = vmatprep.subr.mxu0 0.0
      %417 = vmatpush1.msra.mxu0 0.0
      %418 = vmatprep.subr.mxu0 0.0
      %419 = vmatpush1.msra.mxu0 0.0
      %420 = vmatprep.subr.mxu0 0.0
      %421 = vmatpush1.msra.mxu0 0.0
      %422 = vmatprep.subr.mxu0 0.0
      %423 = vmatpush1.msra.mxu0 0.0
      %424 = vmatprep.subr.mxu0 0.0
      %425 = vmatpush1.msra.mxu0 0.0
      %426 = vmatprep.subr.mxu0 0.0
      %427 = vmatpush1.msra.mxu0 0.0
      %428 = vmatprep.subr.mxu0 0.0
      %429 = vmatpush1.msra.mxu0 0.0
      %430 = vmatprep.subr.mxu0 0.0
      %431 = vmatpush1.msra.mxu0 0.0
      %432 = vmatprep.subr.mxu0 0.0
      %433 = vmatpush1.msra.mxu0 0.0
      %434 = vmatprep.subr.mxu0 0.0
      %435 = vmatpush1.msra.mxu0 0.0
      %436 = vmatprep.subr.mxu0 0.0
      %437 = vmatpush1.msra.mxu0 0.0
      %438 = vmatprep.subr.mxu0 0.0
      %439 = vmatpush1.msra.mxu0 0.0
      %440 = vmatprep.subr.mxu0 0.0
      %441 = vmatpush1.msra.mxu0 0.0
      %442 = vmatprep.subr.mxu0 0.0
      %443 = vmatpush1.msra.mxu0 0.0
      %444 = vmatprep.subr.mxu0 0.0
      %445 = vmatpush1.msra.mxu0 0.0
      %446 = vmatprep.mubr.f32.mxu0 0.0
      %447 = vmatmul.mubr.f32.gmra.mrb[0].mxu0 %v374
      %v448 = vpop.f32.mrb[0].mxu0
      %v449 = vadd.f32 0.0, %v448
      %v450 = vpop.f32.mrb[0].mxu0
      %v451 = vadd.f32 0.0, %v450
      %452 = vdwg.mxu0
      %v454 = vsel %vm372, %v361, 0
      %v457 = vsel %vm376, %v360, 0
      %v459 = vsel %vm376, %v358, 0
      %461 = vmatprep.subr.mxu0 %v459
      %462 = vmatpush1.msra.mxu0 %v457
      %463 = vmatprep.subr.mxu0 0.0
      %464 = vmatpush1.msra.mxu0 0.0
      %465 = vmatprep.subr.mxu0 0.0
      %466 = vmatpush1.msra.mxu0 0.0
      %467 = vmatprep.subr.mxu0 0.0
      %468 = vmatpush1.msra.mxu0 0.0
      %469 = vmatprep.subr.mxu0 0.0
      %470 = vmatpush1.msra.mxu0 0.0
      %471 = vmatprep.subr.mxu0 0.0
      %472 = vmatpush1.msra.mxu0 0.0
      %473 = vmatprep.subr.mxu0 0.0
      %474 = vmatpush1.msra.mxu0 0.0
      %475 = vmatprep.subr.mxu0 0.0
      %476 = vmatpush1.msra.mxu0 0.0
      %477 = vmatprep.subr.mxu0 0.0
      %478 = vmatpush1.msra.mxu0 0.0
      %479 = vmatprep.subr.mxu0 0.0
      %480 = vmatpush1.msra.mxu0 0.0
      %481 = vmatprep.subr.mxu0 0.0
      %482 = vmatpush1.msra.mxu0 0.0
      %483 = vmatprep.subr.mxu0 0.0
      %484 = vmatpush1.msra.mxu0 0.0
      %485 = vmatprep.subr.mxu0 0.0
      %486 = vmatpush1.msra.mxu0 0.0
      %487 = vmatprep.subr.mxu0 0.0
      %488 = vmatpush1.msra.mxu0 0.0
      %489 = vmatprep.subr.mxu0 0.0
      %490 = vmatpush1.msra.mxu0 0.0
      %491 = vmatprep.subr.mxu0 0.0
      %492 = vmatpush1.msra.mxu0 0.0
      %493 = vmatprep.subr.mxu0 0.0
      %494 = vmatpush1.msra.mxu0 0.0
      %495 = vmatprep.subr.mxu0 0.0
      %496 = vmatpush1.msra.mxu0 0.0
      %497 = vmatprep.subr.mxu0 0.0
      %498 = vmatpush1.msra.mxu0 0.0
      %499 = vmatprep.subr.mxu0 0.0
      %500 = vmatpush1.msra.mxu0 0.0
      %501 = vmatprep.subr.mxu0 0.0
      %502 = vmatpush1.msra.mxu0 0.0
      %503 = vmatprep.subr.mxu0 0.0
      %504 = vmatpush1.msra.mxu0 0.0
      %505 = vmatprep.subr.mxu0 0.0
      %506 = vmatpush1.msra.mxu0 0.0
      %507 = vmatprep.subr.mxu0 0.0
      %508 = vmatpush1.msra.mxu0 0.0
      %509 = vmatprep.subr.mxu0 0.0
      %510 = vmatpush1.msra.mxu0 0.0
      %511 = vmatprep.subr.mxu0 0.0
      %512 = vmatpush1.msra.mxu0 0.0
      %513 = vmatprep.subr.mxu0 0.0
      %514 = vmatpush1.msra.mxu0 0.0
      %515 = vmatprep.subr.mxu0 0.0
      %516 = vmatpush1.msra.mxu0 0.0
      %517 = vmatprep.subr.mxu0 0.0
      %518 = vmatpush1.msra.mxu0 0.0
      %519 = vmatprep.subr.mxu0 0.0
      %520 = vmatpush1.msra.mxu0 0.0
      %521 = vmatprep.subr.mxu0 0.0
      %522 = vmatpush1.msra.mxu0 0.0
      %523 = vmatprep.subr.mxu0 0.0
      %524 = vmatpush1.msra.mxu0 0.0
      %525 = vmatprep.mubr.f32.mxu0 0.0
      %526 = vmatmul.mubr.f32.gmra.mrb[0].mxu0 %v454
      %v527 = vpop.f32.mrb[0].mxu0
      %v528 = vadd.f32 %v449, %v527
      %v529 = vpop.f32.mrb[0].mxu0
      %v530 = vadd.f32 %v451, %v529
      %531 = vdwg.mxu0
      %v532 = vmul.f32 %v528, %v334
      %v533 = vmul.f32 %v530, %v335
      %v534 = vadd.f32 %v350, %v532
      %v535 = vadd.f32 %v350, %v533
      %536 = vrot.lane.b32.xlu0 %v342, 16
      %v537 = vpop.permute.xlu0 %536
      %538 = vrot.lane.b32.xlu0 %v352, 16
      %v539 = vpop.permute.xlu0 %538
      %vm540 = vcmask 130048
      %v541 = vsel %vm540, %v537, %v539
      %v543 = vsel %vm540, 0.0, %v537
      %s544 = scalar_lea.vmem %s2, 4
      %v545 = vld [vmem:[%s544] sm:$0xf]
      %546 = vrot.lane.b32.xlu0 %v343, 16
      %v547 = vpop.permute.xlu0 %546
      %548 = vrot.lane.b32.xlu0 %v363, 16
      %v549 = vpop.permute.xlu0 %548
      %v550 = vsel %vm540, %v547, %v549
      %v552 = vsel %vm540, 0.0, %v547
      %s553 = scalar_lea.vmem %s3, 4
      %v554 = vld [vmem:[%s553] sm:$0xf]
      %v556 = vsel %vm372, %v554, 0
      %v559 = vsel %vm376, %v552, 0
      %v561 = vsel %vm376, %v550, 0
      %563 = vmatprep.subr.mxu0 %v561
      %564 = vmatpush1.msra.mxu0 %v559
      %565 = vmatprep.subr.mxu0 0.0
      %566 = vmatpush1.msra.mxu0 0.0
      %567 = vmatprep.subr.mxu0 0.0
      %568 = vmatpush1.msra.mxu0 0.0
      %569 = vmatprep.subr.mxu0 0.0
      %570 = vmatpush1.msra.mxu0 0.0
      %571 = vmatprep.subr.mxu0 0.0
      %572 = vmatpush1.msra.mxu0 0.0
      %573 = vmatprep.subr.mxu0 0.0
      %574 = vmatpush1.msra.mxu0 0.0
      %575 = vmatprep.subr.mxu0 0.0
      %576 = vmatpush1.msra.mxu0 0.0
      %577 = vmatprep.subr.mxu0 0.0
      %578 = vmatpush1.msra.mxu0 0.0
      %579 = vmatprep.subr.mxu0 0.0
      %580 = vmatpush1.msra.mxu0 0.0
      %581 = vmatprep.subr.mxu0 0.0
      %582 = vmatpush1.msra.mxu0 0.0
      %583 = vmatprep.subr.mxu0 0.0
      %584 = vmatpush1.msra.mxu0 0.0
      %585 = vmatprep.subr.mxu0 0.0
      %586 = vmatpush1.msra.mxu0 0.0
      %587 = vmatprep.subr.mxu0 0.0
      %588 = vmatpush1.msra.mxu0 0.0
      %589 = vmatprep.subr.mxu0 0.0
      %590 = vmatpush1.msra.mxu0 0.0
      %591 = vmatprep.subr.mxu0 0.0
      %592 = vmatpush1.msra.mxu0 0.0
      %593 = vmatprep.subr.mxu0 0.0
      %594 = vmatpush1.msra.mxu0 0.0
      %595 = vmatprep.subr.mxu0 0.0
      %596 = vmatpush1.msra.mxu0 0.0
      %597 = vmatprep.subr.mxu0 0.0
      %598 = vmatpush1.msra.mxu0 0.0
      %599 = vmatprep.subr.mxu0 0.0
      %600 = vmatpush1.msra.mxu0 0.0
      %601 = vmatprep.subr.mxu0 0.0
      %602 = vmatpush1.msra.mxu0 0.0
      %603 = vmatprep.subr.mxu0 0.0
      %604 = vmatpush1.msra.mxu0 0.0
      %605 = vmatprep.subr.mxu0 0.0
      %606 = vmatpush1.msra.mxu0 0.0
      %607 = vmatprep.subr.mxu0 0.0
      %608 = vmatpush1.msra.mxu0 0.0
      %609 = vmatprep.subr.mxu0 0.0
      %610 = vmatpush1.msra.mxu0 0.0
      %611 = vmatprep.subr.mxu0 0.0
      %612 = vmatpush1.msra.mxu0 0.0
      %613 = vmatprep.subr.mxu0 0.0
      %614 = vmatpush1.msra.mxu0 0.0
      %615 = vmatprep.subr.mxu0 0.0
      %616 = vmatpush1.msra.mxu0 0.0
      %617 = vmatprep.subr.mxu0 0.0
      %618 = vmatpush1.msra.mxu0 0.0
      %619 = vmatprep.subr.mxu0 0.0
      %620 = vmatpush1.msra.mxu0 0.0
      %621 = vmatprep.subr.mxu0 0.0
      %622 = vmatpush1.msra.mxu0 0.0
      %623 = vmatprep.subr.mxu0 0.0
      %624 = vmatpush1.msra.mxu0 0.0
      %625 = vmatprep.subr.mxu0 0.0
      %626 = vmatpush1.msra.mxu0 0.0
      %627 = vmatprep.mubr.f32.mxu0 0.0
      %628 = vmatmul.mubr.f32.gmra.mrb[0].mxu0 %v556
      %v629 = vpop.f32.mrb[0].mxu0
      %v630 = vadd.f32 0.0, %v629
      %v631 = vpop.f32.mrb[0].mxu0
      %v632 = vadd.f32 0.0, %v631
      %633 = vdwg.mxu0
      %v635 = vsel %vm372, %v545, 0
      %v638 = vsel %vm376, %v543, 0
      %v640 = vsel %vm376, %v541, 0
      %642 = vmatprep.subr.mxu0 %v640
      %643 = vmatpush1.msra.mxu0 %v638
      %644 = vmatprep.subr.mxu0 0.0
      %645 = vmatpush1.msra.mxu0 0.0
      %646 = vmatprep.subr.mxu0 0.0
      %647 = vmatpush1.msra.mxu0 0.0
      %648 = vmatprep.subr.mxu0 0.0
      %649 = vmatpush1.msra.mxu0 0.0
      %650 = vmatprep.subr.mxu0 0.0
      %651 = vmatpush1.msra.mxu0 0.0
      %652 = vmatprep.subr.mxu0 0.0
      %653 = vmatpush1.msra.mxu0 0.0
      %654 = vmatprep.subr.mxu0 0.0
      %655 = vmatpush1.msra.mxu0 0.0
      %656 = vmatprep.subr.mxu0 0.0
      %657 = vmatpush1.msra.mxu0 0.0
      %658 = vmatprep.subr.mxu0 0.0
      %659 = vmatpush1.msra.mxu0 0.0
      %660 = vmatprep.subr.mxu0 0.0
      %661 = vmatpush1.msra.mxu0 0.0
      %662 = vmatprep.subr.mxu0 0.0
      %663 = vmatpush1.msra.mxu0 0.0
      %664 = vmatprep.subr.mxu0 0.0
      %665 = vmatpush1.msra.mxu0 0.0
      %666 = vmatprep.subr.mxu0 0.0
      %667 = vmatpush1.msra.mxu0 0.0
      %668 = vmatprep.subr.mxu0 0.0
      %669 = vmatpush1.msra.mxu0 0.0
      %670 = vmatprep.subr.mxu0 0.0
      %671 = vmatpush1.msra.mxu0 0.0
      %672 = vmatprep.subr.mxu0 0.0
      %673 = vmatpush1.msra.mxu0 0.0
      %674 = vmatprep.subr.mxu0 0.0
      %675 = vmatpush1.msra.mxu0 0.0
      %676 = vmatprep.subr.mxu0 0.0
      %677 = vmatpush1.msra.mxu0 0.0
      %678 = vmatprep.subr.mxu0 0.0
      %679 = vmatpush1.msra.mxu0 0.0
      %680 = vmatprep.subr.mxu0 0.0
      %681 = vmatpush1.msra.mxu0 0.0
      %682 = vmatprep.subr.mxu0 0.0
      %683 = vmatpush1.msra.mxu0 0.0
      %684 = vmatprep.subr.mxu0 0.0
      %685 = vmatpush1.msra.mxu0 0.0
      %686 = vmatprep.subr.mxu0 0.0
      %687 = vmatpush1.msra.mxu0 0.0
      %688 = vmatprep.subr.mxu0 0.0
      %689 = vmatpush1.msra.mxu0 0.0
      %690 = vmatprep.subr.mxu0 0.0
      %691 = vmatpush1.msra.mxu0 0.0
      %692 = vmatprep.subr.mxu0 0.0
      %693 = vmatpush1.msra.mxu0 0.0
      %694 = vmatprep.subr.mxu0 0.0
      %695 = vmatpush1.msra.mxu0 0.0
      %696 = vmatprep.subr.mxu0 0.0
      %697 = vmatpush1.msra.mxu0 0.0
      %698 = vmatprep.subr.mxu0 0.0
      %699 = vmatpush1.msra.mxu0 0.0
      %700 = vmatprep.subr.mxu0 0.0
      %701 = vmatpush1.msra.mxu0 0.0
      %702 = vmatprep.subr.mxu0 0.0
      %703 = vmatpush1.msra.mxu0 0.0
      %704 = vmatprep.subr.mxu0 0.0
      %705 = vmatpush1.msra.mxu0 0.0
      %706 = vmatprep.mubr.f32.mxu0 0.0
      %707 = vmatmul.mubr.f32.gmra.mrb[0].mxu0 %v635
      %v708 = vpop.f32.mrb[0].mxu0
      %v709 = vadd.f32 %v630, %v708
      %v710 = vpop.f32.mrb[0].mxu0
      %v711 = vadd.f32 %v632, %v710
      %712 = vdwg.mxu0
      %v713 = vadd.f32 %v534, %v709
      %v714 = vadd.f32 %v535, %v711
      %715 = vrot.lane.b32.xlu0 %v342, 15
      %v716 = vpop.permute.xlu0 %715
      %717 = vrot.lane.b32.xlu0 %v352, 15
      %v718 = vpop.permute.xlu0 %717
      %vm719 = vcmask 121856
      %v720 = vsel %vm719, %v716, %v718
      %v722 = vsel %vm719, 0.0, %v716
      %s723 = scalar_lea.vmem %s2, 8
      %v724 = vld [vmem:[%s723] sm:$0xf]
      %725 = vrot.lane.b32.xlu0 %v343, 15
      %v726 = vpop.permute.xlu0 %725
      %727 = vrot.lane.b32.xlu0 %v363, 15
      %v728 = vpop.permute.xlu0 %727
      %v729 = vsel %vm719, %v726, %v728
      %v731 = vsel %vm719, 0.0, %v726
      %s732 = scalar_lea.vmem %s3, 8
      %v733 = vld [vmem:[%s732] sm:$0xf]
      %v735 = vsel %vm372, %v733, 0
      %v738 = vsel %vm376, %v731, 0
      %v740 = vsel %vm376, %v729, 0
      %742 = vmatprep.subr.mxu0 %v740
      %743 = vmatpush1.msra.mxu0 %v738
      %744 = vmatprep.subr.mxu0 0.0
      %745 = vmatpush1.msra.mxu0 0.0
      %746 = vmatprep.subr.mxu0 0.0
      %747 = vmatpush1.msra.mxu0 0.0
      %748 = vmatprep.subr.mxu0 0.0
      %749 = vmatpush1.msra.mxu0 0.0
      %750 = vmatprep.subr.mxu0 0.0
      %751 = vmatpush1.msra.mxu0 0.0
      %752 = vmatprep.subr.mxu0 0.0
      %753 = vmatpush1.msra.mxu0 0.0
      %754 = vmatprep.subr.mxu0 0.0
      %755 = vmatpush1.msra.mxu0 0.0
      %756 = vmatprep.subr.mxu0 0.0
      %757 = vmatpush1.msra.mxu0 0.0
      %758 = vmatprep.subr.mxu0 0.0
      %759 = vmatpush1.msra.mxu0 0.0
      %760 = vmatprep.subr.mxu0 0.0
      %761 = vmatpush1.msra.mxu0 0.0
      %762 = vmatprep.subr.mxu0 0.0
      %763 = vmatpush1.msra.mxu0 0.0
      %764 = vmatprep.subr.mxu0 0.0
      %765 = vmatpush1.msra.mxu0 0.0
      %766 = vmatprep.subr.mxu0 0.0
      %767 = vmatpush1.msra.mxu0 0.0
      %768 = vmatprep.subr.mxu0 0.0
      %769 = vmatpush1.msra.mxu0 0.0
      %770 = vmatprep.subr.mxu0 0.0
      %771 = vmatpush1.msra.mxu0 0.0
      %772 = vmatprep.subr.mxu0 0.0
      %773 = vmatpush1.msra.mxu0 0.0
      %774 = vmatprep.subr.mxu0 0.0
      %775 = vmatpush1.msra.mxu0 0.0
      %776 = vmatprep.subr.mxu0 0.0
      %777 = vmatpush1.msra.mxu0 0.0
      %778 = vmatprep.subr.mxu0 0.0
      %779 = vmatpush1.msra.mxu0 0.0
      %780 = vmatprep.subr.mxu0 0.0
      %781 = vmatpush1.msra.mxu0 0.0
      %782 = vmatprep.subr.mxu0 0.0
      %783 = vmatpush1.msra.mxu0 0.0
      %784 = vmatprep.subr.mxu0 0.0
      %785 = vmatpush1.msra.mxu0 0.0
      %786 = vmatprep.subr.mxu0 0.0
      %787 = vmatpush1.msra.mxu0 0.0
      %788 = vmatprep.subr.mxu0 0.0
      %789 = vmatpush1.msra.mxu0 0.0
      %790 = vmatprep.subr.mxu0 0.0
      %791 = vmatpush1.msra.mxu0 0.0
      %792 = vmatprep.subr.mxu0 0.0
      %793 = vmatpush1.msra.mxu0 0.0
      %794 = vmatprep.subr.mxu0 0.0
      %795 = vmatpush1.msra.mxu0 0.0
      %796 = vmatprep.subr.mxu0 0.0
      %797 = vmatpush1.msra.mxu0 0.0
      %798 = vmatprep.subr.mxu0 0.0
      %799 = vmatpush1.msra.mxu0 0.0
      %800 = vmatprep.subr.mxu0 0.0
      %801 = vmatpush1.msra.mxu0 0.0
      %802 = vmatprep.subr.mxu0 0.0
      %803 = vmatpush1.msra.mxu0 0.0
      %804 = vmatprep.subr.mxu0 0.0
      %805 = vmatpush1.msra.mxu0 0.0
      %806 = vmatprep.mubr.f32.mxu0 0.0
      %807 = vmatmul.mubr.f32.gmra.mrb[0].mxu0 %v735
      %v808 = vpop.f32.mrb[0].mxu0
      %v809 = vadd.f32 0.0, %v808
      %v810 = vpop.f32.mrb[0].mxu0
      %v811 = vadd.f32 0.0, %v810
      %812 = vdwg.mxu0
      %v814 = vsel %vm372, %v724, 0
      %v817 = vsel %vm376, %v722, 0
      %v819 = vsel %vm376, %v720, 0
      %821 = vmatprep.subr.mxu0 %v819
      %822 = vmatpush1.msra.mxu0 %v817
      %823 = vmatprep.subr.mxu0 0.0
      %824 = vmatpush1.msra.mxu0 0.0
      %825 = vmatprep.subr.mxu0 0.0
      %826 = vmatpush1.msra.mxu0 0.0
      %827 = vmatprep.subr.mxu0 0.0
      %828 = vmatpush1.msra.mxu0 0.0
      %829 = vmatprep.subr.mxu0 0.0
      %830 = vmatpush1.msra.mxu0 0.0
      %831 = vmatprep.subr.mxu0 0.0
      %832 = vmatpush1.msra.mxu0 0.0
      %833 = vmatprep.subr.mxu0 0.0
      %834 = vmatpush1.msra.mxu0 0.0
      %835 = vmatprep.subr.mxu0 0.0
      %836 = vmatpush1.msra.mxu0 0.0
      %837 = vmatprep.subr.mxu0 0.0
      %838 = vmatpush1.msra.mxu0 0.0
      %839 = vmatprep.subr.mxu0 0.0
      %840 = vmatpush1.msra.mxu0 0.0
      %841 = vmatprep.subr.mxu0 0.0
      %842 = vmatpush1.msra.mxu0 0.0
      %843 = vmatprep.subr.mxu0 0.0
      %844 = vmatpush1.msra.mxu0 0.0
      %845 = vmatprep.subr.mxu0 0.0
      %846 = vmatpush1.msra.mxu0 0.0
      %847 = vmatprep.subr.mxu0 0.0
      %848 = vmatpush1.msra.mxu0 0.0
      %849 = vmatprep.subr.mxu0 0.0
      %850 = vmatpush1.msra.mxu0 0.0
      %851 = vmatprep.subr.mxu0 0.0
      %852 = vmatpush1.msra.mxu0 0.0
      %853 = vmatprep.subr.mxu0 0.0
      %854 = vmatpush1.msra.mxu0 0.0
      %855 = vmatprep.subr.mxu0 0.0
      %856 = vmatpush1.msra.mxu0 0.0
      %857 = vmatprep.subr.mxu0 0.0
      %858 = vmatpush1.msra.mxu0 0.0
      %859 = vmatprep.subr.mxu0 0.0
      %860 = vmatpush1.msra.mxu0 0.0
      %861 = vmatprep.subr.mxu0 0.0
      %862 = vmatpush1.msra.mxu0 0.0
      %863 = vmatprep.subr.mxu0 0.0
      %864 = vmatpush1.msra.mxu0 0.0
      %865 = vmatprep.subr.mxu0 0.0
      %866 = vmatpush1.msra.mxu0 0.0
      %867 = vmatprep.subr.mxu0 0.0
      %868 = vmatpush1.msra.mxu0 0.0
      %869 = vmatprep.subr.mxu0 0.0
      %870 = vmatpush1.msra.mxu0 0.0
      %871 = vmatprep.subr.mxu0 0.0
      %872 = vmatpush1.msra.mxu0 0.0
      %873 = vmatprep.subr.mxu0 0.0
      %874 = vmatpush1.msra.mxu0 0.0
      %875 = vmatprep.subr.mxu0 0.0
      %876 = vmatpush1.msra.mxu0 0.0
      %877 = vmatprep.subr.mxu0 0.0
      %878 = vmatpush1.msra.mxu0 0.0
      %879 = vmatprep.subr.mxu0 0.0
      %880 = vmatpush1.msra.mxu0 0.0
      %881 = vmatprep.subr.mxu0 0.0
      %882 = vmatpush1.msra.mxu0 0.0
      %883 = vmatprep.subr.mxu0 0.0
      %884 = vmatpush1.msra.mxu0 0.0
      %885 = vmatprep.mubr.f32.mxu0 0.0
      %886 = vmatmul.mubr.f32.gmra.mrb[0].mxu0 %v814
      %v887 = vpop.f32.mrb[0].mxu0
      %v888 = vadd.f32 %v809, %v887
      %v889 = vpop.f32.mrb[0].mxu0
      %v890 = vadd.f32 %v811, %v889
      %891 = vdwg.mxu0
      %v892 = vmul.f32 %v888, %v340
      %v893 = vmul.f32 %v890, %v341
      %v894 = vadd.f32 %v713, %v892
      %v895 = vadd.f32 %v714, %v893
      %896 = vrot.lane.b32.xlu0 %v342, 1
      %v897 = vpop.permute.xlu0 %896
      %898 = vrot.lane.b32.xlu0 %v352, 1
      %v899 = vpop.permute.xlu0 %898
      %vm900 = vcmask 7168
      %v901 = vsel %vm900, %v897, %v899
      %v903 = vsel %vm900, 0.0, %v897
      %s904 = scalar_lea.vmem %s2, 12
      %v905 = vld [vmem:[%s904] sm:$0xf]
      %906 = vrot.lane.b32.xlu0 %v343, 1
      %v907 = vpop.permute.xlu0 %906
      %908 = vrot.lane.b32.xlu0 %v363, 1
      %v909 = vpop.permute.xlu0 %908
      %v910 = vsel %vm900, %v907, %v909
      %v912 = vsel %vm900, 0.0, %v907
      %s913 = scalar_lea.vmem %s3, 12
      %v914 = vld [vmem:[%s913] sm:$0xf]
      %v916 = vsel %vm372, %v914, 0
      %v919 = vsel %vm376, %v912, 0
      %v921 = vsel %vm376, %v910, 0
      %923 = vmatprep.subr.mxu0 %v921
      %924 = vmatpush1.msra.mxu0 %v919
      %925 = vmatprep.subr.mxu0 0.0
      %926 = vmatpush1.msra.mxu0 0.0
      %927 = vmatprep.subr.mxu0 0.0
      %928 = vmatpush1.msra.mxu0 0.0
      %929 = vmatprep.subr.mxu0 0.0
      %930 = vmatpush1.msra.mxu0 0.0
      %931 = vmatprep.subr.mxu0 0.0
      %932 = vmatpush1.msra.mxu0 0.0
      %933 = vmatprep.subr.mxu0 0.0
      %934 = vmatpush1.msra.mxu0 0.0
      %935 = vmatprep.subr.mxu0 0.0
      %936 = vmatpush1.msra.mxu0 0.0
      %937 = vmatprep.subr.mxu0 0.0
      %938 = vmatpush1.msra.mxu0 0.0
      %939 = vmatprep.subr.mxu0 0.0
      %940 = vmatpush1.msra.mxu0 0.0
      %941 = vmatprep.subr.mxu0 0.0
      %942 = vmatpush1.msra.mxu0 0.0
      %943 = vmatprep.subr.mxu0 0.0
      %944 = vmatpush1.msra.mxu0 0.0
      %945 = vmatprep.subr.mxu0 0.0
      %946 = vmatpush1.msra.mxu0 0.0
      %947 = vmatprep.subr.mxu0 0.0
      %948 = vmatpush1.msra.mxu0 0.0
      %949 = vmatprep.subr.mxu0 0.0
      %950 = vmatpush1.msra.mxu0 0.0
      %951 = vmatprep.subr.mxu0 0.0
      %952 = vmatpush1.msra.mxu0 0.0
      %953 = vmatprep.subr.mxu0 0.0
      %954 = vmatpush1.msra.mxu0 0.0
      %955 = vmatprep.subr.mxu0 0.0
      %956 = vmatpush1.msra.mxu0 0.0
      %957 = vmatprep.subr.mxu0 0.0
      %958 = vmatpush1.msra.mxu0 0.0
      %959 = vmatprep.subr.mxu0 0.0
      %960 = vmatpush1.msra.mxu0 0.0
      %961 = vmatprep.subr.mxu0 0.0
      %962 = vmatpush1.msra.mxu0 0.0
      %963 = vmatprep.subr.mxu0 0.0
      %964 = vmatpush1.msra.mxu0 0.0
      %965 = vmatprep.subr.mxu0 0.0
      %966 = vmatpush1.msra.mxu0 0.0
      %967 = vmatprep.subr.mxu0 0.0
      %968 = vmatpush1.msra.mxu0 0.0
      %969 = vmatprep.subr.mxu0 0.0
      %970 = vmatpush1.msra.mxu0 0.0
      %971 = vmatprep.subr.mxu0 0.0
      %972 = vmatpush1.msra.mxu0 0.0
      %973 = vmatprep.subr.mxu0 0.0
      %974 = vmatpush1.msra.mxu0 0.0
      %975 = vmatprep.subr.mxu0 0.0
      %976 = vmatpush1.msra.mxu0 0.0
      %977 = vmatprep.subr.mxu0 0.0
      %978 = vmatpush1.msra.mxu0 0.0
      %979 = vmatprep.subr.mxu0 0.0
      %980 = vmatpush1.msra.mxu0 0.0
      %981 = vmatprep.subr.mxu0 0.0
      %982 = vmatpush1.msra.mxu0 0.0
      %983 = vmatprep.subr.mxu0 0.0
      %984 = vmatpush1.msra.mxu0 0.0
      %985 = vmatprep.subr.mxu0 0.0
      %986 = vmatpush1.msra.mxu0 0.0
      %987 = vmatprep.mubr.f32.mxu0 0.0
      %988 = vmatmul.mubr.f32.gmra.mrb[0].mxu0 %v916
      %v989 = vpop.f32.mrb[0].mxu0
      %v990 = vadd.f32 0.0, %v989
      %v991 = vpop.f32.mrb[0].mxu0
      %v992 = vadd.f32 0.0, %v991
      %993 = vdwg.mxu0
      %v995 = vsel %vm372, %v905, 0
      %v998 = vsel %vm376, %v903, 0
      %v1000 = vsel %vm376, %v901, 0
      %1002 = vmatprep.subr.mxu0 %v1000
      %1003 = vmatpush1.msra.mxu0 %v998
      %1004 = vmatprep.subr.mxu0 0.0
      %1005 = vmatpush1.msra.mxu0 0.0
      %1006 = vmatprep.subr.mxu0 0.0
      %1007 = vmatpush1.msra.mxu0 0.0
      %1008 = vmatprep.subr.mxu0 0.0
      %1009 = vmatpush1.msra.mxu0 0.0
      %1010 = vmatprep.subr.mxu0 0.0
      %1011 = vmatpush1.msra.mxu0 0.0
      %1012 = vmatprep.subr.mxu0 0.0
      %1013 = vmatpush1.msra.mxu0 0.0
      %1014 = vmatprep.subr.mxu0 0.0
      %1015 = vmatpush1.msra.mxu0 0.0
      %1016 = vmatprep.subr.mxu0 0.0
      %1017 = vmatpush1.msra.mxu0 0.0
      %1018 = vmatprep.subr.mxu0 0.0
      %1019 = vmatpush1.msra.mxu0 0.0
      %1020 = vmatprep.subr.mxu0 0.0
      %1021 = vmatpush1.msra.mxu0 0.0
      %1022 = vmatprep.subr.mxu0 0.0
      %1023 = vmatpush1.msra.mxu0 0.0
      %1024 = vmatprep.subr.mxu0 0.0
      %1025 = vmatpush1.msra.mxu0 0.0
      %1026 = vmatprep.subr.mxu0 0.0
      %1027 = vmatpush1.msra.mxu0 0.0
      %1028 = vmatprep.subr.mxu0 0.0
      %1029 = vmatpush1.msra.mxu0 0.0
      %1030 = vmatprep.subr.mxu0 0.0
      %1031 = vmatpush1.msra.mxu0 0.0
      %1032 = vmatprep.subr.mxu0 0.0
      %1033 = vmatpush1.msra.mxu0 0.0
      %1034 = vmatprep.subr.mxu0 0.0
      %1035 = vmatpush1.msra.mxu0 0.0
      %1036 = vmatprep.subr.mxu0 0.0
      %1037 = vmatpush1.msra.mxu0 0.0
      %1038 = vmatprep.subr.mxu0 0.0
      %1039 = vmatpush1.msra.mxu0 0.0
      %1040 = vmatprep.subr.mxu0 0.0
      %1041 = vmatpush1.msra.mxu0 0.0
      %1042 = vmatprep.subr.mxu0 0.0
      %1043 = vmatpush1.msra.mxu0 0.0
      %1044 = vmatprep.subr.mxu0 0.0
      %1045 = vmatpush1.msra.mxu0 0.0
      %1046 = vmatprep.subr.mxu0 0.0
      %1047 = vmatpush1.msra.mxu0 0.0
      %1048 = vmatprep.subr.mxu0 0.0
      %1049 = vmatpush1.msra.mxu0 0.0
      %1050 = vmatprep.subr.mxu0 0.0
      %1051 = vmatpush1.msra.mxu0 0.0
      %1052 = vmatprep.subr.mxu0 0.0
      %1053 = vmatpush1.msra.mxu0 0.0
      %1054 = vmatprep.subr.mxu0 0.0
      %1055 = vmatpush1.msra.mxu0 0.0
      %1056 = vmatprep.subr.mxu0 0.0
      %1057 = vmatpush1.msra.mxu0 0.0
      %1058 = vmatprep.subr.mxu0 0.0
      %1059 = vmatpush1.msra.mxu0 0.0
      %1060 = vmatprep.subr.mxu0 0.0
      %1061 = vmatpush1.msra.mxu0 0.0
      %1062 = vmatprep.subr.mxu0 0.0
      %1063 = vmatpush1.msra.mxu0 0.0
      %1064 = vmatprep.subr.mxu0 0.0
      %1065 = vmatpush1.msra.mxu0 0.0
      %1066 = vmatprep.mubr.f32.mxu0 0.0
      %1067 = vmatmul.mubr.f32.gmra.mrb[0].mxu0 %v995
      %v1068 = vpop.f32.mrb[0].mxu0
      %v1069 = vadd.f32 %v990, %v1068
      %v1070 = vpop.f32.mrb[0].mxu0
      %v1071 = vadd.f32 %v992, %v1070
      %1072 = vdwg.mxu0
      %v1073 = vmul.f32 %v1069, %v334
      %v1074 = vmul.f32 %v1071, %v335
      %v1075 = vadd.f32 %v894, %v1073
      %v1076 = vadd.f32 %v895, %v1074
      %s1077 = scalar_lea.vmem %s2, 16
      %v1078 = vld [vmem:[%s1077] sm:$0xf]
      %s1079 = scalar_lea.vmem %s3, 16
      %v1080 = vld [vmem:[%s1079] sm:$0xf]
      %v1082 = vsel %vm372, %v1080, 0
      %v1084 = vsel %vm376, %v343, 0
      %v1086 = vsel %vm376, %v363, 0
      %1088 = vmatprep.subr.mxu0 %v1086
      %1089 = vmatpush1.msra.mxu0 %v1084
      %1090 = vmatprep.subr.mxu0 0.0
      %1091 = vmatpush1.msra.mxu0 0.0
      %1092 = vmatprep.subr.mxu0 0.0
      %1093 = vmatpush1.msra.mxu0 0.0
      %1094 = vmatprep.subr.mxu0 0.0
      %1095 = vmatpush1.msra.mxu0 0.0
      %1096 = vmatprep.subr.mxu0 0.0
      %1097 = vmatpush1.msra.mxu0 0.0
      %1098 = vmatprep.subr.mxu0 0.0
      %1099 = vmatpush1.msra.mxu0 0.0
      %1100 = vmatprep.subr.mxu0 0.0
      %1101 = vmatpush1.msra.mxu0 0.0
      %1102 = vmatprep.subr.mxu0 0.0
      %1103 = vmatpush1.msra.mxu0 0.0
      %1104 = vmatprep.subr.mxu0 0.0
      %1105 = vmatpush1.msra.mxu0 0.0
      %1106 = vmatprep.subr.mxu0 0.0
      %1107 = vmatpush1.msra.mxu0 0.0
      %1108 = vmatprep.subr.mxu0 0.0
      %1109 = vmatpush1.msra.mxu0 0.0
      %1110 = vmatprep.subr.mxu0 0.0
      %1111 = vmatpush1.msra.mxu0 0.0
      %1112 = vmatprep.subr.mxu0 0.0
      %1113 = vmatpush1.msra.mxu0 0.0
      %1114 = vmatprep.subr.mxu0 0.0
      %1115 = vmatpush1.msra.mxu0 0.0
      %1116 = vmatprep.subr.mxu0 0.0
      %1117 = vmatpush1.msra.mxu0 0.0
      %1118 = vmatprep.subr.mxu0 0.0
      %1119 = vmatpush1.msra.mxu0 0.0
      %1120 = vmatprep.subr.mxu0 0.0
      %1121 = vmatpush1.msra.mxu0 0.0
      %1122 = vmatprep.subr.mxu0 0.0
      %1123 = vmatpush1.msra.mxu0 0.0
      %1124 = vmatprep.subr.mxu0 0.0
      %1125 = vmatpush1.msra.mxu0 0.0
      %1126 = vmatprep.subr.mxu0 0.0
      %1127 = vmatpush1.msra.mxu0 0.0
      %1128 = vmatprep.subr.mxu0 0.0
      %1129 = vmatpush1.msra.mxu0 0.0
      %1130 = vmatprep.subr.mxu0 0.0
      %1131 = vmatpush1.msra.mxu0 0.0
      %1132 = vmatprep.subr.mxu0 0.0
      %1133 = vmatpush1.msra.mxu0 0.0
      %1134 = vmatprep.subr.mxu0 0.0
      %1135 = vmatpush1.msra.mxu0 0.0
      %1136 = vmatprep.subr.mxu0 0.0
      %1137 = vmatpush1.msra.mxu0 0.0
      %1138 = vmatprep.subr.mxu0 0.0
      %1139 = vmatpush1.msra.mxu0 0.0
      %1140 = vmatprep.subr.mxu0 0.0
      %1141 = vmatpush1.msra.mxu0 0.0
      %1142 = vmatprep.subr.mxu0 0.0
      %1143 = vmatpush1.msra.mxu0 0.0
      %1144 = vmatprep.subr.mxu0 0.0
      %1145 = vmatpush1.msra.mxu0 0.0
      %1146 = vmatprep.subr.mxu0 0.0
      %1147 = vmatpush1.msra.mxu0 0.0
      %1148 = vmatprep.subr.mxu0 0.0
      %1149 = vmatpush1.msra.mxu0 0.0
      %1150 = vmatprep.subr.mxu0 0.0
      %1151 = vmatpush1.msra.mxu0 0.0
      %1152 = vmatprep.mubr.f32.mxu0 0.0
      %1153 = vmatmul.mubr.f32.gmra.mrb[0].mxu0 %v1082
      %v1154 = vpop.f32.mrb[0].mxu0
      %v1155 = vadd.f32 0.0, %v1154
      %v1156 = vpop.f32.mrb[0].mxu0
      %v1157 = vadd.f32 0.0, %v1156
      %1158 = vdwg.mxu0
      %v1160 = vsel %vm372, %v1078, 0
      %v1162 = vsel %vm376, %v342, 0
      %v1164 = vsel %vm376, %v352, 0
      %1166 = vmatprep.subr.mxu0 %v1164
      %1167 = vmatpush1.msra.mxu0 %v1162
      %1168 = vmatprep.subr.mxu0 0.0
      %1169 = vmatpush1.msra.mxu0 0.0
      %1170 = vmatprep.subr.mxu0 0.0
      %1171 = vmatpush1.msra.mxu0 0.0
      %1172 = vmatprep.subr.mxu0 0.0
      %1173 = vmatpush1.msra.mxu0 0.0
      %1174 = vmatprep.subr.mxu0 0.0
      %1175 = vmatpush1.msra.mxu0 0.0
      %1176 = vmatprep.subr.mxu0 0.0
      %1177 = vmatpush1.msra.mxu0 0.0
      %1178 = vmatprep.subr.mxu0 0.0
      %1179 = vmatpush1.msra.mxu0 0.0
      %1180 = vmatprep.subr.mxu0 0.0
      %1181 = vmatpush1.msra.mxu0 0.0
      %1182 = vmatprep.subr.mxu0 0.0
      %1183 = vmatpush1.msra.mxu0 0.0
      %1184 = vmatprep.subr.mxu0 0.0
      %1185 = vmatpush1.msra.mxu0 0.0
      %1186 = vmatprep.subr.mxu0 0.0
      %1187 = vmatpush1.msra.mxu0 0.0
      %1188 = vmatprep.subr.mxu0 0.0
      %1189 = vmatpush1.msra.mxu0 0.0
      %1190 = vmatprep.subr.mxu0 0.0
      %1191 = vmatpush1.msra.mxu0 0.0
      %1192 = vmatprep.subr.mxu0 0.0
      %1193 = vmatpush1.msra.mxu0 0.0
      %1194 = vmatprep.subr.mxu0 0.0
      %1195 = vmatpush1.msra.mxu0 0.0
      %1196 = vmatprep.subr.mxu0 0.0
      %1197 = vmatpush1.msra.mxu0 0.0
      %1198 = vmatprep.subr.mxu0 0.0
      %1199 = vmatpush1.msra.mxu0 0.0
      %1200 = vmatprep.subr.mxu0 0.0
      %1201 = vmatpush1.msra.mxu0 0.0
      %1202 = vmatprep.subr.mxu0 0.0
      %1203 = vmatpush1.msra.mxu0 0.0
      %1204 = vmatprep.subr.mxu0 0.0
      %1205 = vmatpush1.msra.mxu0 0.0
      %1206 = vmatprep.subr.mxu0 0.0
      %1207 = vmatpush1.msra.mxu0 0.0
      %1208 = vmatprep.subr.mxu0 0.0
      %1209 = vmatpush1.msra.mxu0 0.0
      %1210 = vmatprep.subr.mxu0 0.0
      %1211 = vmatpush1.msra.mxu0 0.0
      %1212 = vmatprep.subr.mxu0 0.0
      %1213 = vmatpush1.msra.mxu0 0.0
      %1214 = vmatprep.subr.mxu0 0.0
      %1215 = vmatpush1.msra.mxu0 0.0
      %1216 = vmatprep.subr.mxu0 0.0
      %1217 = vmatpush1.msra.mxu0 0.0
      %1218 = vmatprep.subr.mxu0 0.0
      %1219 = vmatpush1.msra.mxu0 0.0
      %1220 = vmatprep.subr.mxu0 0.0
      %1221 = vmatpush1.msra.mxu0 0.0
      %1222 = vmatprep.subr.mxu0 0.0
      %1223 = vmatpush1.msra.mxu0 0.0
      %1224 = vmatprep.subr.mxu0 0.0
      %1225 = vmatpush1.msra.mxu0 0.0
      %1226 = vmatprep.subr.mxu0 0.0
      %1227 = vmatpush1.msra.mxu0 0.0
      %1228 = vmatprep.subr.mxu0 0.0
      %1229 = vmatpush1.msra.mxu0 0.0
      %1230 = vmatprep.mubr.f32.mxu0 0.0
      %1231 = vmatmul.mubr.f32.gmra.mrb[0].mxu0 %v1160
      %v1232 = vpop.f32.mrb[0].mxu0
      %v1233 = vadd.f32 %v1155, %v1232
      %v1234 = vpop.f32.mrb[0].mxu0
      %v1235 = vadd.f32 %v1157, %v1234
      %1236 = vdwg.mxu0
      %v1237 = vadd.f32 %v1075, %v1233
      %v1238 = vadd.f32 %v1076, %v1235
      %1239 = vrot.lane.b32.xlu0 %v342, 127
      %v1240 = vpop.permute.xlu0 %1239
      %1241 = vrot.lane.b32.xlu0 %v352, 127
      %v1242 = vpop.permute.xlu0 %1241
      %vm1243 = vcmask 1039360
      %v1244 = vsel %vm1243, %v1240, %v1242
      %v1246 = vsel %vm1243, %v1242, 0.0
      %s1247 = scalar_lea.vmem %s2, 20
      %v1248 = vld [vmem:[%s1247] sm:$0xf]
      %1249 = vrot.lane.b32.xlu0 %v343, 127
      %v1250 = vpop.permute.xlu0 %1249
      %1251 = vrot.lane.b32.xlu0 %v363, 127
      %v1252 = vpop.permute.xlu0 %1251
      %v1253 = vsel %vm1243, %v1250, %v1252
      %v1255 = vsel %vm1243, %v1252, 0.0
      %s1256 = scalar_lea.vmem %s3, 20
      %v1257 = vld [vmem:[%s1256] sm:$0xf]
      %v1259 = vsel %vm372, %v1257, 0
      %v1261 = vsel %vm376, %v1253, 0
      %v1264 = vsel %vm376, %v1255, 0
      %1266 = vmatprep.subr.mxu0 %v1264
      %1267 = vmatpush1.msra.mxu0 %v1261
      %1268 = vmatprep.subr.mxu0 0.0
      %1269 = vmatpush1.msra.mxu0 0.0
      %1270 = vmatprep.subr.mxu0 0.0
      %1271 = vmatpush1.msra.mxu0 0.0
      %1272 = vmatprep.subr.mxu0 0.0
      %1273 = vmatpush1.msra.mxu0 0.0
      %1274 = vmatprep.subr.mxu0 0.0
      %1275 = vmatpush1.msra.mxu0 0.0
      %1276 = vmatprep.subr.mxu0 0.0
      %1277 = vmatpush1.msra.mxu0 0.0
      %1278 = vmatprep.subr.mxu0 0.0
      %1279 = vmatpush1.msra.mxu0 0.0
      %1280 = vmatprep.subr.mxu0 0.0
      %1281 = vmatpush1.msra.mxu0 0.0
      %1282 = vmatprep.subr.mxu0 0.0
      %1283 = vmatpush1.msra.mxu0 0.0
      %1284 = vmatprep.subr.mxu0 0.0
      %1285 = vmatpush1.msra.mxu0 0.0
      %1286 = vmatprep.subr.mxu0 0.0
      %1287 = vmatpush1.msra.mxu0 0.0
      %1288 = vmatprep.subr.mxu0 0.0
      %1289 = vmatpush1.msra.mxu0 0.0
      %1290 = vmatprep.subr.mxu0 0.0
      %1291 = vmatpush1.msra.mxu0 0.0
      %1292 = vmatprep.subr.mxu0 0.0
      %1293 = vmatpush1.msra.mxu0 0.0
      %1294 = vmatprep.subr.mxu0 0.0
      %1295 = vmatpush1.msra.mxu0 0.0
      %1296 = vmatprep.subr.mxu0 0.0
      %1297 = vmatpush1.msra.mxu0 0.0
      %1298 = vmatprep.subr.mxu0 0.0
      %1299 = vmatpush1.msra.mxu0 0.0
      %1300 = vmatprep.subr.mxu0 0.0
      %1301 = vmatpush1.msra.mxu0 0.0
      %1302 = vmatprep.subr.mxu0 0.0
      %1303 = vmatpush1.msra.mxu0 0.0
      %1304 = vmatprep.subr.mxu0 0.0
      %1305 = vmatpush1.msra.mxu0 0.0
      %1306 = vmatprep.subr.mxu0 0.0
      %1307 = vmatpush1.msra.mxu0 0.0
      %1308 = vmatprep.subr.mxu0 0.0
      %1309 = vmatpush1.msra.mxu0 0.0
      %1310 = vmatprep.subr.mxu0 0.0
      %1311 = vmatpush1.msra.mxu0 0.0
      %1312 = vmatprep.subr.mxu0 0.0
      %1313 = vmatpush1.msra.mxu0 0.0
      %1314 = vmatprep.subr.mxu0 0.0
      %1315 = vmatpush1.msra.mxu0 0.0
      %1316 = vmatprep.subr.mxu0 0.0
      %1317 = vmatpush1.msra.mxu0 0.0
      %1318 = vmatprep.subr.mxu0 0.0
      %1319 = vmatpush1.msra.mxu0 0.0
      %1320 = vmatprep.subr.mxu0 0.0
      %1321 = vmatpush1.msra.mxu0 0.0
      %1322 = vmatprep.subr.mxu0 0.0
      %1323 = vmatpush1.msra.mxu0 0.0
      %1324 = vmatprep.subr.mxu0 0.0
      %1325 = vmatpush1.msra.mxu0 0.0
      %1326 = vmatprep.subr.mxu0 0.0
      %1327 = vmatpush1.msra.mxu0 0.0
      %1328 = vmatprep.subr.mxu0 0.0
      %1329 = vmatpush1.msra.mxu0 0.0
      %1330 = vmatprep.mubr.f32.mxu0 0.0
      %1331 = vmatmul.mubr.f32.gmra.mrb[0].mxu0 %v1259
      %v1332 = vpop.f32.mrb[0].mxu0
      %v1333 = vadd.f32 0.0, %v1332
      %v1334 = vpop.f32.mrb[0].mxu0
      %v1335 = vadd.f32 0.0, %v1334
      %1336 = vdwg.mxu0
      %v1338 = vsel %vm372, %v1248, 0
      %v1340 = vsel %vm376, %v1244, 0
      %v1343 = vsel %vm376, %v1246, 0
      %1345 = vmatprep.subr.mxu0 %v1343
      %1346 = vmatpush1.msra.mxu0 %v1340
      %1347 = vmatprep.subr.mxu0 0.0
      %1348 = vmatpush1.msra.mxu0 0.0
      %1349 = vmatprep.subr.mxu0 0.0
      %1350 = vmatpush1.msra.mxu0 0.0
      %1351 = vmatprep.subr.mxu0 0.0
      %1352 = vmatpush1.msra.mxu0 0.0
      %1353 = vmatprep.subr.mxu0 0.0
      %1354 = vmatpush1.msra.mxu0 0.0
      %1355 = vmatprep.subr.mxu0 0.0
      %1356 = vmatpush1.msra.mxu0 0.0
      %1357 = vmatprep.subr.mxu0 0.0
      %1358 = vmatpush1.msra.mxu0 0.0
      %1359 = vmatprep.subr.mxu0 0.0
      %1360 = vmatpush1.msra.mxu0 0.0
      %1361 = vmatprep.subr.mxu0 0.0
      %1362 = vmatpush1.msra.mxu0 0.0
      %1363 = vmatprep.subr.mxu0 0.0
      %1364 = vmatpush1.msra.mxu0 0.0
      %1365 = vmatprep.subr.mxu0 0.0
      %1366 = vmatpush1.msra.mxu0 0.0
      %1367 = vmatprep.subr.mxu0 0.0
      %1368 = vmatpush1.msra.mxu0 0.0
      %1369 = vmatprep.subr.mxu0 0.0
      %1370 = vmatpush1.msra.mxu0 0.0
      %1371 = vmatprep.subr.mxu0 0.0
      %1372 = vmatpush1.msra.mxu0 0.0
      %1373 = vmatprep.subr.mxu0 0.0
      %1374 = vmatpush1.msra.mxu0 0.0
      %1375 = vmatprep.subr.mxu0 0.0
      %1376 = vmatpush1.msra.mxu0 0.0
      %1377 = vmatprep.subr.mxu0 0.0
      %1378 = vmatpush1.msra.mxu0 0.0
      %1379 = vmatprep.subr.mxu0 0.0
      %1380 = vmatpush1.msra.mxu0 0.0
      %1381 = vmatprep.subr.mxu0 0.0
      %1382 = vmatpush1.msra.mxu0 0.0
      %1383 = vmatprep.subr.mxu0 0.0
      %1384 = vmatpush1.msra.mxu0 0.0
      %1385 = vmatprep.subr.mxu0 0.0
      %1386 = vmatpush1.msra.mxu0 0.0
      %1387 = vmatprep.subr.mxu0 0.0
      %1388 = vmatpush1.msra.mxu0 0.0
      %1389 = vmatprep.subr.mxu0 0.0
      %1390 = vmatpush1.msra.mxu0 0.0
      %1391 = vmatprep.subr.mxu0 0.0
      %1392 = vmatpush1.msra.mxu0 0.0
      %1393 = vmatprep.subr.mxu0 0.0
      %1394 = vmatpush1.msra.mxu0 0.0
      %1395 = vmatprep.subr.mxu0 0.0
      %1396 = vmatpush1.msra.mxu0 0.0
      %1397 = vmatprep.subr.mxu0 0.0
      %1398 = vmatpush1.msra.mxu0 0.0
      %1399 = vmatprep.subr.mxu0 0.0
      %1400 = vmatpush1.msra.mxu0 0.0
      %1401 = vmatprep.subr.mxu0 0.0
      %1402 = vmatpush1.msra.mxu0 0.0
      %1403 = vmatprep.subr.mxu0 0.0
      %1404 = vmatpush1.msra.mxu0 0.0
      %1405 = vmatprep.subr.mxu0 0.0
      %1406 = vmatpush1.msra.mxu0 0.0
      %1407 = vmatprep.subr.mxu0 0.0
      %1408 = vmatpush1.msra.mxu0 0.0
      %1409 = vmatprep.mubr.f32.mxu0 0.0
      %1410 = vmatmul.mubr.f32.gmra.mrb[0].mxu0 %v1338
      %v1411 = vpop.f32.mrb[0].mxu0
      %v1412 = vadd.f32 %v1333, %v1411
      %v1413 = vpop.f32.mrb[0].mxu0
      %v1414 = vadd.f32 %v1335, %v1413
      %1415 = vdwg.mxu0
      %v1416 = vmul.f32 %v1412, %v340
      %v1417 = vmul.f32 %v1414, %v341
      %v1418 = vadd.f32 %v1237, %v1416
      %v1419 = vadd.f32 %v1238, %v1417
      %1420 = vrot.lane.b32.xlu0 %v342, 113
      %v1421 = vpop.permute.xlu0 %1420
      %1422 = vrot.lane.b32.xlu0 %v352, 113
      %v1423 = vpop.permute.xlu0 %1422
      %vm1424 = vcmask 924672
      %v1425 = vsel %vm1424, %v1421, %v1423
      %v1427 = vsel %vm1424, %v1423, 0.0
      %s1428 = scalar_lea.vmem %s2, 24
      %v1429 = vld [vmem:[%s1428] sm:$0xf]
      %1430 = vrot.lane.b32.xlu0 %v343, 113
      %v1431 = vpop.permute.xlu0 %1430
      %1432 = vrot.lane.b32.xlu0 %v363, 113
      %v1433 = vpop.permute.xlu0 %1432
      %v1434 = vsel %vm1424, %v1431, %v1433
      %v1436 = vsel %vm1424, %v1433, 0.0
      %s1437 = scalar_lea.vmem %s3, 24
      %v1438 = vld [vmem:[%s1437] sm:$0xf]
      %v1440 = vsel %vm372, %v1438, 0
      %v1442 = vsel %vm376, %v1434, 0
      %v1445 = vsel %vm376, %v1436, 0
      %1447 = vmatprep.subr.mxu0 %v1445
      %1448 = vmatpush1.msra.mxu0 %v1442
      %1449 = vmatprep.subr.mxu0 0.0
      %1450 = vmatpush1.msra.mxu0 0.0
      %1451 = vmatprep.subr.mxu0 0.0
      %1452 = vmatpush1.msra.mxu0 0.0
      %1453 = vmatprep.subr.mxu0 0.0
      %1454 = vmatpush1.msra.mxu0 0.0
      %1455 = vmatprep.subr.mxu0 0.0
      %1456 = vmatpush1.msra.mxu0 0.0
      %1457 = vmatprep.subr.mxu0 0.0
      %1458 = vmatpush1.msra.mxu0 0.0
      %1459 = vmatprep.subr.mxu0 0.0
      %1460 = vmatpush1.msra.mxu0 0.0
      %1461 = vmatprep.subr.mxu0 0.0
      %1462 = vmatpush1.msra.mxu0 0.0
      %1463 = vmatprep.subr.mxu0 0.0
      %1464 = vmatpush1.msra.mxu0 0.0
      %1465 = vmatprep.subr.mxu0 0.0
      %1466 = vmatpush1.msra.mxu0 0.0
      %1467 = vmatprep.subr.mxu0 0.0
      %1468 = vmatpush1.msra.mxu0 0.0
      %1469 = vmatprep.subr.mxu0 0.0
      %1470 = vmatpush1.msra.mxu0 0.0
      %1471 = vmatprep.subr.mxu0 0.0
      %1472 = vmatpush1.msra.mxu0 0.0
      %1473 = vmatprep.subr.mxu0 0.0
      %1474 = vmatpush1.msra.mxu0 0.0
      %1475 = vmatprep.subr.mxu0 0.0
      %1476 = vmatpush1.msra.mxu0 0.0
      %1477 = vmatprep.subr.mxu0 0.0
      %1478 = vmatpush1.msra.mxu0 0.0
      %1479 = vmatprep.subr.mxu0 0.0
      %1480 = vmatpush1.msra.mxu0 0.0
      %1481 = vmatprep.subr.mxu0 0.0
      %1482 = vmatpush1.msra.mxu0 0.0
      %1483 = vmatprep.subr.mxu0 0.0
      %1484 = vmatpush1.msra.mxu0 0.0
      %1485 = vmatprep.subr.mxu0 0.0
      %1486 = vmatpush1.msra.mxu0 0.0
      %1487 = vmatprep.subr.mxu0 0.0
      %1488 = vmatpush1.msra.mxu0 0.0
      %1489 = vmatprep.subr.mxu0 0.0
      %1490 = vmatpush1.msra.mxu0 0.0
      %1491 = vmatprep.subr.mxu0 0.0
      %1492 = vmatpush1.msra.mxu0 0.0
      %1493 = vmatprep.subr.mxu0 0.0
      %1494 = vmatpush1.msra.mxu0 0.0
      %1495 = vmatprep.subr.mxu0 0.0
      %1496 = vmatpush1.msra.mxu0 0.0
      %1497 = vmatprep.subr.mxu0 0.0
      %1498 = vmatpush1.msra.mxu0 0.0
      %1499 = vmatprep.subr.mxu0 0.0
      %1500 = vmatpush1.msra.mxu0 0.0
      %1501 = vmatprep.subr.mxu0 0.0
      %1502 = vmatpush1.msra.mxu0 0.0
      %1503 = vmatprep.subr.mxu0 0.0
      %1504 = vmatpush1.msra.mxu0 0.0
      %1505 = vmatprep.subr.mxu0 0.0
      %1506 = vmatpush1.msra.mxu0 0.0
      %1507 = vmatprep.subr.mxu0 0.0
      %1508 = vmatpush1.msra.mxu0 0.0
      %1509 = vmatprep.subr.mxu0 0.0
      %1510 = vmatpush1.msra.mxu0 0.0
      %1511 = vmatprep.mubr.f32.mxu0 0.0
      %1512 = vmatmul.mubr.f32.gmra.mrb[0].mxu0 %v1440
      %v1513 = vpop.f32.mrb[0].mxu0
      %v1514 = vadd.f32 0.0, %v1513
      %v1515 = vpop.f32.mrb[0].mxu0
      %v1516 = vadd.f32 0.0, %v1515
      %1517 = vdwg.mxu0
      %v1519 = vsel %vm372, %v1429, 0
      %v1521 = vsel %vm376, %v1425, 0
      %v1524 = vsel %vm376, %v1427, 0
      %1526 = vmatprep.subr.mxu0 %v1524
      %1527 = vmatpush1.msra.mxu0 %v1521
      %1528 = vmatprep.subr.mxu0 0.0
      %1529 = vmatpush1.msra.mxu0 0.0
      %1530 = vmatprep.subr.mxu0 0.0
      %1531 = vmatpush1.msra.mxu0 0.0
      %1532 = vmatprep.subr.mxu0 0.0
      %1533 = vmatpush1.msra.mxu0 0.0
      %1534 = vmatprep.subr.mxu0 0.0
      %1535 = vmatpush1.msra.mxu0 0.0
      %1536 = vmatprep.subr.mxu0 0.0
      %1537 = vmatpush1.msra.mxu0 0.0
      %1538 = vmatprep.subr.mxu0 0.0
      %1539 = vmatpush1.msra.mxu0 0.0
      %1540 = vmatprep.subr.mxu0 0.0
      %1541 = vmatpush1.msra.mxu0 0.0
      %1542 = vmatprep.subr.mxu0 0.0
      %1543 = vmatpush1.msra.mxu0 0.0
      %1544 = vmatprep.subr.mxu0 0.0
      %1545 = vmatpush1.msra.mxu0 0.0
      %1546 = vmatprep.subr.mxu0 0.0
      %1547 = vmatpush1.msra.mxu0 0.0
      %1548 = vmatprep.subr.mxu0 0.0
      %1549 = vmatpush1.msra.mxu0 0.0
      %1550 = vmatprep.subr.mxu0 0.0
      %1551 = vmatpush1.msra.mxu0 0.0
      %1552 = vmatprep.subr.mxu0 0.0
      %1553 = vmatpush1.msra.mxu0 0.0
      %1554 = vmatprep.subr.mxu0 0.0
      %1555 = vmatpush1.msra.mxu0 0.0
      %1556 = vmatprep.subr.mxu0 0.0
      %1557 = vmatpush1.msra.mxu0 0.0
      %1558 = vmatprep.subr.mxu0 0.0
      %1559 = vmatpush1.msra.mxu0 0.0
      %1560 = vmatprep.subr.mxu0 0.0
      %1561 = vmatpush1.msra.mxu0 0.0
      %1562 = vmatprep.subr.mxu0 0.0
      %1563 = vmatpush1.msra.mxu0 0.0
      %1564 = vmatprep.subr.mxu0 0.0
      %1565 = vmatpush1.msra.mxu0 0.0
      %1566 = vmatprep.subr.mxu0 0.0
      %1567 = vmatpush1.msra.mxu0 0.0
      %1568 = vmatprep.subr.mxu0 0.0
      %1569 = vmatpush1.msra.mxu0 0.0
      %1570 = vmatprep.subr.mxu0 0.0
      %1571 = vmatpush1.msra.mxu0 0.0
      %1572 = vmatprep.subr.mxu0 0.0
      %1573 = vmatpush1.msra.mxu0 0.0
      %1574 = vmatprep.subr.mxu0 0.0
      %1575 = vmatpush1.msra.mxu0 0.0
      %1576 = vmatprep.subr.mxu0 0.0
      %1577 = vmatpush1.msra.mxu0 0.0
      %1578 = vmatprep.subr.mxu0 0.0
      %1579 = vmatpush1.msra.mxu0 0.0
      %1580 = vmatprep.subr.mxu0 0.0
      %1581 = vmatpush1.msra.mxu0 0.0
      %1582 = vmatprep.subr.mxu0 0.0
      %1583 = vmatpush1.msra.mxu0 0.0
      %1584 = vmatprep.subr.mxu0 0.0
      %1585 = vmatpush1.msra.mxu0 0.0
      %1586 = vmatprep.subr.mxu0 0.0
      %1587 = vmatpush1.msra.mxu0 0.0
      %1588 = vmatprep.subr.mxu0 0.0
      %1589 = vmatpush1.msra.mxu0 0.0
      %1590 = vmatprep.mubr.f32.mxu0 0.0
      %1591 = vmatmul.mubr.f32.gmra.mrb[0].mxu0 %v1519
      %v1592 = vpop.f32.mrb[0].mxu0
      %v1593 = vadd.f32 %v1514, %v1592
      %v1594 = vpop.f32.mrb[0].mxu0
      %v1595 = vadd.f32 %v1516, %v1594
      %1596 = vdwg.mxu0
      %v1597 = vmul.f32 %v1593, %v334
      %v1598 = vmul.f32 %v1595, %v335
      %v1599 = vadd.f32 %v1418, %v1597
      %v1600 = vadd.f32 %v1419, %v1598
      %1601 = vrot.lane.b32.xlu0 %v342, 112
      %v1602 = vpop.permute.xlu0 %1601
      %1603 = vrot.lane.b32.xlu0 %v352, 112
      %v1604 = vpop.permute.xlu0 %1603
      %vm1605 = vcmask 916480
      %v1606 = vsel %vm1605, %v1602, %v1604
      %v1608 = vsel %vm1605, %v1604, 0.0
      %s1609 = scalar_lea.vmem %s2, 28
      %v1610 = vld [vmem:[%s1609] sm:$0xf]
      %1611 = vrot.lane.b32.xlu0 %v343, 112
      %v1612 = vpop.permute.xlu0 %1611
      %1613 = vrot.lane.b32.xlu0 %v363, 112
      %v1614 = vpop.permute.xlu0 %1613
      %v1615 = vsel %vm1605, %v1612, %v1614
      %v1617 = vsel %vm1605, %v1614, 0.0
      %s1618 = scalar_lea.vmem %s3, 28
      %v1619 = vld [vmem:[%s1618] sm:$0xf]
      %v1621 = vsel %vm372, %v1619, 0
      %v1623 = vsel %vm376, %v1615, 0
      %v1626 = vsel %vm376, %v1617, 0
      %1628 = vmatprep.subr.mxu0 %v1626
      %1629 = vmatpush1.msra.mxu0 %v1623
      %1630 = vmatprep.subr.mxu0 0.0
      %1631 = vmatpush1.msra.mxu0 0.0
      %1632 = vmatprep.subr.mxu0 0.0
      %1633 = vmatpush1.msra.mxu0 0.0
      %1634 = vmatprep.subr.mxu0 0.0
      %1635 = vmatpush1.msra.mxu0 0.0
      %1636 = vmatprep.subr.mxu0 0.0
      %1637 = vmatpush1.msra.mxu0 0.0
      %1638 = vmatprep.subr.mxu0 0.0
      %1639 = vmatpush1.msra.mxu0 0.0
      %1640 = vmatprep.subr.mxu0 0.0
      %1641 = vmatpush1.msra.mxu0 0.0
      %1642 = vmatprep.subr.mxu0 0.0
      %1643 = vmatpush1.msra.mxu0 0.0
      %1644 = vmatprep.subr.mxu0 0.0
      %1645 = vmatpush1.msra.mxu0 0.0
      %1646 = vmatprep.subr.mxu0 0.0
      %1647 = vmatpush1.msra.mxu0 0.0
      %1648 = vmatprep.subr.mxu0 0.0
      %1649 = vmatpush1.msra.mxu0 0.0
      %1650 = vmatprep.subr.mxu0 0.0
      %1651 = vmatpush1.msra.mxu0 0.0
      %1652 = vmatprep.subr.mxu0 0.0
      %1653 = vmatpush1.msra.mxu0 0.0
      %1654 = vmatprep.subr.mxu0 0.0
      %1655 = vmatpush1.msra.mxu0 0.0
      %1656 = vmatprep.subr.mxu0 0.0
      %1657 = vmatpush1.msra.mxu0 0.0
      %1658 = vmatprep.subr.mxu0 0.0
      %1659 = vmatpush1.msra.mxu0 0.0
      %1660 = vmatprep.subr.mxu0 0.0
      %1661 = vmatpush1.msra.mxu0 0.0
      %1662 = vmatprep.subr.mxu0 0.0
      %1663 = vmatpush1.msra.mxu0 0.0
      %1664 = vmatprep.subr.mxu0 0.0
      %1665 = vmatpush1.msra.mxu0 0.0
      %1666 = vmatprep.subr.mxu0 0.0
      %1667 = vmatpush1.msra.mxu0 0.0
      %1668 = vmatprep.subr.mxu0 0.0
      %1669 = vmatpush1.msra.mxu0 0.0
      %1670 = vmatprep.subr.mxu0 0.0
      %1671 = vmatpush1.msra.mxu0 0.0
      %1672 = vmatprep.subr.mxu0 0.0
      %1673 = vmatpush1.msra.mxu0 0.0
      %1674 = vmatprep.subr.mxu0 0.0
      %1675 = vmatpush1.msra.mxu0 0.0
      %1676 = vmatprep.subr.mxu0 0.0
      %1677 = vmatpush1.msra.mxu0 0.0
      %1678 = vmatprep.subr.mxu0 0.0
      %1679 = vmatpush1.msra.mxu0 0.0
      %1680 = vmatprep.subr.mxu0 0.0
      %1681 = vmatpush1.msra.mxu0 0.0
      %1682 = vmatprep.subr.mxu0 0.0
      %1683 = vmatpush1.msra.mxu0 0.0
      %1684 = vmatprep.subr.mxu0 0.0
      %1685 = vmatpush1.msra.mxu0 0.0
      %1686 = vmatprep.subr.mxu0 0.0
      %1687 = vmatpush1.msra.mxu0 0.0
      %1688 = vmatprep.subr.mxu0 0.0
      %1689 = vmatpush1.msra.mxu0 0.0
      %1690 = vmatprep.subr.mxu0 0.0
      %1691 = vmatpush1.msra.mxu0 0.0
      %1692 = vmatprep.mubr.f32.mxu0 0.0
      %1693 = vmatmul.mubr.f32.gmra.mrb[0].mxu0 %v1621
      %v1694 = vpop.f32.mrb[0].mxu0
      %v1695 = vadd.f32 0.0, %v1694
      %v1696 = vpop.f32.mrb[0].mxu0
      %v1697 = vadd.f32 0.0, %v1696
      %1698 = vdwg.mxu0
      %v1700 = vsel %vm372, %v1610, 0
      %v1702 = vsel %vm376, %v1606, 0
      %v1705 = vsel %vm376, %v1608, 0
      %1707 = vmatprep.subr.mxu0 %v1705
      %1708 = vmatpush1.msra.mxu0 %v1702
      %1709 = vmatprep.subr.mxu0 0.0
      %1710 = vmatpush1.msra.mxu0 0.0
      %1711 = vmatprep.subr.mxu0 0.0
      %1712 = vmatpush1.msra.mxu0 0.0
      %1713 = vmatprep.subr.mxu0 0.0
      %1714 = vmatpush1.msra.mxu0 0.0
      %1715 = vmatprep.subr.mxu0 0.0
      %1716 = vmatpush1.msra.mxu0 0.0
      %1717 = vmatprep.subr.mxu0 0.0
      %1718 = vmatpush1.msra.mxu0 0.0
      %1719 = vmatprep.subr.mxu0 0.0
      %1720 = vmatpush1.msra.mxu0 0.0
      %1721 = vmatprep.subr.mxu0 0.0
      %1722 = vmatpush1.msra.mxu0 0.0
      %1723 = vmatprep.subr.mxu0 0.0
      %1724 = vmatpush1.msra.mxu0 0.0
      %1725 = vmatprep.subr.mxu0 0.0
      %1726 = vmatpush1.msra.mxu0 0.0
      %1727 = vmatprep.subr.mxu0 0.0
      %1728 = vmatpush1.msra.mxu0 0.0
      %1729 = vmatprep.subr.mxu0 0.0
      %1730 = vmatpush1.msra.mxu0 0.0
      %1731 = vmatprep.subr.mxu0 0.0
      %1732 = vmatpush1.msra.mxu0 0.0
      %1733 = vmatprep.subr.mxu0 0.0
      %1734 = vmatpush1.msra.mxu0 0.0
      %1735 = vmatprep.subr.mxu0 0.0
      %1736 = vmatpush1.msra.mxu0 0.0
      %1737 = vmatprep.subr.mxu0 0.0
      %1738 = vmatpush1.msra.mxu0 0.0
      %1739 = vmatprep.subr.mxu0 0.0
      %1740 = vmatpush1.msra.mxu0 0.0
      %1741 = vmatprep.subr.mxu0 0.0
      %1742 = vmatpush1.msra.mxu0 0.0
      %1743 = vmatprep.subr.mxu0 0.0
      %1744 = vmatpush1.msra.mxu0 0.0
      %1745 = vmatprep.subr.mxu0 0.0
      %1746 = vmatpush1.msra.mxu0 0.0
      %1747 = vmatprep.subr.mxu0 0.0
      %1748 = vmatpush1.msra.mxu0 0.0
      %1749 = vmatprep.subr.mxu0 0.0
      %1750 = vmatpush1.msra.mxu0 0.0
      %1751 = vmatprep.subr.mxu0 0.0
      %1752 = vmatpush1.msra.mxu0 0.0
      %1753 = vmatprep.subr.mxu0 0.0
      %1754 = vmatpush1.msra.mxu0 0.0
      %1755 = vmatprep.subr.mxu0 0.0
      %1756 = vmatpush1.msra.mxu0 0.0
      %1757 = vmatprep.subr.mxu0 0.0
      %1758 = vmatpush1.msra.mxu0 0.0
      %1759 = vmatprep.subr.mxu0 0.0
      %1760 = vmatpush1.msra.mxu0 0.0
      %1761 = vmatprep.subr.mxu0 0.0
      %1762 = vmatpush1.msra.mxu0 0.0
      %1763 = vmatprep.subr.mxu0 0.0
      %1764 = vmatpush1.msra.mxu0 0.0
      %1765 = vmatprep.subr.mxu0 0.0
      %1766 = vmatpush1.msra.mxu0 0.0
      %1767 = vmatprep.subr.mxu0 0.0
      %1768 = vmatpush1.msra.mxu0 0.0
      %1769 = vmatprep.subr.mxu0 0.0
      %1770 = vmatpush1.msra.mxu0 0.0
      %1771 = vmatprep.mubr.f32.mxu0 0.0
      %1772 = vmatmul.mubr.f32.gmra.mrb[0].mxu0 %v1700
      %v1773 = vpop.f32.mrb[0].mxu0
      %v1774 = vadd.f32 %v1695, %v1773
      %v1775 = vpop.f32.mrb[0].mxu0
      %v1776 = vadd.f32 %v1697, %v1775
      %1777 = vdwg.mxu0
      %v1778 = vadd.f32 %v1599, %v1774
      %v1779 = vadd.f32 %v1600, %v1776
      %1780 = vrot.lane.b32.xlu0 %v342, 111
      %v1781 = vpop.permute.xlu0 %1780
      %1782 = vrot.lane.b32.xlu0 %v352, 111
      %v1783 = vpop.permute.xlu0 %1782
      %vm1784 = vcmask 908288
      %v1785 = vsel %vm1784, %v1781, %v1783
      %v1787 = vsel %vm1784, %v1783, 0.0
      %s1788 = scalar_lea.vmem %s2, 32
      %v1789 = vld [vmem:[%s1788] sm:$0xf]
      %1790 = vrot.lane.b32.xlu0 %v343, 111
      %v1791 = vpop.permute.xlu0 %1790
      %1792 = vrot.lane.b32.xlu0 %v363, 111
      %v1793 = vpop.permute.xlu0 %1792
      %v1794 = vsel %vm1784, %v1791, %v1793
      %v1796 = vsel %vm1784, %v1793, 0.0
      %s1797 = scalar_lea.vmem %s3, 32
      %v1798 = vld [vmem:[%s1797] sm:$0xf]
      %v1800 = vsel %vm372, %v1798, 0
      %v1802 = vsel %vm376, %v1794, 0
      %v1805 = vsel %vm376, %v1796, 0
      %1807 = vmatprep.subr.mxu0 %v1805
      %1808 = vmatpush1.msra.mxu0 %v1802
      %1809 = vmatprep.subr.mxu0 0.0
      %1810 = vmatpush1.msra.mxu0 0.0
      %1811 = vmatprep.subr.mxu0 0.0
      %1812 = vmatpush1.msra.mxu0 0.0
      %1813 = vmatprep.subr.mxu0 0.0
      %1814 = vmatpush1.msra.mxu0 0.0
      %1815 = vmatprep.subr.mxu0 0.0
      %1816 = vmatpush1.msra.mxu0 0.0
      %1817 = vmatprep.subr.mxu0 0.0
      %1818 = vmatpush1.msra.mxu0 0.0
      %1819 = vmatprep.subr.mxu0 0.0
      %1820 = vmatpush1.msra.mxu0 0.0
      %1821 = vmatprep.subr.mxu0 0.0
      %1822 = vmatpush1.msra.mxu0 0.0
      %1823 = vmatprep.subr.mxu0 0.0
      %1824 = vmatpush1.msra.mxu0 0.0
      %1825 = vmatprep.subr.mxu0 0.0
      %1826 = vmatpush1.msra.mxu0 0.0
      %1827 = vmatprep.subr.mxu0 0.0
      %1828 = vmatpush1.msra.mxu0 0.0
      %1829 = vmatprep.subr.mxu0 0.0
      %1830 = vmatpush1.msra.mxu0 0.0
      %1831 = vmatprep.subr.mxu0 0.0
      %1832 = vmatpush1.msra.mxu0 0.0
      %1833 = vmatprep.subr.mxu0 0.0
      %1834 = vmatpush1.msra.mxu0 0.0
      %1835 = vmatprep.subr.mxu0 0.0
      %1836 = vmatpush1.msra.mxu0 0.0
      %1837 = vmatprep.subr.mxu0 0.0
      %1838 = vmatpush1.msra.mxu0 0.0
      %1839 = vmatprep.subr.mxu0 0.0
      %1840 = vmatpush1.msra.mxu0 0.0
      %1841 = vmatprep.subr.mxu0 0.0
      %1842 = vmatpush1.msra.mxu0 0.0
      %1843 = vmatprep.subr.mxu0 0.0
      %1844 = vmatpush1.msra.mxu0 0.0
      %1845 = vmatprep.subr.mxu0 0.0
      %1846 = vmatpush1.msra.mxu0 0.0
      %1847 = vmatprep.subr.mxu0 0.0
      %1848 = vmatpush1.msra.mxu0 0.0
      %1849 = vmatprep.subr.mxu0 0.0
      %1850 = vmatpush1.msra.mxu0 0.0
      %1851 = vmatprep.subr.mxu0 0.0
      %1852 = vmatpush1.msra.mxu0 0.0
      %1853 = vmatprep.subr.mxu0 0.0
      %1854 = vmatpush1.msra.mxu0 0.0
      %1855 = vmatprep.subr.mxu0 0.0
      %1856 = vmatpush1.msra.mxu0 0.0
      %1857 = vmatprep.subr.mxu0 0.0
      %1858 = vmatpush1.msra.mxu0 0.0
      %1859 = vmatprep.subr.mxu0 0.0
      %1860 = vmatpush1.msra.mxu0 0.0
      %1861 = vmatprep.subr.mxu0 0.0
      %1862 = vmatpush1.msra.mxu0 0.0
      %1863 = vmatprep.subr.mxu0 0.0
      %1864 = vmatpush1.msra.mxu0 0.0
      %1865 = vmatprep.subr.mxu0 0.0
      %1866 = vmatpush1.msra.mxu0 0.0
      %1867 = vmatprep.subr.mxu0 0.0
      %1868 = vmatpush1.msra.mxu0 0.0
      %1869 = vmatprep.subr.mxu0 0.0
      %1870 = vmatpush1.msra.mxu0 0.0
      %1871 = vmatprep.mubr.f32.mxu0 0.0
      %1872 = vmatmul.mubr.f32.gmra.mrb[0].mxu0 %v1800
      %v1873 = vpop.f32.mrb[0].mxu0
      %v1874 = vadd.f32 0.0, %v1873
      %v1875 = vpop.f32.mrb[0].mxu0
      %v1876 = vadd.f32 0.0, %v1875
      %1877 = vdwg.mxu0
      %v1879 = vsel %vm372, %v1789, 0
      %v1881 = vsel %vm376, %v1785, 0
      %v1884 = vsel %vm376, %v1787, 0
      %1886 = vmatprep.subr.mxu0 %v1884
      %1887 = vmatpush1.msra.mxu0 %v1881
      %1888 = vmatprep.subr.mxu0 0.0
      %1889 = vmatpush1.msra.mxu0 0.0
      %1890 = vmatprep.subr.mxu0 0.0
      %1891 = vmatpush1.msra.mxu0 0.0
      %1892 = vmatprep.subr.mxu0 0.0
      %1893 = vmatpush1.msra.mxu0 0.0
      %1894 = vmatprep.subr.mxu0 0.0
      %1895 = vmatpush1.msra.mxu0 0.0
      %1896 = vmatprep.subr.mxu0 0.0
      %1897 = vmatpush1.msra.mxu0 0.0
      %1898 = vmatprep.subr.mxu0 0.0
      %1899 = vmatpush1.msra.mxu0 0.0
      %1900 = vmatprep.subr.mxu0 0.0
      %1901 = vmatpush1.msra.mxu0 0.0
      %1902 = vmatprep.subr.mxu0 0.0
      %1903 = vmatpush1.msra.mxu0 0.0
      %1904 = vmatprep.subr.mxu0 0.0
      %1905 = vmatpush1.msra.mxu0 0.0
      %1906 = vmatprep.subr.mxu0 0.0
      %1907 = vmatpush1.msra.mxu0 0.0
      %1908 = vmatprep.subr.mxu0 0.0
      %1909 = vmatpush1.msra.mxu0 0.0
      %1910 = vmatprep.subr.mxu0 0.0
      %1911 = vmatpush1.msra.mxu0 0.0
      %1912 = vmatprep.subr.mxu0 0.0
      %1913 = vmatpush1.msra.mxu0 0.0
      %1914 = vmatprep.subr.mxu0 0.0
      %1915 = vmatpush1.msra.mxu0 0.0
      %1916 = vmatprep.subr.mxu0 0.0
      %1917 = vmatpush1.msra.mxu0 0.0
      %1918 = vmatprep.subr.mxu0 0.0
      %1919 = vmatpush1.msra.mxu0 0.0
      %1920 = vmatprep.subr.mxu0 0.0
      %1921 = vmatpush1.msra.mxu0 0.0
      %1922 = vmatprep.subr.mxu0 0.0
      %1923 = vmatpush1.msra.mxu0 0.0
      %1924 = vmatprep.subr.mxu0 0.0
      %1925 = vmatpush1.msra.mxu0 0.0
      %1926 = vmatprep.subr.mxu0 0.0
      %1927 = vmatpush1.msra.mxu0 0.0
      %1928 = vmatprep.subr.mxu0 0.0
      %1929 = vmatpush1.msra.mxu0 0.0
      %1930 = vmatprep.subr.mxu0 0.0
      %1931 = vmatpush1.msra.mxu0 0.0
      %1932 = vmatprep.subr.mxu0 0.0
      %1933 = vmatpush1.msra.mxu0 0.0
      %1934 = vmatprep.subr.mxu0 0.0
      %1935 = vmatpush1.msra.mxu0 0.0
      %1936 = vmatprep.subr.mxu0 0.0
      %1937 = vmatpush1.msra.mxu0 0.0
      %1938 = vmatprep.subr.mxu0 0.0
      %1939 = vmatpush1.msra.mxu0 0.0
      %1940 = vmatprep.subr.mxu0 0.0
      %1941 = vmatpush1.msra.mxu0 0.0
      %1942 = vmatprep.subr.mxu0 0.0
      %1943 = vmatpush1.msra.mxu0 0.0
      %1944 = vmatprep.subr.mxu0 0.0
      %1945 = vmatpush1.msra.mxu0 0.0
      %1946 = vmatprep.subr.mxu0 0.0
      %1947 = vmatpush1.msra.mxu0 0.0
      %1948 = vmatprep.subr.mxu0 0.0
      %1949 = vmatpush1.msra.mxu0 0.0
      %1950 = vmatprep.mubr.f32.mxu0 0.0
      %1951 = vmatmul.mubr.f32.gmra.mrb[0].mxu0 %v1879
      %v1952 = vpop.f32.mrb[0].mxu0
      %v1953 = vadd.f32 %v1874, %v1952
      %v1954 = vpop.f32.mrb[0].mxu0
      %v1955 = vadd.f32 %v1876, %v1954
      %1956 = vdwg.mxu0
      %v1957 = vmul.f32 %v1953, %v340
      %v1958 = vmul.f32 %v1955, %v341
      %v1959 = vadd.f32 %v1778, %v1957
      %v1960 = vadd.f32 %v1779, %v1958
      %v1961 = vmax.f32 %v1959, 0.0
      %v1962 = vmax.f32 %v1960, 0.0
      %v1963 = vld [vmem:[%s6] sm:$0xf]
      %1965 = vset.pattern.permute.xlu0 0
      %1966 = vperm.xlu0 %1965, %v1963
      %v1967 = vpop.permute.xlu0 %1966
      %v1969 = vadd.f32 %v1967, 0.0
      %1972 = vrot.lane.b32.xlu0 %v1961, 17
      %v1973 = vpop.permute.xlu0 %1972
      %1974 = vrot.lane.b32.xlu0 %v1962, 17
      %v1975 = vpop.permute.xlu0 %1974
      %v1976 = vsel %vm357, %v1973, %v1975
      %v1978 = vsel %vm357, 0.0, %v1973
      %v1979 = vld [vmem:[%s5] sm:$0xf]
      %v1981 = vsel %vm372, %v1979, 0
      %v1984 = vsel %vm376, %v1978, 0
      %v1986 = vsel %vm376, %v1976, 0
      %1988 = vmatprep.subr.mxu0 %v1986
      %1989 = vmatpush1.msra.mxu0 %v1984
      %1990 = vmatprep.subr.mxu0 0.0
      %1991 = vmatpush1.msra.mxu0 0.0
      %1992 = vmatprep.subr.mxu0 0.0
      %1993 = vmatpush1.msra.mxu0 0.0
      %1994 = vmatprep.subr.mxu0 0.0
      %1995 = vmatpush1.msra.mxu0 0.0
      %1996 = vmatprep.subr.mxu0 0.0
      %1997 = vmatpush1.msra.mxu0 0.0
      %1998 = vmatprep.subr.mxu0 0.0
      %1999 = vmatpush1.msra.mxu0 0.0
      %2000 = vmatprep.subr.mxu0 0.0
      %2001 = vmatpush1.msra.mxu0 0.0
      %2002 = vmatprep.subr.mxu0 0.0
      %2003 = vmatpush1.msra.mxu0 0.0
      %2004 = vmatprep.subr.mxu0 0.0
      %2005 = vmatpush1.msra.mxu0 0.0
      %2006 = vmatprep.subr.mxu0 0.0
      %2007 = vmatpush1.msra.mxu0 0.0
      %2008 = vmatprep.subr.mxu0 0.0
      %2009 = vmatpush1.msra.mxu0 0.0
      %2010 = vmatprep.subr.mxu0 0.0
      %2011 = vmatpush1.msra.mxu0 0.0
      %2012 = vmatprep.subr.mxu0 0.0
      %2013 = vmatpush1.msra.mxu0 0.0
      %2014 = vmatprep.subr.mxu0 0.0
      %2015 = vmatpush1.msra.mxu0 0.0
      %2016 = vmatprep.subr.mxu0 0.0
      %2017 = vmatpush1.msra.mxu0 0.0
      %2018 = vmatprep.subr.mxu0 0.0
      %2019 = vmatpush1.msra.mxu0 0.0
      %2020 = vmatprep.subr.mxu0 0.0
      %2021 = vmatpush1.msra.mxu0 0.0
      %2022 = vmatprep.subr.mxu0 0.0
      %2023 = vmatpush1.msra.mxu0 0.0
      %2024 = vmatprep.subr.mxu0 0.0
      %2025 = vmatpush1.msra.mxu0 0.0
      %2026 = vmatprep.subr.mxu0 0.0
      %2027 = vmatpush1.msra.mxu0 0.0
      %2028 = vmatprep.subr.mxu0 0.0
      %2029 = vmatpush1.msra.mxu0 0.0
      %2030 = vmatprep.subr.mxu0 0.0
      %2031 = vmatpush1.msra.mxu0 0.0
      %2032 = vmatprep.subr.mxu0 0.0
      %2033 = vmatpush1.msra.mxu0 0.0
      %2034 = vmatprep.subr.mxu0 0.0
      %2035 = vmatpush1.msra.mxu0 0.0
      %2036 = vmatprep.subr.mxu0 0.0
      %2037 = vmatpush1.msra.mxu0 0.0
      %2038 = vmatprep.subr.mxu0 0.0
      %2039 = vmatpush1.msra.mxu0 0.0
      %2040 = vmatprep.subr.mxu0 0.0
      %2041 = vmatpush1.msra.mxu0 0.0
      %2042 = vmatprep.subr.mxu0 0.0
      %2043 = vmatpush1.msra.mxu0 0.0
      %2044 = vmatprep.subr.mxu0 0.0
      %2045 = vmatpush1.msra.mxu0 0.0
      %2046 = vmatprep.subr.mxu0 0.0
      %2047 = vmatpush1.msra.mxu0 0.0
      %2048 = vmatprep.subr.mxu0 0.0
      %2049 = vmatpush1.msra.mxu0 0.0
      %2050 = vmatprep.subr.mxu0 0.0
      %2051 = vmatpush1.msra.mxu0 0.0
      %2052 = vmatprep.mubr.f32.mxu0 0.0
      %2053 = vmatmul.mubr.f32.gmra.mrb[0].mxu0 %v1981
      %v2054 = vpop.f32.mrb[0].mxu0
      %v2055 = vadd.f32 0.0, %v2054
      %v2056 = vpop.f32.mrb[0].mxu0
      %v2057 = vadd.f32 0.0, %v2056
      %2058 = vdwg.mxu0
      %v2059 = vmul.f32 %v2055, %v334
      %v2060 = vmul.f32 %v2057, %v335
      %v2061 = vadd.f32 %v1969, %v2059
      %v2062 = vadd.f32 %v1969, %v2060
      %2063 = vrot.lane.b32.xlu0 %v1961, 16
      %v2064 = vpop.permute.xlu0 %2063
      %2065 = vrot.lane.b32.xlu0 %v1962, 16
      %v2066 = vpop.permute.xlu0 %2065
      %v2067 = vsel %vm540, %v2064, %v2066
      %v2069 = vsel %vm540, 0.0, %v2064
      %s2070 = scalar_lea.vmem %s5, 4
      %v2071 = vld [vmem:[%s2070] sm:$0xf]
      %v2073 = vsel %vm372, %v2071, 0
      %v2076 = vsel %vm376, %v2069, 0
      %v2078 = vsel %vm376, %v2067, 0
      %2080 = vmatprep.subr.mxu0 %v2078
      %2081 = vmatpush1.msra.mxu0 %v2076
      %2082 = vmatprep.subr.mxu0 0.0
      %2083 = vmatpush1.msra.mxu0 0.0
      %2084 = vmatprep.subr.mxu0 0.0
      %2085 = vmatpush1.msra.mxu0 0.0
      %2086 = vmatprep.subr.mxu0 0.0
      %2087 = vmatpush1.msra.mxu0 0.0
      %2088 = vmatprep.subr.mxu0 0.0
      %2089 = vmatpush1.msra.mxu0 0.0
      %2090 = vmatprep.subr.mxu0 0.0
      %2091 = vmatpush1.msra.mxu0 0.0
      %2092 = vmatprep.subr.mxu0 0.0
      %2093 = vmatpush1.msra.mxu0 0.0
      %2094 = vmatprep.subr.mxu0 0.0
      %2095 = vmatpush1.msra.mxu0 0.0
      %2096 = vmatprep.subr.mxu0 0.0
      %2097 = vmatpush1.msra.mxu0 0.0
      %2098 = vmatprep.subr.mxu0 0.0
      %2099 = vmatpush1.msra.mxu0 0.0
      %2100 = vmatprep.subr.mxu0 0.0
      %2101 = vmatpush1.msra.mxu0 0.0
      %2102 = vmatprep.subr.mxu0 0.0
      %2103 = vmatpush1.msra.mxu0 0.0
      %2104 = vmatprep.subr.mxu0 0.0
      %2105 = vmatpush1.msra.mxu0 0.0
      %2106 = vmatprep.subr.mxu0 0.0
      %2107 = vmatpush1.msra.mxu0 0.0
      %2108 = vmatprep.subr.mxu0 0.0
      %2109 = vmatpush1.msra.mxu0 0.0
      %2110 = vmatprep.subr.mxu0 0.0
      %2111 = vmatpush1.msra.mxu0 0.0
      %2112 = vmatprep.subr.mxu0 0.0
      %2113 = vmatpush1.msra.mxu0 0.0
      %2114 = vmatprep.subr.mxu0 0.0
      %2115 = vmatpush1.msra.mxu0 0.0
      %2116 = vmatprep.subr.mxu0 0.0
      %2117 = vmatpush1.msra.mxu0 0.0
      %2118 = vmatprep.subr.mxu0 0.0
      %2119 = vmatpush1.msra.mxu0 0.0
      %2120 = vmatprep.subr.mxu0 0.0
      %2121 = vmatpush1.msra.mxu0 0.0
      %2122 = vmatprep.subr.mxu0 0.0
      %2123 = vmatpush1.msra.mxu0 0.0
      %2124 = vmatprep.subr.mxu0 0.0
      %2125 = vmatpush1.msra.mxu0 0.0
      %2126 = vmatprep.subr.mxu0 0.0
      %2127 = vmatpush1.msra.mxu0 0.0
      %2128 = vmatprep.subr.mxu0 0.0
      %2129 = vmatpush1.msra.mxu0 0.0
      %2130 = vmatprep.subr.mxu0 0.0
      %2131 = vmatpush1.msra.mxu0 0.0
      %2132 = vmatprep.subr.mxu0 0.0
      %2133 = vmatpush1.msra.mxu0 0.0
      %2134 = vmatprep.subr.mxu0 0.0
      %2135 = vmatpush1.msra.mxu0 0.0
      %2136 = vmatprep.subr.mxu0 0.0
      %2137 = vmatpush1.msra.mxu0 0.0
      %2138 = vmatprep.subr.mxu0 0.0
      %2139 = vmatpush1.msra.mxu0 0.0
      %2140 = vmatprep.subr.mxu0 0.0
      %2141 = vmatpush1.msra.mxu0 0.0
      %2142 = vmatprep.subr.mxu0 0.0
      %2143 = vmatpush1.msra.mxu0 0.0
      %2144 = vmatprep.mubr.f32.mxu0 0.0
      %2145 = vmatmul.mubr.f32.gmra.mrb[0].mxu0 %v2073
      %v2146 = vpop.f32.mrb[0].mxu0
      %v2147 = vadd.f32 0.0, %v2146
      %v2148 = vpop.f32.mrb[0].mxu0
      %v2149 = vadd.f32 0.0, %v2148
      %2150 = vdwg.mxu0
      %v2151 = vadd.f32 %v2061, %v2147
      %v2152 = vadd.f32 %v2062, %v2149
      %2153 = vrot.lane.b32.xlu0 %v1961, 15
      %v2154 = vpop.permute.xlu0 %2153
      %2155 = vrot.lane.b32.xlu0 %v1962, 15
      %v2156 = vpop.permute.xlu0 %2155
      %v2157 = vsel %vm719, %v2154, %v2156
      %v2159 = vsel %vm719, 0.0, %v2154
      %s2160 = scalar_lea.vmem %s5, 8
      %v2161 = vld [vmem:[%s2160] sm:$0xf]
      %v2163 = vsel %vm372, %v2161, 0
      %v2166 = vsel %vm376, %v2159, 0
      %v2168 = vsel %vm376, %v2157, 0
      %2170 = vmatprep.subr.mxu0 %v2168
      %2171 = vmatpush1.msra.mxu0 %v2166
      %2172 = vmatprep.subr.mxu0 0.0
      %2173 = vmatpush1.msra.mxu0 0.0
      %2174 = vmatprep.subr.mxu0 0.0
      %2175 = vmatpush1.msra.mxu0 0.0
      %2176 = vmatprep.subr.mxu0 0.0
      %2177 = vmatpush1.msra.mxu0 0.0
      %2178 = vmatprep.subr.mxu0 0.0
      %2179 = vmatpush1.msra.mxu0 0.0
      %2180 = vmatprep.subr.mxu0 0.0
      %2181 = vmatpush1.msra.mxu0 0.0
      %2182 = vmatprep.subr.mxu0 0.0
      %2183 = vmatpush1.msra.mxu0 0.0
      %2184 = vmatprep.subr.mxu0 0.0
      %2185 = vmatpush1.msra.mxu0 0.0
      %2186 = vmatprep.subr.mxu0 0.0
      %2187 = vmatpush1.msra.mxu0 0.0
      %2188 = vmatprep.subr.mxu0 0.0
      %2189 = vmatpush1.msra.mxu0 0.0
      %2190 = vmatprep.subr.mxu0 0.0
      %2191 = vmatpush1.msra.mxu0 0.0
      %2192 = vmatprep.subr.mxu0 0.0
      %2193 = vmatpush1.msra.mxu0 0.0
      %2194 = vmatprep.subr.mxu0 0.0
      %2195 = vmatpush1.msra.mxu0 0.0
      %2196 = vmatprep.subr.mxu0 0.0
      %2197 = vmatpush1.msra.mxu0 0.0
      %2198 = vmatprep.subr.mxu0 0.0
      %2199 = vmatpush1.msra.mxu0 0.0
      %2200 = vmatprep.subr.mxu0 0.0
      %2201 = vmatpush1.msra.mxu0 0.0
      %2202 = vmatprep.subr.mxu0 0.0
      %2203 = vmatpush1.msra.mxu0 0.0
      %2204 = vmatprep.subr.mxu0 0.0
      %2205 = vmatpush1.msra.mxu0 0.0
      %2206 = vmatprep.subr.mxu0 0.0
      %2207 = vmatpush1.msra.mxu0 0.0
      %2208 = vmatprep.subr.mxu0 0.0
      %2209 = vmatpush1.msra.mxu0 0.0
      %2210 = vmatprep.subr.mxu0 0.0
      %2211 = vmatpush1.msra.mxu0 0.0
      %2212 = vmatprep.subr.mxu0 0.0
      %2213 = vmatpush1.msra.mxu0 0.0
      %2214 = vmatprep.subr.mxu0 0.0
      %2215 = vmatpush1.msra.mxu0 0.0
      %2216 = vmatprep.subr.mxu0 0.0
      %2217 = vmatpush1.msra.mxu0 0.0
      %2218 = vmatprep.subr.mxu0 0.0
      %2219 = vmatpush1.msra.mxu0 0.0
      %2220 = vmatprep.subr.mxu0 0.0
      %2221 = vmatpush1.msra.mxu0 0.0
      %2222 = vmatprep.subr.mxu0 0.0
      %2223 = vmatpush1.msra.mxu0 0.0
      %2224 = vmatprep.subr.mxu0 0.0
      %2225 = vmatpush1.msra.mxu0 0.0
      %2226 = vmatprep.subr.mxu0 0.0
      %2227 = vmatpush1.msra.mxu0 0.0
      %2228 = vmatprep.subr.mxu0 0.0
      %2229 = vmatpush1.msra.mxu0 0.0
      %2230 = vmatprep.subr.mxu0 0.0
      %2231 = vmatpush1.msra.mxu0 0.0
      %2232 = vmatprep.subr.mxu0 0.0
      %2233 = vmatpush1.msra.mxu0 0.0
      %2234 = vmatprep.mubr.f32.mxu0 0.0
      %2235 = vmatmul.mubr.f32.gmra.mrb[0].mxu0 %v2163
      %v2236 = vpop.f32.mrb[0].mxu0
      %v2237 = vadd.f32 0.0, %v2236
      %v2238 = vpop.f32.mrb[0].mxu0
      %v2239 = vadd.f32 0.0, %v2238
      %2240 = vdwg.mxu0
      %v2241 = vmul.f32 %v2237, %v340
      %v2242 = vmul.f32 %v2239, %v341
      %v2243 = vadd.f32 %v2151, %v2241
      %v2244 = vadd.f32 %v2152, %v2242
      %2245 = vrot.lane.b32.xlu0 %v1961, 1
      %v2246 = vpop.permute.xlu0 %2245
      %2247 = vrot.lane.b32.xlu0 %v1962, 1
      %v2248 = vpop.permute.xlu0 %2247
      %v2249 = vsel %vm900, %v2246, %v2248
      %v2251 = vsel %vm900, 0.0, %v2246
      %s2252 = scalar_lea.vmem %s5, 12
      %v2253 = vld [vmem:[%s2252] sm:$0xf]
      %v2255 = vsel %vm372, %v2253, 0
      %v2258 = vsel %vm376, %v2251, 0
      %v2260 = vsel %vm376, %v2249, 0
      %2262 = vmatprep.subr.mxu0 %v2260
      %2263 = vmatpush1.msra.mxu0 %v2258
      %2264 = vmatprep.subr.mxu0 0.0
      %2265 = vmatpush1.msra.mxu0 0.0
      %2266 = vmatprep.subr.mxu0 0.0
      %2267 = vmatpush1.msra.mxu0 0.0
      %2268 = vmatprep.subr.mxu0 0.0
      %2269 = vmatpush1.msra.mxu0 0.0
      %2270 = vmatprep.subr.mxu0 0.0
      %2271 = vmatpush1.msra.mxu0 0.0
      %2272 = vmatprep.subr.mxu0 0.0
      %2273 = vmatpush1.msra.mxu0 0.0
      %2274 = vmatprep.subr.mxu0 0.0
      %2275 = vmatpush1.msra.mxu0 0.0
      %2276 = vmatprep.subr.mxu0 0.0
      %2277 = vmatpush1.msra.mxu0 0.0
      %2278 = vmatprep.subr.mxu0 0.0
      %2279 = vmatpush1.msra.mxu0 0.0
      %2280 = vmatprep.subr.mxu0 0.0
      %2281 = vmatpush1.msra.mxu0 0.0
      %2282 = vmatprep.subr.mxu0 0.0
      %2283 = vmatpush1.msra.mxu0 0.0
      %2284 = vmatprep.subr.mxu0 0.0
      %2285 = vmatpush1.msra.mxu0 0.0
      %2286 = vmatprep.subr.mxu0 0.0
      %2287 = vmatpush1.msra.mxu0 0.0
      %2288 = vmatprep.subr.mxu0 0.0
      %2289 = vmatpush1.msra.mxu0 0.0
      %2290 = vmatprep.subr.mxu0 0.0
      %2291 = vmatpush1.msra.mxu0 0.0
      %2292 = vmatprep.subr.mxu0 0.0
      %2293 = vmatpush1.msra.mxu0 0.0
      %2294 = vmatprep.subr.mxu0 0.0
      %2295 = vmatpush1.msra.mxu0 0.0
      %2296 = vmatprep.subr.mxu0 0.0
      %2297 = vmatpush1.msra.mxu0 0.0
      %2298 = vmatprep.subr.mxu0 0.0
      %2299 = vmatpush1.msra.mxu0 0.0
      %2300 = vmatprep.subr.mxu0 0.0
      %2301 = vmatpush1.msra.mxu0 0.0
      %2302 = vmatprep.subr.mxu0 0.0
      %2303 = vmatpush1.msra.mxu0 0.0
      %2304 = vmatprep.subr.mxu0 0.0
      %2305 = vmatpush1.msra.mxu0 0.0
      %2306 = vmatprep.subr.mxu0 0.0
      %2307 = vmatpush1.msra.mxu0 0.0
      %2308 = vmatprep.subr.mxu0 0.0
      %2309 = vmatpush1.msra.mxu0 0.0
      %2310 = vmatprep.subr.mxu0 0.0
      %2311 = vmatpush1.msra.mxu0 0.0
      %2312 = vmatprep.subr.mxu0 0.0
      %2313 = vmatpush1.msra.mxu0 0.0
      %2314 = vmatprep.subr.mxu0 0.0
      %2315 = vmatpush1.msra.mxu0 0.0
      %2316 = vmatprep.subr.mxu0 0.0
      %2317 = vmatpush1.msra.mxu0 0.0
      %2318 = vmatprep.subr.mxu0 0.0
      %2319 = vmatpush1.msra.mxu0 0.0
      %2320 = vmatprep.subr.mxu0 0.0
      %2321 = vmatpush1.msra.mxu0 0.0
      %2322 = vmatprep.subr.mxu0 0.0
      %2323 = vmatpush1.msra.mxu0 0.0
      %2324 = vmatprep.subr.mxu0 0.0
      %2325 = vmatpush1.msra.mxu0 0.0
      %2326 = vmatprep.mubr.f32.mxu0 0.0
      %2327 = vmatmul.mubr.f32.gmra.mrb[0].mxu0 %v2255
      %v2328 = vpop.f32.mrb[0].mxu0
      %v2329 = vadd.f32 0.0, %v2328
      %v2330 = vpop.f32.mrb[0].mxu0
      %v2331 = vadd.f32 0.0, %v2330
      %2332 = vdwg.mxu0
      %v2333 = vmul.f32 %v2329, %v334
      %v2334 = vmul.f32 %v2331, %v335
      %v2335 = vadd.f32 %v2243, %v2333
      %v2336 = vadd.f32 %v2244, %v2334
      %s2337 = scalar_lea.vmem %s5, 16
      %v2338 = vld [vmem:[%s2337] sm:$0xf]
      %v2340 = vsel %vm372, %v2338, 0
      %v2342 = vsel %vm376, %v1961, 0
      %v2344 = vsel %vm376, %v1962, 0
      %2346 = vmatprep.subr.mxu0 %v2344
      %2347 = vmatpush1.msra.mxu0 %v2342
      %2348 = vmatprep.subr.mxu0 0.0
      %2349 = vmatpush1.msra.mxu0 0.0
      %2350 = vmatprep.subr.mxu0 0.0
      %2351 = vmatpush1.msra.mxu0 0.0
      %2352 = vmatprep.subr.mxu0 0.0
      %2353 = vmatpush1.msra.mxu0 0.0
      %2354 = vmatprep.subr.mxu0 0.0
      %2355 = vmatpush1.msra.mxu0 0.0
      %2356 = vmatprep.subr.mxu0 0.0
      %2357 = vmatpush1.msra.mxu0 0.0
      %2358 = vmatprep.subr.mxu0 0.0
      %2359 = vmatpush1.msra.mxu0 0.0
      %2360 = vmatprep.subr.mxu0 0.0
      %2361 = vmatpush1.msra.mxu0 0.0
      %2362 = vmatprep.subr.mxu0 0.0
      %2363 = vmatpush1.msra.mxu0 0.0
      %2364 = vmatprep.subr.mxu0 0.0
      %2365 = vmatpush1.msra.mxu0 0.0
      %2366 = vmatprep.subr.mxu0 0.0
      %2367 = vmatpush1.msra.mxu0 0.0
      %2368 = vmatprep.subr.mxu0 0.0
      %2369 = vmatpush1.msra.mxu0 0.0
      %2370 = vmatprep.subr.mxu0 0.0
      %2371 = vmatpush1.msra.mxu0 0.0
      %2372 = vmatprep.subr.mxu0 0.0
      %2373 = vmatpush1.msra.mxu0 0.0
      %2374 = vmatprep.subr.mxu0 0.0
      %2375 = vmatpush1.msra.mxu0 0.0
      %2376 = vmatprep.subr.mxu0 0.0
      %2377 = vmatpush1.msra.mxu0 0.0
      %2378 = vmatprep.subr.mxu0 0.0
      %2379 = vmatpush1.msra.mxu0 0.0
      %2380 = vmatprep.subr.mxu0 0.0
      %2381 = vmatpush1.msra.mxu0 0.0
      %2382 = vmatprep.subr.mxu0 0.0
      %2383 = vmatpush1.msra.mxu0 0.0
      %2384 = vmatprep.subr.mxu0 0.0
      %2385 = vmatpush1.msra.mxu0 0.0
      %2386 = vmatprep.subr.mxu0 0.0
      %2387 = vmatpush1.msra.mxu0 0.0
      %2388 = vmatprep.subr.mxu0 0.0
      %2389 = vmatpush1.msra.mxu0 0.0
      %2390 = vmatprep.subr.mxu0 0.0
      %2391 = vmatpush1.msra.mxu0 0.0
      %2392 = vmatprep.subr.mxu0 0.0
      %2393 = vmatpush1.msra.mxu0 0.0
      %2394 = vmatprep.subr.mxu0 0.0
      %2395 = vmatpush1.msra.mxu0 0.0
      %2396 = vmatprep.subr.mxu0 0.0
      %2397 = vmatpush1.msra.mxu0 0.0
      %2398 = vmatprep.subr.mxu0 0.0
      %2399 = vmatpush1.msra.mxu0 0.0
      %2400 = vmatprep.subr.mxu0 0.0
      %2401 = vmatpush1.msra.mxu0 0.0
      %2402 = vmatprep.subr.mxu0 0.0
      %2403 = vmatpush1.msra.mxu0 0.0
      %2404 = vmatprep.subr.mxu0 0.0
      %2405 = vmatpush1.msra.mxu0 0.0
      %2406 = vmatprep.subr.mxu0 0.0
      %2407 = vmatpush1.msra.mxu0 0.0
      %2408 = vmatprep.subr.mxu0 0.0
      %2409 = vmatpush1.msra.mxu0 0.0
      %2410 = vmatprep.mubr.f32.mxu0 0.0
      %2411 = vmatmul.mubr.f32.gmra.mrb[0].mxu0 %v2340
      %v2412 = vpop.f32.mrb[0].mxu0
      %v2413 = vadd.f32 0.0, %v2412
      %v2414 = vpop.f32.mrb[0].mxu0
      %v2415 = vadd.f32 0.0, %v2414
      %2416 = vdwg.mxu0
      %v2417 = vadd.f32 %v2335, %v2413
      %v2418 = vadd.f32 %v2336, %v2415
      %2419 = vrot.lane.b32.xlu0 %v1961, 127
      %v2420 = vpop.permute.xlu0 %2419
      %2421 = vrot.lane.b32.xlu0 %v1962, 127
      %v2422 = vpop.permute.xlu0 %2421
      %v2423 = vsel %vm1243, %v2420, %v2422
      %v2425 = vsel %vm1243, %v2422, 0.0
      %s2426 = scalar_lea.vmem %s5, 20
      %v2427 = vld [vmem:[%s2426] sm:$0xf]
      %v2429 = vsel %vm372, %v2427, 0
      %v2431 = vsel %vm376, %v2423, 0
      %v2434 = vsel %vm376, %v2425, 0
      %2436 = vmatprep.subr.mxu0 %v2434
      %2437 = vmatpush1.msra.mxu0 %v2431
      %2438 = vmatprep.subr.mxu0 0.0
      %2439 = vmatpush1.msra.mxu0 0.0
      %2440 = vmatprep.subr.mxu0 0.0
      %2441 = vmatpush1.msra.mxu0 0.0
      %2442 = vmatprep.subr.mxu0 0.0
      %2443 = vmatpush1.msra.mxu0 0.0
      %2444 = vmatprep.subr.mxu0 0.0
      %2445 = vmatpush1.msra.mxu0 0.0
      %2446 = vmatprep.subr.mxu0 0.0
      %2447 = vmatpush1.msra.mxu0 0.0
      %2448 = vmatprep.subr.mxu0 0.0
      %2449 = vmatpush1.msra.mxu0 0.0
      %2450 = vmatprep.subr.mxu0 0.0
      %2451 = vmatpush1.msra.mxu0 0.0
      %2452 = vmatprep.subr.mxu0 0.0
      %2453 = vmatpush1.msra.mxu0 0.0
      %2454 = vmatprep.subr.mxu0 0.0
      %2455 = vmatpush1.msra.mxu0 0.0
      %2456 = vmatprep.subr.mxu0 0.0
      %2457 = vmatpush1.msra.mxu0 0.0
      %2458 = vmatprep.subr.mxu0 0.0
      %2459 = vmatpush1.msra.mxu0 0.0
      %2460 = vmatprep.subr.mxu0 0.0
      %2461 = vmatpush1.msra.mxu0 0.0
      %2462 = vmatprep.subr.mxu0 0.0
      %2463 = vmatpush1.msra.mxu0 0.0
      %2464 = vmatprep.subr.mxu0 0.0
      %2465 = vmatpush1.msra.mxu0 0.0
      %2466 = vmatprep.subr.mxu0 0.0
      %2467 = vmatpush1.msra.mxu0 0.0
      %2468 = vmatprep.subr.mxu0 0.0
      %2469 = vmatpush1.msra.mxu0 0.0
      %2470 = vmatprep.subr.mxu0 0.0
      %2471 = vmatpush1.msra.mxu0 0.0
      %2472 = vmatprep.subr.mxu0 0.0
      %2473 = vmatpush1.msra.mxu0 0.0
      %2474 = vmatprep.subr.mxu0 0.0
      %2475 = vmatpush1.msra.mxu0 0.0
      %2476 = vmatprep.subr.mxu0 0.0
      %2477 = vmatpush1.msra.mxu0 0.0
      %2478 = vmatprep.subr.mxu0 0.0
      %2479 = vmatpush1.msra.mxu0 0.0
      %2480 = vmatprep.subr.mxu0 0.0
      %2481 = vmatpush1.msra.mxu0 0.0
      %2482 = vmatprep.subr.mxu0 0.0
      %2483 = vmatpush1.msra.mxu0 0.0
      %2484 = vmatprep.subr.mxu0 0.0
      %2485 = vmatpush1.msra.mxu0 0.0
      %2486 = vmatprep.subr.mxu0 0.0
      %2487 = vmatpush1.msra.mxu0 0.0
      %2488 = vmatprep.subr.mxu0 0.0
      %2489 = vmatpush1.msra.mxu0 0.0
      %2490 = vmatprep.subr.mxu0 0.0
      %2491 = vmatpush1.msra.mxu0 0.0
      %2492 = vmatprep.subr.mxu0 0.0
      %2493 = vmatpush1.msra.mxu0 0.0
      %2494 = vmatprep.subr.mxu0 0.0
      %2495 = vmatpush1.msra.mxu0 0.0
      %2496 = vmatprep.subr.mxu0 0.0
      %2497 = vmatpush1.msra.mxu0 0.0
      %2498 = vmatprep.subr.mxu0 0.0
      %2499 = vmatpush1.msra.mxu0 0.0
      %2500 = vmatprep.mubr.f32.mxu0 0.0
      %2501 = vmatmul.mubr.f32.gmra.mrb[0].mxu0 %v2429
      %v2502 = vpop.f32.mrb[0].mxu0
      %v2503 = vadd.f32 0.0, %v2502
      %v2504 = vpop.f32.mrb[0].mxu0
      %v2505 = vadd.f32 0.0, %v2504
      %2506 = vdwg.mxu0
      %v2507 = vmul.f32 %v2503, %v340
      %v2508 = vmul.f32 %v2505, %v341
      %v2509 = vadd.f32 %v2417, %v2507
      %v2510 = vadd.f32 %v2418, %v2508
      %2511 = vrot.lane.b32.xlu0 %v1961, 113
      %v2512 = vpop.permute.xlu0 %2511
      %2513 = vrot.lane.b32.xlu0 %v1962, 113
      %v2514 = vpop.permute.xlu0 %2513
      %v2515 = vsel %vm1424, %v2512, %v2514
      %v2517 = vsel %vm1424, %v2514, 0.0
      %s2518 = scalar_lea.vmem %s5, 24
      %v2519 = vld [vmem:[%s2518] sm:$0xf]
      %v2521 = vsel %vm372, %v2519, 0
      %v2523 = vsel %vm376, %v2515, 0
      %v2526 = vsel %vm376, %v2517, 0
      %2528 = vmatprep.subr.mxu0 %v2526
      %2529 = vmatpush1.msra.mxu0 %v2523
      %2530 = vmatprep.subr.mxu0 0.0
      %2531 = vmatpush1.msra.mxu0 0.0
      %2532 = vmatprep.subr.mxu0 0.0
      %2533 = vmatpush1.msra.mxu0 0.0
      %2534 = vmatprep.subr.mxu0 0.0
      %2535 = vmatpush1.msra.mxu0 0.0
      %2536 = vmatprep.subr.mxu0 0.0
      %2537 = vmatpush1.msra.mxu0 0.0
      %2538 = vmatprep.subr.mxu0 0.0
      %2539 = vmatpush1.msra.mxu0 0.0
      %2540 = vmatprep.subr.mxu0 0.0
      %2541 = vmatpush1.msra.mxu0 0.0
      %2542 = vmatprep.subr.mxu0 0.0
      %2543 = vmatpush1.msra.mxu0 0.0
      %2544 = vmatprep.subr.mxu0 0.0
      %2545 = vmatpush1.msra.mxu0 0.0
      %2546 = vmatprep.subr.mxu0 0.0
      %2547 = vmatpush1.msra.mxu0 0.0
      %2548 = vmatprep.subr.mxu0 0.0
      %2549 = vmatpush1.msra.mxu0 0.0
      %2550 = vmatprep.subr.mxu0 0.0
      %2551 = vmatpush1.msra.mxu0 0.0
      %2552 = vmatprep.subr.mxu0 0.0
      %2553 = vmatpush1.msra.mxu0 0.0
      %2554 = vmatprep.subr.mxu0 0.0
      %2555 = vmatpush1.msra.mxu0 0.0
      %2556 = vmatprep.subr.mxu0 0.0
      %2557 = vmatpush1.msra.mxu0 0.0
      %2558 = vmatprep.subr.mxu0 0.0
      %2559 = vmatpush1.msra.mxu0 0.0
      %2560 = vmatprep.subr.mxu0 0.0
      %2561 = vmatpush1.msra.mxu0 0.0
      %2562 = vmatprep.subr.mxu0 0.0
      %2563 = vmatpush1.msra.mxu0 0.0
      %2564 = vmatprep.subr.mxu0 0.0
      %2565 = vmatpush1.msra.mxu0 0.0
      %2566 = vmatprep.subr.mxu0 0.0
      %2567 = vmatpush1.msra.mxu0 0.0
      %2568 = vmatprep.subr.mxu0 0.0
      %2569 = vmatpush1.msra.mxu0 0.0
      %2570 = vmatprep.subr.mxu0 0.0
      %2571 = vmatpush1.msra.mxu0 0.0
      %2572 = vmatprep.subr.mxu0 0.0
      %2573 = vmatpush1.msra.mxu0 0.0
      %2574 = vmatprep.subr.mxu0 0.0
      %2575 = vmatpush1.msra.mxu0 0.0
      %2576 = vmatprep.subr.mxu0 0.0
      %2577 = vmatpush1.msra.mxu0 0.0
      %2578 = vmatprep.subr.mxu0 0.0
      %2579 = vmatpush1.msra.mxu0 0.0
      %2580 = vmatprep.subr.mxu0 0.0
      %2581 = vmatpush1.msra.mxu0 0.0
      %2582 = vmatprep.subr.mxu0 0.0
      %2583 = vmatpush1.msra.mxu0 0.0
      %2584 = vmatprep.subr.mxu0 0.0
      %2585 = vmatpush1.msra.mxu0 0.0
      %2586 = vmatprep.subr.mxu0 0.0
      %2587 = vmatpush1.msra.mxu0 0.0
      %2588 = vmatprep.subr.mxu0 0.0
      %2589 = vmatpush1.msra.mxu0 0.0
      %2590 = vmatprep.subr.mxu0 0.0
      %2591 = vmatpush1.msra.mxu0 0.0
      %2592 = vmatprep.mubr.f32.mxu0 0.0
      %2593 = vmatmul.mubr.f32.gmra.mrb[0].mxu0 %v2521
      %v2594 = vpop.f32.mrb[0].mxu0
      %v2595 = vadd.f32 0.0, %v2594
      %v2596 = vpop.f32.mrb[0].mxu0
      %v2597 = vadd.f32 0.0, %v2596
      %2598 = vdwg.mxu0
      %v2599 = vmul.f32 %v2595, %v334
      %v2600 = vmul.f32 %v2597, %v335
      %v2601 = vadd.f32 %v2509, %v2599
      %v2602 = vadd.f32 %v2510, %v2600
      %2603 = vrot.lane.b32.xlu0 %v1961, 112
      %v2604 = vpop.permute.xlu0 %2603
      %2605 = vrot.lane.b32.xlu0 %v1962, 112
      %v2606 = vpop.permute.xlu0 %2605
      %v2607 = vsel %vm1605, %v2604, %v2606
      %v2609 = vsel %vm1605, %v2606, 0.0
      %s2610 = scalar_lea.vmem %s5, 28
      %v2611 = vld [vmem:[%s2610] sm:$0xf]
      %v2613 = vsel %vm372, %v2611, 0
      %v2615 = vsel %vm376, %v2607, 0
      %v2618 = vsel %vm376, %v2609, 0
      %2620 = vmatprep.subr.mxu0 %v2618
      %2621 = vmatpush1.msra.mxu0 %v2615
      %2622 = vmatprep.subr.mxu0 0.0
      %2623 = vmatpush1.msra.mxu0 0.0
      %2624 = vmatprep.subr.mxu0 0.0
      %2625 = vmatpush1.msra.mxu0 0.0
      %2626 = vmatprep.subr.mxu0 0.0
      %2627 = vmatpush1.msra.mxu0 0.0
      %2628 = vmatprep.subr.mxu0 0.0
      %2629 = vmatpush1.msra.mxu0 0.0
      %2630 = vmatprep.subr.mxu0 0.0
      %2631 = vmatpush1.msra.mxu0 0.0
      %2632 = vmatprep.subr.mxu0 0.0
      %2633 = vmatpush1.msra.mxu0 0.0
      %2634 = vmatprep.subr.mxu0 0.0
      %2635 = vmatpush1.msra.mxu0 0.0
      %2636 = vmatprep.subr.mxu0 0.0
      %2637 = vmatpush1.msra.mxu0 0.0
      %2638 = vmatprep.subr.mxu0 0.0
      %2639 = vmatpush1.msra.mxu0 0.0
      %2640 = vmatprep.subr.mxu0 0.0
      %2641 = vmatpush1.msra.mxu0 0.0
      %2642 = vmatprep.subr.mxu0 0.0
      %2643 = vmatpush1.msra.mxu0 0.0
      %2644 = vmatprep.subr.mxu0 0.0
      %2645 = vmatpush1.msra.mxu0 0.0
      %2646 = vmatprep.subr.mxu0 0.0
      %2647 = vmatpush1.msra.mxu0 0.0
      %2648 = vmatprep.subr.mxu0 0.0
      %2649 = vmatpush1.msra.mxu0 0.0
      %2650 = vmatprep.subr.mxu0 0.0
      %2651 = vmatpush1.msra.mxu0 0.0
      %2652 = vmatprep.subr.mxu0 0.0
      %2653 = vmatpush1.msra.mxu0 0.0
      %2654 = vmatprep.subr.mxu0 0.0
      %2655 = vmatpush1.msra.mxu0 0.0
      %2656 = vmatprep.subr.mxu0 0.0
      %2657 = vmatpush1.msra.mxu0 0.0
      %2658 = vmatprep.subr.mxu0 0.0
      %2659 = vmatpush1.msra.mxu0 0.0
      %2660 = vmatprep.subr.mxu0 0.0
      %2661 = vmatpush1.msra.mxu0 0.0
      %2662 = vmatprep.subr.mxu0 0.0
      %2663 = vmatpush1.msra.mxu0 0.0
      %2664 = vmatprep.subr.mxu0 0.0
      %2665 = vmatpush1.msra.mxu0 0.0
      %2666 = vmatprep.subr.mxu0 0.0
      %2667 = vmatpush1.msra.mxu0 0.0
      %2668 = vmatprep.subr.mxu0 0.0
      %2669 = vmatpush1.msra.mxu0 0.0
      %2670 = vmatprep.subr.mxu0 0.0
      %2671 = vmatpush1.msra.mxu0 0.0
      %2672 = vmatprep.subr.mxu0 0.0
      %2673 = vmatpush1.msra.mxu0 0.0
      %2674 = vmatprep.subr.mxu0 0.0
      %2675 = vmatpush1.msra.mxu0 0.0
      %2676 = vmatprep.subr.mxu0 0.0
      %2677 = vmatpush1.msra.mxu0 0.0
      %2678 = vmatprep.subr.mxu0 0.0
      %2679 = vmatpush1.msra.mxu0 0.0
      %2680 = vmatprep.subr.mxu0 0.0
      %2681 = vmatpush1.msra.mxu0 0.0
      %2682 = vmatprep.subr.mxu0 0.0
      %2683 = vmatpush1.msra.mxu0 0.0
      %2684 = vmatprep.mubr.f32.mxu0 0.0
      %2685 = vmatmul.mubr.f32.gmra.mrb[0].mxu0 %v2613
      %v2686 = vpop.f32.mrb[0].mxu0
      %v2687 = vadd.f32 0.0, %v2686
      %v2688 = vpop.f32.mrb[0].mxu0
      %v2689 = vadd.f32 0.0, %v2688
      %2690 = vdwg.mxu0
      %v2691 = vadd.f32 %v2601, %v2687
      %v2692 = vadd.f32 %v2602, %v2689
      %2693 = vrot.lane.b32.xlu0 %v1961, 111
      %v2694 = vpop.permute.xlu0 %2693
      %2695 = vrot.lane.b32.xlu0 %v1962, 111
      %v2696 = vpop.permute.xlu0 %2695
      %v2697 = vsel %vm1784, %v2694, %v2696
      %v2699 = vsel %vm1784, %v2696, 0.0
      %s2700 = scalar_lea.vmem %s5, 32
      %v2701 = vld [vmem:[%s2700] sm:$0xf]
      %v2703 = vsel %vm372, %v2701, 0
      %v2705 = vsel %vm376, %v2697, 0
      %v2708 = vsel %vm376, %v2699, 0
      %2710 = vmatprep.subr.mxu0 %v2708
      %2711 = vmatpush1.msra.mxu0 %v2705
      %2712 = vmatprep.subr.mxu0 0.0
      %2713 = vmatpush1.msra.mxu0 0.0
      %2714 = vmatprep.subr.mxu0 0.0
      %2715 = vmatpush1.msra.mxu0 0.0
      %2716 = vmatprep.subr.mxu0 0.0
      %2717 = vmatpush1.msra.mxu0 0.0
      %2718 = vmatprep.subr.mxu0 0.0
      %2719 = vmatpush1.msra.mxu0 0.0
      %2720 = vmatprep.subr.mxu0 0.0
      %2721 = vmatpush1.msra.mxu0 0.0
      %2722 = vmatprep.subr.mxu0 0.0
      %2723 = vmatpush1.msra.mxu0 0.0
      %2724 = vmatprep.subr.mxu0 0.0
      %2725 = vmatpush1.msra.mxu0 0.0
      %2726 = vmatprep.subr.mxu0 0.0
      %2727 = vmatpush1.msra.mxu0 0.0
      %2728 = vmatprep.subr.mxu0 0.0
      %2729 = vmatpush1.msra.mxu0 0.0
      %2730 = vmatprep.subr.mxu0 0.0
      %2731 = vmatpush1.msra.mxu0 0.0
      %2732 = vmatprep.subr.mxu0 0.0
      %2733 = vmatpush1.msra.mxu0 0.0
      %2734 = vmatprep.subr.mxu0 0.0
      %2735 = vmatpush1.msra.mxu0 0.0
      %2736 = vmatprep.subr.mxu0 0.0
      %2737 = vmatpush1.msra.mxu0 0.0
      %2738 = vmatprep.subr.mxu0 0.0
      %2739 = vmatpush1.msra.mxu0 0.0
      %2740 = vmatprep.subr.mxu0 0.0
      %2741 = vmatpush1.msra.mxu0 0.0
      %2742 = vmatprep.subr.mxu0 0.0
      %2743 = vmatpush1.msra.mxu0 0.0
      %2744 = vmatprep.subr.mxu0 0.0
      %2745 = vmatpush1.msra.mxu0 0.0
      %2746 = vmatprep.subr.mxu0 0.0
      %2747 = vmatpush1.msra.mxu0 0.0
      %2748 = vmatprep.subr.mxu0 0.0
      %2749 = vmatpush1.msra.mxu0 0.0
      %2750 = vmatprep.subr.mxu0 0.0
      %2751 = vmatpush1.msra.mxu0 0.0
      %2752 = vmatprep.subr.mxu0 0.0
      %2753 = vmatpush1.msra.mxu0 0.0
      %2754 = vmatprep.subr.mxu0 0.0
      %2755 = vmatpush1.msra.mxu0 0.0
      %2756 = vmatprep.subr.mxu0 0.0
      %2757 = vmatpush1.msra.mxu0 0.0
      %2758 = vmatprep.subr.mxu0 0.0
      %2759 = vmatpush1.msra.mxu0 0.0
      %2760 = vmatprep.subr.mxu0 0.0
      %2761 = vmatpush1.msra.mxu0 0.0
      %2762 = vmatprep.subr.mxu0 0.0
      %2763 = vmatpush1.msra.mxu0 0.0
      %2764 = vmatprep.subr.mxu0 0.0
      %2765 = vmatpush1.msra.mxu0 0.0
      %2766 = vmatprep.subr.mxu0 0.0
      %2767 = vmatpush1.msra.mxu0 0.0
      %2768 = vmatprep.subr.mxu0 0.0
      %2769 = vmatpush1.msra.mxu0 0.0
      %2770 = vmatprep.subr.mxu0 0.0
      %2771 = vmatpush1.msra.mxu0 0.0
      %2772 = vmatprep.subr.mxu0 0.0
      %2773 = vmatpush1.msra.mxu0 0.0
      %2774 = vmatprep.mubr.f32.mxu0 0.0
      %2775 = vmatmul.mubr.f32.gmra.mrb[0].mxu0 %v2703
      %v2776 = vpop.f32.mrb[0].mxu0
      %v2777 = vadd.f32 0.0, %v2776
      %v2778 = vpop.f32.mrb[0].mxu0
      %v2779 = vadd.f32 0.0, %v2778
      %2780 = vdwg.mxu0
      %v2781 = vmul.f32 %v2777, %v340
      %v2782 = vmul.f32 %v2779, %v341
      %v2783 = vadd.f32 %v2691, %v2781
      %v2784 = vadd.f32 %v2692, %v2782
      %v2785 = vmax.f32 %v2783, 0.0
      %v2786 = vmax.f32 %v2784, 0.0
      %v2789 = vcombine.low %v2785, %v2786
      %2791 = vst [vmem:[%s302] sm:$0xff] %v2789
      %p2792 = scmp.lt.s32.totalorder %s18, 1
      %s2793 = scalar_select %p2792, %s18, 1
      %s2794 = smul.addr %s2793, 2
      %s2795 = smul.addr %s2794, 4
      %s2796 = scalar_lea.vmem %s7, %s2795
      // Predicated region
      $region49: #{up_forward.1} parent=47 // pred_check
        %p2797 = pneg %p193
      $region50: #{up_forward.1} parent=47 // pred_check_branch
        %2799 = sbr.rel (%p2797) target = $region52
      $region51: #{up_forward.1} parent=47 // pred_region
        _
      $region52: #{up_forward.1} parent=47 // pred_fallthru
        _
    $region48: #{up_forward.1} parent=5 // pred_fallthru
      _
    %p2800 = scmp.le.s32.totalorder 2, %s13
    // Predicated region
    $region53: #{up_forward.1} parent=5 // pred_check
      %p2801 = pneg %p2800
    $region54: #{up_forward.1} parent=5 // pred_check_branch
      %2803 = sbr.rel (%p2801) target = $region56
    $region55: #{up_forward.1} parent=5 // pred_region
      %s2804 = ssub.s32 %s13, 2
      // Predicated region
      $region57: #{up_forward.1} parent=55 // pred_check
        %p2805 = pneg %p199
      $region58: #{up_forward.1} parent=55 // pred_check_branch
        %2807 = sbr.rel (%p2805) target = $region60
      $region59: #{up_forward.1} parent=55 // pred_region
        %p2808 = scmp.lt.s32.totalorder %s19, 1
        %s2809 = scalar_select %p2808, %s19, 1
        %s2810 = smul.addr %s2809, 2
        %s2811 = smul.addr %s2810, 4
        %s2812 = scalar_lea.vmem %s7, %s2811
      $region60: #{up_forward.1} parent=55 // pred_fallthru
        _
    $region56: #{up_forward.1} parent=5 // pred_fallthru
      _
  $region6: #{up_forward.1} parent=0 // loop_footer
    %s17 = sadd.s32 1, %s13
  $region7: #{up_forward.1} parent=0 // loop_footer_branch
    %12 = sbr.rel target = $region3
  $region8: #{up_forward.1} parent=0 // loop_exit
    _

</llo_original>
